<compile_context>
chip_gen: v6e
topology: v6e:2x2x1
jax: 0.10.0
libtpu: 0.0.40
codegen_flags: <defaults>
</compile_context>

<pallas_src>
import functools

import jax
import jax.numpy as jnp
from jax import lax
from jax.experimental import pallas as pl
from jax.experimental.pallas import tpu as pltpu

EPS_LN = 1e-5        # torch.nn.LayerNorm default eps
EPS_NORM = 1e-12     # F.normalize default eps (clamps the NORM)
MXU_DTYPE = jnp.bfloat16   # matmul-operand dtype (f32 accumulation)
LANE = 128

_VMEM = pl.BlockSpec(memory_space=pltpu.MemorySpace.VMEM)


def _round_up(n, m):
    return ((n + m - 1) // m) * m


# ------------------------------ fused kernel ------------------------------

def _fused_forward_kernel(
    # data
    vid_ref, vtr_ref, otr_ref, mprev_ref, mnext_ref,
    # text heads
    tvw_ref, tvb_ref, tow_ref, tob_ref,
    # OE1/OE2 (layer-1 fused)
    oe_w1_ref, oe_b1_ref,
    oe1_g_ref, oe1_be_ref, oe1_w2_ref, oe1_b2_ref,
    oe2_g_ref, oe2_be_ref, oe2_w2_ref, oe2_b2_ref,
    # VE1/VE2 (layer-1 conv fused across heads+taps)
    ve_w1_ref, ve_b1_ref,
    ve1_g_ref, ve1_be_ref, ve1_w2_ref, ve1_b2_ref,
    ve2_g_ref, ve2_be_ref, ve2_w2_ref, ve2_b2_ref,
    # condition module
    fveo_wv_ref, fveo_wo_ref, fveo_b_ref,
    foev_wo_ref, foev_wv_ref, foev_b_ref,
    # outputs
    verb_logits_ref, obj_logits_ref, p_pair_v_ref, p_pair_o_t_ref,
    o_feat_ref, v_feat_ref, p_v_con_o_t_ref, p_o_con_v_ref,
    *, num_frames,
):
    f32 = jnp.float32
    T = num_frames
    BT = vid_ref.shape[0]
    B = BT // T
    H2 = oe_w1_ref.shape[1]            # 2 * HID (fused heads)
    H = H2 // 2
    E = tvw_ref.shape[1]

    # ---- helpers: bf16 operands at the MXU boundary, f32 accumulation/VPU ----
    def dot2(a_bf, w_ref):             # [M,K]@[K,N]; a already MXU dtype, w stored MXU dtype
        return jnp.dot(a_bf, w_ref[...], preferred_element_type=f32)

    def rowdot(a_bf, b_bf):            # [M,C] x [N,C] -> [M,N]
        return lax.dot_general(a_bf, b_bf, (((1,), (1,)), ((), ())),
                               preferred_element_type=f32)

    def layernorm(x, g_ref, b_ref):
        mu = jnp.mean(x, axis=-1, keepdims=True)
        xc = x - mu
        var = jnp.mean(xc * xc, axis=-1, keepdims=True)
        return xc * lax.rsqrt(var + EPS_LN) * g_ref[...] + b_ref[...]

    def l2norm(x):                     # F.normalize: clamp sumsq at eps^2 (EUP rsqrt)
        n2 = jnp.sum(x * x, axis=-1, keepdims=True)
        return x * lax.rsqrt(jnp.maximum(n2, EPS_NORM * EPS_NORM))

    def unit(x):                       # plain x / ||x|| (no eps), via rsqrt
        return x * lax.rsqrt(jnp.sum(x * x, axis=-1, keepdims=True))

    mprev = mprev_ref[...]             # [BT,1]: 0.0 on the first frame of each clip
    mnext = mnext_ref[...]             # [BT,1]: 0.0 on the last  frame of each clip

    def conv3(x_bf, w_ref, b_ref, cout):
        # Conv1d(k=3, pad=1): one tap-fused matmul + XLU sublane rolls + masks.
        a = dot2(x_bf, w_ref)                                     # [BT, 3*cout]
        a0 = a[:, :cout]                                          # prev tap (k=0)
        a1 = a[:, cout:2 * cout]                                  # center tap (k=1)
        a2 = a[:, 2 * cout:]                                      # next tap (k=2)
        prev = mprev * pltpu.roll(a0, 1, 0)                       # row t <- a0[t-1]
        nxt = mnext * pltpu.roll(a2, BT - 1, 0)                   # row t <- a2[t+1]
        return a1 + prev + nxt + b_ref[...]

    def mean_t(rows):                  # per-clip temporal mean (VPU/XLU sublane reduce)
        return jnp.sum(rows.reshape(B, T, rows.shape[-1]), axis=1) * (1.0 / T)

    # ---- text heads (c2c_text_v / c2c_text_o) ----
    verb_text = dot2(vtr_ref[...].astype(MXU_DTYPE), tvw_ref) + tvb_ref[...]   # [n_vp, E]
    obj_text = dot2(otr_ref[...].astype(MXU_DTYPE), tow_ref) + tob_ref[...]    # [n_op, E]
    verb_text_bf = verb_text.astype(MXU_DTYPE)
    obj_text_bf = obj_text.astype(MXU_DTYPE)

    # ---- object branch: OE1/OE2 layer-1 fused on the shared vid_mean ----
    vid = vid_ref[...]                                            # [BT, FEAT] f32
    vid_mean = mean_t(vid)                                        # [B, FEAT]  f32
    h = dot2(vid_mean.astype(MXU_DTYPE), oe_w1_ref) + oe_b1_ref[...]   # [B, 2H]
    h1 = jnp.maximum(layernorm(h[:, :H], oe1_g_ref, oe1_be_ref), 0.0)
    h2 = jnp.maximum(layernorm(h[:, H:], oe2_g_ref, oe2_be_ref), 0.0)
    o_feat = jnp.maximum(dot2(h1.astype(MXU_DTYPE), oe1_w2_ref) + oe1_b2_ref[...], 0.0)
    o_feat_c = jnp.maximum(dot2(h2.astype(MXU_DTYPE), oe2_w2_ref) + oe2_b2_ref[...], 0.0)

    # ---- video branch: VE1/VE2 layer-1 conv fused on the shared frame rows ----
    g = conv3(vid.astype(MXU_DTYPE), ve_w1_ref, ve_b1_ref, H2)    # [BT, 2H]
    g1 = jnp.maximum(layernorm(g[:, :H], ve1_g_ref, ve1_be_ref), 0.0)
    g2 = jnp.maximum(layernorm(g[:, H:], ve2_g_ref, ve2_be_ref), 0.0)
    v_rows = jnp.maximum(conv3(g1.astype(MXU_DTYPE), ve1_w2_ref, ve1_b2_ref, E), 0.0)
    v_rows_c = jnp.maximum(conv3(g2.astype(MXU_DTYPE), ve2_w2_ref, ve2_b2_ref, E), 0.0)
    v_feat = mean_t(v_rows)                                       # [B, E]
    v_feat_c = mean_t(v_rows_c)                                   # [B, E]

    # ---- component logits ----
    verb_logits = rowdot(l2norm(v_feat).astype(MXU_DTYPE),
                         unit(verb_text).astype(MXU_DTYPE)) * 0.5 + 0.5   # [B, n_vp]
    obj_logits = rowdot(l2norm(o_feat).astype(MXU_DTYPE),
                        unit(obj_text).astype(MXU_DTYPE)) * 0.5 + 0.5     # [B, n_op]

    # ---- condition module (flattened 2-D matmuls, no broadcasted text copies) ----
    n_vp = verb_text.shape[0]
    n_op = obj_text.shape[0]
    verb_l2_bf = l2norm(verb_text).astype(MXU_DTYPE)              # [n_vp, E]
    obj_l2_bf = l2norm(obj_text).astype(MXU_DTYPE)                # [n_op, E]

    vproj = dot2(v_feat_c.astype(MXU_DTYPE), fveo_wv_ref)                        # [B, E]
    oproj = dot2(obj_text_bf, fveo_wo_ref) + fveo_b_ref[...]                     # [n_op, E]
    f_veo = l2norm(vproj[:, None, :] + oproj[None, :, :])                        # [B, n_op, E]
    pvo_t = rowdot(f_veo.reshape(B * n_op, E).astype(MXU_DTYPE),
                   verb_l2_bf).reshape(B, n_op, n_vp) * 0.5 + 0.5   # [B, n_op, n_vp]

    oproj2 = dot2(o_feat_c.astype(MXU_DTYPE), foev_wo_ref)                       # [B, E]
    vproj2 = dot2(verb_text_bf, foev_wv_ref) + foev_b_ref[...]                   # [n_vp, E]
    f_oev = l2norm(oproj2[:, None, :] + vproj2[None, :, :])                      # [B, n_vp, E]
    p_o_con_v = rowdot(f_oev.reshape(B * n_vp, E).astype(MXU_DTYPE),
                       obj_l2_bf).reshape(B, n_vp, n_op) * 0.5 + 0.5  # [B, n_vp, n_op]

    # ---- pair products ----
    p_pair_o_t = pvo_t * obj_logits[:, :, None]                   # [B, n_op, n_vp]
    p_pair_v = p_o_con_v * verb_logits[:, :, None]                # [B, n_vp, n_op]

    # ---- stores (all trailing dims are 128-multiples -> unmasked vst) ----
    verb_logits_ref[...] = verb_logits
    obj_logits_ref[...] = obj_logits
    p_pair_v_ref[...] = p_pair_v
    p_pair_o_t_ref[...] = p_pair_o_t
    o_feat_ref[...] = o_feat
    v_feat_ref[...] = v_feat
    p_v_con_o_t_ref[...] = pvo_t
    p_o_con_v_ref[...] = p_o_con_v


# ---------------------------- parameter packing ----------------------------

def pack_params(p, dtype=MXU_DTYPE):
    """One-time conversion of torch-layout params to fused kernel layout (bf16)."""
    def lw(w):    # torch Linear [out, in] -> [in, out]
        return jnp.asarray(w.T, dtype)

    def rb(b):    # bias / LN params -> f32 row [1, n] (VPU side stays f32)
        return jnp.asarray(b.reshape(1, -1), jnp.float32)

    def conv_taps(*ws):
        # Conv1d weights [out, in, 3] -> [in, 3*sum(out)], tap-major, heads fused per tap
        blocks = []
        for k in range(3):
            blocks.append(jnp.concatenate([w[:, :, k].T for w in ws], axis=1))
        return jnp.asarray(jnp.concatenate(blocks, axis=1), dtype)

    emb = p['fveo_w'].shape[0]
    packed = [
        lw(p['text_v_w']), rb(p['text_v_b']),
        lw(p['text_o_w']), rb(p['text_o_b']),
        # OE1/OE2 layer-1 fused along the output dim (shared LHS: vid_mean)
        jnp.asarray(jnp.concatenate([p['OE1_w1'].T, p['OE2_w1'].T], axis=1), dtype),
        jnp.asarray(jnp.concatenate([p['OE1_b1'], p['OE2_b1']]).reshape(1, -1), jnp.float32),
        rb(p['OE1_g']), rb(p['OE1_be']), lw(p['OE1_w2']), rb(p['OE1_b2']),
        rb(p['OE2_g']), rb(p['OE2_be']), lw(p['OE2_w2']), rb(p['OE2_b2']),
        # VE1/VE2 layer-1 conv fused across heads and taps (shared LHS: frame rows)
        conv_taps(p['VE1_w1'], p['VE2_w1']),
        jnp.asarray(jnp.concatenate([p['VE1_b1'], p['VE2_b1']]).reshape(1, -1), jnp.float32),
        rb(p['VE1_g']), rb(p['VE1_be']), conv_taps(p['VE1_w2']), rb(p['VE1_b2']),
        rb(p['VE2_g']), rb(p['VE2_be']), conv_taps(p['VE2_w2']), rb(p['VE2_b2']),
        # condition module: cat([a,b]) @ W.T == a @ Wa + b @ Wb (+ bias once)
        lw(p['fveo_w'][:, :emb]), lw(p['fveo_w'][:, emb:]), rb(p['fveo_b']),
        lw(p['foev_w'][:, :emb]), lw(p['foev_w'][:, emb:]), rb(p['foev_b']),
    ]
    return tuple(packed)


# ------------------------------ forward wrapper ------------------------------

def _nbytes(a):
    n = 1
    for d in a.shape:
        n *= int(d)
    return n * jnp.dtype(a.dtype).itemsize


@jax.jit
def custom_clip_forward(packed_params, video_features, verb_text_raw, obj_text_raw):
    B, FEAT, T = video_features.shape
    BT = B * T
    n_v = verb_text_raw.shape[0]
    n_o = obj_text_raw.shape[0]
    EMB = packed_params[0].shape[1]
    HID = packed_params[4].shape[1] // 2

    # class dims padded to 128 -> lane-dense matmul N dims and unmasked stores
    n_vp = _round_up(n_v, LANE)
    n_op = _round_up(n_o, LANE)

    # single layout conversion at entry: [B, C, T] (NCW) -> frame rows [B*T, C]
    vid_rows = jnp.transpose(video_features, (0, 2, 1)).reshape(BT, FEAT).astype(jnp.float32)
    verb_pad = jnp.pad(verb_text_raw.astype(jnp.float32),
                       ((0, n_vp - n_v), (0, 0)), mode='edge')
    obj_pad = jnp.pad(obj_text_raw.astype(jnp.float32),
                      ((0, n_op - n_o), (0, 0)), mode='edge')

    # clip-boundary masks for the conv taps (zero the rolled-in row at clip edges)
    r = jnp.arange(BT)
    mask_prev = ((r % T) != 0).astype(jnp.float32).reshape(BT, 1)
    mask_next = ((r % T) != (T - 1)).astype(jnp.float32).reshape(BT, 1)

    inputs = (vid_rows, verb_pad, obj_pad, mask_prev, mask_next) + tuple(packed_params)

    out_shape = (
        jax.ShapeDtypeStruct((B, n_vp), jnp.float32),         # verb_logits (padded)
        jax.ShapeDtypeStruct((B, n_op), jnp.float32),         # obj_logits (padded)
        jax.ShapeDtypeStruct((B, n_vp, n_op), jnp.float32),   # p_pair_v (padded)
        jax.ShapeDtypeStruct((B, n_op, n_vp), jnp.float32),   # p_pair_o (transposed layout)
        jax.ShapeDtypeStruct((B, EMB), jnp.float32),          # o_feat
        jax.ShapeDtypeStruct((B, EMB), jnp.float32),          # v_feat
        jax.ShapeDtypeStruct((B, n_op, n_vp), jnp.float32),   # p_v_con_o (transposed layout)
        jax.ShapeDtypeStruct((B, n_vp, n_op), jnp.float32),   # p_o_con_v (padded)
    )

    flops = 2 * (
        (n_vp + n_op) * FEAT * EMB                      # text heads
        + B * FEAT * 2 * HID + 2 * B * HID * EMB        # OE fused L1 + two L2
        + BT * FEAT * 6 * HID + 2 * BT * HID * 3 * EMB  # VE fused L1 conv + two L2 convs
        + B * EMB * (n_vp + n_op)                       # component logits
        + (2 * B + n_op + n_vp) * EMB * EMB             # condition projections
        + 2 * B * n_vp * n_op * EMB                     # condition similarities
    )
    transcendentals = 2 * (B + BT) + 4 * B + 2 * (n_vp + n_op) + B * (n_vp + n_op)
    bytes_accessed = sum(_nbytes(a) for a in inputs) + sum(_nbytes(s) for s in out_shape)

    kernel = functools.partial(_fused_forward_kernel, num_frames=T)

    outs = pl.pallas_call(
        kernel,
        out_shape=out_shape,
        in_specs=[_VMEM] * len(inputs),
        out_specs=tuple([_VMEM] * len(out_shape)),
        compiler_params=pltpu.CompilerParams(
            # safe on all of v5e/v6e/v7x; raise toward 64-100 MiB on v5e/v6e
            # (128 MiB physical) at production sizes -- NOT on v7x (tile there).
            vmem_limit_bytes=32 * 1024 * 1024),
        cost_estimate=pl.CostEstimate(flops=flops,
                                      transcendentals=transcendentals,
                                      bytes_accessed=bytes_accessed),
    )(*inputs)

    (verb_logits_p, obj_logits_p, p_pair_v_p, p_pair_o_t,
     o_feat, v_feat, p_v_con_o_t, p_o_con_v_p) = outs

    # strip class-dim padding; the two transposed-layout outputs are flipped
    # on the tiny unpadded slices here (at production sizes do it in-kernel).
    verb_logits = verb_logits_p[:, :n_v]
    obj_logits = obj_logits_p[:, :n_o]
    p_pair_v = p_pair_v_p[:, :n_v, :n_o]
    p_o_con_v = p_o_con_v_p[:, :n_v, :n_o]
    p_pair_o = jnp.transpose(p_pair_o_t[:, :n_o, :n_v], (0, 2, 1))
    p_v_con_o = jnp.transpose(p_v_con_o_t[:, :n_o, :n_v], (0, 2, 1))

    # training-mode return tuple of CustomCLIP.forward
    return (verb_logits, obj_logits, p_pair_v, p_pair_o, video_features,
            o_feat, v_feat, p_v_con_o, p_o_con_v)


# --------------------------- parameter creation ---------------------------

def _randn(key, shape, scale=0.05):
    return scale * jax.random.normal(key, shape, dtype=jnp.float32)


def init_params(key, feat_dim, emb_dim, hid):
    keys = iter(jax.random.split(key, 24))
    nxt = lambda: next(keys)
    p = {}
    p['text_v_w'] = _randn(nxt(), (emb_dim, feat_dim))
    p['text_v_b'] = _randn(nxt(), (emb_dim,))
    p['text_o_w'] = _randn(nxt(), (emb_dim, feat_dim))
    p['text_o_b'] = _randn(nxt(), (emb_dim,))
    for name in ('OE1', 'OE2'):   # MLP: Linear->LN->ReLU->Linear->ReLU
        p[f'{name}_w1'] = _randn(nxt(), (hid, feat_dim))
        p[f'{name}_b1'] = _randn(nxt(), (hid,))
        p[f'{name}_g'] = jnp.ones((hid,), jnp.float32)
        p[f'{name}_be'] = jnp.zeros((hid,), jnp.float32)
        p[f'{name}_w2'] = _randn(nxt(), (emb_dim, hid))
        p[f'{name}_b2'] = _randn(nxt(), (emb_dim,))
    for name in ('VE1', 'VE2'):   # MLP_ST: Conv1d->LN->ReLU->Conv1d->ReLU
        p[f'{name}_w1'] = _randn(nxt(), (hid, feat_dim, 3))
        p[f'{name}_b1'] = _randn(nxt(), (hid,))
        p[f'{name}_g'] = jnp.ones((hid,), jnp.float32)
        p[f'{name}_be'] = jnp.zeros((hid,), jnp.float32)
        p[f'{name}_w2'] = _randn(nxt(), (emb_dim, hid, 3))
        p[f'{name}_b2'] = _randn(nxt(), (emb_dim,))
    p['fveo_w'] = _randn(nxt(), (emb_dim, 2 * emb_dim))
    p['fveo_b'] = _randn(nxt(), (emb_dim,))
    p['foev_w'] = _randn(nxt(), (emb_dim, 2 * emb_dim))
    p['foev_b'] = _randn(nxt(), (emb_dim,))
    return p


# ----------------------------- pure-JAX reference -----------------------------

def reference_forward(p, video_features, verb_text_raw, obj_text_raw):
    relu = lambda x: jnp.maximum(x, 0.0)
    lin = lambda x, w, b: x @ w.T + b

    def ln(x, g, be):
        mu = x.mean(-1, keepdims=True)
        var = ((x - mu) ** 2).mean(-1, keepdims=True)
        return (x - mu) / jnp.sqrt(var + EPS_LN) * g + be

    def l2n(x):
        return x / jnp.maximum(jnp.linalg.norm(x, axis=-1, keepdims=True), EPS_NORM)

    def conv1d(x, w, b):
        y = lax.conv_general_dilated(x, w, window_strides=(1,), padding=((1, 1),),
                                     dimension_numbers=('NCH', 'OIH', 'NCH'))
        return y + b[None, :, None]

    def mlp(x, name):
        h = lin(x, p[f'{name}_w1'], p[f'{name}_b1'])
        h = relu(ln(h, p[f'{name}_g'], p[f'{name}_be']))
        return relu(lin(h, p[f'{name}_w2'], p[f'{name}_b2']))

    def mlp_st(x, name):
        h = conv1d(x, p[f'{name}_w1'], p[f'{name}_b1'])
        ht = jnp.transpose(h, (0, 2, 1))
        ht = ln(ht, p[f'{name}_g'], p[f'{name}_be'])
        h = relu(jnp.transpose(ht, (0, 2, 1)))
        return relu(conv1d(h, p[f'{name}_w2'], p[f'{name}_b2']))

    verb_text = lin(verb_text_raw, p['text_v_w'], p['text_v_b'])
    obj_text = lin(obj_text_raw, p['text_o_w'], p['text_o_b'])

    vid_mean = video_features.mean(-1)
    o_feat = mlp(vid_mean, 'OE1')
    v_feat = mlp_st(video_features, 'VE1').mean(-1)

    verb_tn = verb_text / jnp.linalg.norm(verb_text, axis=-1, keepdims=True)
    obj_tn = obj_text / jnp.linalg.norm(obj_text, axis=-1, keepdims=True)
    verb_logits = l2n(v_feat) @ verb_tn.T * 0.5 + 0.5
    obj_logits = l2n(o_feat) @ obj_tn.T * 0.5 + 0.5

    o_feat_c = mlp(vid_mean, 'OE2')
    v_feat_c = mlp_st(video_features, 'VE2').mean(-1)

    b = video_features.shape[0]
    c = verb_text.shape[-1]
    n_v, n_o = verb_text.shape[0], obj_text.shape[0]

    cat_vo = jnp.concatenate([jnp.repeat(v_feat_c[:, None, :], n_o, 1),
                              jnp.repeat(obj_text[None, :, :], b, 0)], -1).reshape(-1, 2 * c)
    f_veo = l2n(cat_vo @ p['fveo_w'].T + p['fveo_b']).reshape(b, n_o, c)
    cat_ov = jnp.concatenate([jnp.repeat(o_feat_c[:, None, :], n_v, 1),
                              jnp.repeat(verb_text[None, :, :], b, 0)], -1).reshape(-1, 2 * c)
    f_oev = l2n(cat_ov @ p['foev_w'].T + p['foev_b']).reshape(b, n_v, c)

    p_v_con_o = jnp.einsum('bnc,mc->bnm', f_veo, l2n(verb_text)) * 0.5 + 0.5
    p_v_con_o = jnp.transpose(p_v_con_o, (0, 2, 1))
    p_o_con_v = jnp.einsum('bnc,mc->bnm', f_oev, l2n(obj_text)) * 0.5 + 0.5

    p_pair_o = p_v_con_o * obj_logits[:, None, :]
    p_pair_v = p_o_con_v * verb_logits[:, :, None]

    return (verb_logits, obj_logits, p_pair_v, p_pair_o, video_features,
            o_feat, v_feat, p_v_con_o, p_o_con_v)


# ----------------------------------- main -----------------------------------

if __name__ == "__main__":
    B, T = 2, 8              # batch, num_frames (T a multiple of 8 keeps reshapes free)
    FEAT, EMB, HID = 128, 128, 128
    N_V, N_O = 6, 5          # number of verb / object classes

    key = jax.random.PRNGKey(0)
    kp, kv, kt1, kt2 = jax.random.split(key, 4)
    params = init_params(kp, FEAT, EMB, HID)
    packed = pack_params(params)   # one-time torch->kernel layout conversion

    # synthetic encoder outputs (see TODO at top)
    video_features = jax.random.normal(kv, (B, FEAT, T), dtype=jnp.float32)
    verb_text_raw = jax.random.normal(kt1, (N_V, FEAT), dtype=jnp.float32)
    obj_text_raw = jax.random.normal(kt2, (N_O, FEAT), dtype=jnp.float32)

    outs = custom_clip_forward(packed, video_features, verb_text_raw, obj_text_raw)
    outs = jax.block_until_ready(outs)

    refs = reference_forward(params, video_features, verb_text_raw, obj_text_raw)
    names = ["verb_logits", "obj_logits", "p_pair_v", "p_pair_o",
             "video_features", "o_feat", "v_feat", "p_v_con_o", "p_o_con_v"]
    # tolerance accounts for bf16 MXU operands vs the f32 reference
    for name, o, r in zip(names, outs, refs):
        assert o.shape == r.shape, f"{name}: shape {o.shape} vs {r.shape}"
        assert jnp.allclose(o, r, rtol=4e-2, atol=4e-2), f"{name}: value mismatch"

    print("KERNEL_OK")
</pallas_src>

<mosaic_0001>
module attributes {stable_mosaic.version = 11 : i64} {
  func.func @_fused_forward_kernel(%arg0: memref<16x128xf32, #tpu.memory_space<vmem>>, %arg1: memref<128x128xf32, #tpu.memory_space<vmem>>, %arg2: memref<128x128xf32, #tpu.memory_space<vmem>>, %arg3: memref<16x1xf32, #tpu.memory_space<vmem>>, %arg4: memref<16x1xf32, #tpu.memory_space<vmem>>, %arg5: memref<128x128xbf16, #tpu.memory_space<vmem>>, %arg6: memref<1x128xf32, #tpu.memory_space<vmem>>, %arg7: memref<128x128xbf16, #tpu.memory_space<vmem>>, %arg8: memref<1x128xf32, #tpu.memory_space<vmem>>, %arg9: memref<128x256xbf16, #tpu.memory_space<vmem>>, %arg10: memref<1x256xf32, #tpu.memory_space<vmem>>, %arg11: memref<1x128xf32, #tpu.memory_space<vmem>>, %arg12: memref<1x128xf32, #tpu.memory_space<vmem>>, %arg13: memref<128x128xbf16, #tpu.memory_space<vmem>>, %arg14: memref<1x128xf32, #tpu.memory_space<vmem>>, %arg15: memref<1x128xf32, #tpu.memory_space<vmem>>, %arg16: memref<1x128xf32, #tpu.memory_space<vmem>>, %arg17: memref<128x128xbf16, #tpu.memory_space<vmem>>, %arg18: memref<1x128xf32, #tpu.memory_space<vmem>>, %arg19: memref<128x768xbf16, #tpu.memory_space<vmem>>, %arg20: memref<1x256xf32, #tpu.memory_space<vmem>>, %arg21: memref<1x128xf32, #tpu.memory_space<vmem>>, %arg22: memref<1x128xf32, #tpu.memory_space<vmem>>, %arg23: memref<128x384xbf16, #tpu.memory_space<vmem>>, %arg24: memref<1x128xf32, #tpu.memory_space<vmem>>, %arg25: memref<1x128xf32, #tpu.memory_space<vmem>>, %arg26: memref<1x128xf32, #tpu.memory_space<vmem>>, %arg27: memref<128x384xbf16, #tpu.memory_space<vmem>>, %arg28: memref<1x128xf32, #tpu.memory_space<vmem>>, %arg29: memref<128x128xbf16, #tpu.memory_space<vmem>>, %arg30: memref<128x128xbf16, #tpu.memory_space<vmem>>, %arg31: memref<1x128xf32, #tpu.memory_space<vmem>>, %arg32: memref<128x128xbf16, #tpu.memory_space<vmem>>, %arg33: memref<128x128xbf16, #tpu.memory_space<vmem>>, %arg34: memref<1x128xf32, #tpu.memory_space<vmem>>, %arg35: memref<2x128xf32, #tpu.memory_space<vmem>>, %arg36: memref<2x128xf32, #tpu.memory_space<vmem>>, %arg37: memref<2x128x128xf32, #tpu.memory_space<vmem>>, %arg38: memref<2x128x128xf32, #tpu.memory_space<vmem>>, %arg39: memref<2x128xf32, #tpu.memory_space<vmem>>, %arg40: memref<2x128xf32, #tpu.memory_space<vmem>>, %arg41: memref<2x128x128xf32, #tpu.memory_space<vmem>>, %arg42: memref<2x128x128xf32, #tpu.memory_space<vmem>>) attributes {dimension_semantics = [], scalar_prefetch = 0 : i64, scratch_operands = 0 : i64, tpu.core_type = #tpu.core_type<tc>} {
    %c0 = arith.constant 0 : index
    %c0_0 = arith.constant 0 : index
    %0 = vector.load %arg3[%c0, %c0_0] : memref<16x1xf32, #tpu.memory_space<vmem>>, vector<16x1xf32>
    %c0_1 = arith.constant 0 : index
    %c0_2 = arith.constant 0 : index
    %1 = vector.load %arg4[%c0_1, %c0_2] : memref<16x1xf32, #tpu.memory_space<vmem>>, vector<16x1xf32>
    %c0_3 = arith.constant 0 : index
    %c0_4 = arith.constant 0 : index
    %2 = vector.load %arg1[%c0_3, %c0_4] : memref<128x128xf32, #tpu.memory_space<vmem>>, vector<128x128xf32>
    %3 = arith.truncf %2 : vector<128x128xf32> to vector<128x128xbf16>
    %c0_5 = arith.constant 0 : index
    %c0_6 = arith.constant 0 : index
    %4 = vector.load %arg5[%c0_5, %c0_6] : memref<128x128xbf16, #tpu.memory_space<vmem>>, vector<128x128xbf16>
    %cst = arith.constant dense<0.000000e+00> : vector<128x128xf32>
    %5 = tpu.matmul %3, %4, %cst {dimension_numbers = #tpu.dot_dimension_numbers<[1], [0], [0], [1], [0, 0, 1, 1], [], []>} : vector<128x128xbf16>, vector<128x128xbf16>, vector<128x128xf32> -> vector<128x128xf32>
    %c0_7 = arith.constant 0 : index
    %c0_8 = arith.constant 0 : index
    %6 = vector.load %arg6[%c0_7, %c0_8] : memref<1x128xf32, #tpu.memory_space<vmem>>, vector<1x128xf32>
    %7 = vector.broadcast %6 : vector<1x128xf32> to vector<128x128xf32>
    %8 = arith.addf %5, %7 : vector<128x128xf32>
    %c0_9 = arith.constant 0 : index
    %c0_10 = arith.constant 0 : index
    %9 = vector.load %arg2[%c0_9, %c0_10] : memref<128x128xf32, #tpu.memory_space<vmem>>, vector<128x128xf32>
    %10 = arith.truncf %9 : vector<128x128xf32> to vector<128x128xbf16>
    %c0_11 = arith.constant 0 : index
    %c0_12 = arith.constant 0 : index
    %11 = vector.load %arg7[%c0_11, %c0_12] : memref<128x128xbf16, #tpu.memory_space<vmem>>, vector<128x128xbf16>
    %cst_13 = arith.constant dense<0.000000e+00> : vector<128x128xf32>
    %12 = tpu.matmul %10, %11, %cst_13 {dimension_numbers = #tpu.dot_dimension_numbers<[1], [0], [0], [1], [0, 0, 1, 1], [], []>} : vector<128x128xbf16>, vector<128x128xbf16>, vector<128x128xf32> -> vector<128x128xf32>
    %c0_14 = arith.constant 0 : index
    %c0_15 = arith.constant 0 : index
    %13 = vector.load %arg8[%c0_14, %c0_15] : memref<1x128xf32, #tpu.memory_space<vmem>>, vector<1x128xf32>
    %14 = vector.broadcast %13 : vector<1x128xf32> to vector<128x128xf32>
    %15 = arith.addf %12, %14 : vector<128x128xf32>
    %16 = arith.truncf %8 : vector<128x128xf32> to vector<128x128xbf16>
    %17 = arith.truncf %15 : vector<128x128xf32> to vector<128x128xbf16>
    %c0_16 = arith.constant 0 : index
    %c0_17 = arith.constant 0 : index
    %18 = vector.load %arg0[%c0_16, %c0_17] : memref<16x128xf32, #tpu.memory_space<vmem>>, vector<16x128xf32>
    %19 = vector.shape_cast %18 : vector<16x128xf32> to vector<2x8x128xf32>
    %cst_18 = arith.constant dense<0.000000e+00> : vector<2x128xf32>
    %20 = vector.multi_reduction <add>, %19, %cst_18 [1] : vector<2x8x128xf32> to vector<2x128xf32>
    %cst_19 = arith.constant 1.250000e-01 : f32
    %21 = vector.broadcast %cst_19 : f32 to vector<2x128xf32>
    %22 = arith.mulf %20, %21 : vector<2x128xf32>
    %23 = arith.truncf %22 : vector<2x128xf32> to vector<2x128xbf16>
    %c0_20 = arith.constant 0 : index
    %c0_21 = arith.constant 0 : index
    %24 = vector.load %arg9[%c0_20, %c0_21] : memref<128x256xbf16, #tpu.memory_space<vmem>>, vector<128x256xbf16>
    %cst_22 = arith.constant dense<0.000000e+00> : vector<2x256xf32>
    %25 = tpu.matmul %23, %24, %cst_22 {dimension_numbers = #tpu.dot_dimension_numbers<[1], [0], [0], [1], [0, 0, 1, 1], [], []>} : vector<2x128xbf16>, vector<128x256xbf16>, vector<2x256xf32> -> vector<2x256xf32>
    %c0_23 = arith.constant 0 : index
    %c0_24 = arith.constant 0 : index
    %26 = vector.load %arg10[%c0_23, %c0_24] : memref<1x256xf32, #tpu.memory_space<vmem>>, vector<1x256xf32>
    %27 = vector.broadcast %26 : vector<1x256xf32> to vector<2x256xf32>
    %28 = arith.addf %25, %27 : vector<2x256xf32>
    %29 = vector.extract_strided_slice %28 {offsets = [0, 0], sizes = [2, 128], strides = [1, 1]} : vector<2x256xf32> to vector<2x128xf32>
    %cst_25 = arith.constant dense<0.000000e+00> : vector<2xf32>
    %30 = vector.multi_reduction <add>, %29, %cst_25 [1] : vector<2x128xf32> to vector<2xf32>
    %31 = vector.shape_cast %30 : vector<2xf32> to vector<2x1xf32>
    %cst_26 = arith.constant 1.280000e+02 : f32
    %32 = vector.broadcast %cst_26 : f32 to vector<2x1xf32>
    %33 = arith.divf %31, %32 : vector<2x1xf32>
    %34 = vector.broadcast %33 : vector<2x1xf32> to vector<2x128xf32>
    %35 = arith.subf %29, %34 : vector<2x128xf32>
    %36 = arith.mulf %35, %35 : vector<2x128xf32>
    %cst_27 = arith.constant dense<0.000000e+00> : vector<2xf32>
    %37 = vector.multi_reduction <add>, %36, %cst_27 [1] : vector<2x128xf32> to vector<2xf32>
    %38 = vector.shape_cast %37 : vector<2xf32> to vector<2x1xf32>
    %cst_28 = arith.constant 1.280000e+02 : f32
    %39 = vector.broadcast %cst_28 : f32 to vector<2x1xf32>
    %40 = arith.divf %38, %39 : vector<2x1xf32>
    %cst_29 = arith.constant 9.99999974E-6 : f32
    %41 = vector.broadcast %cst_29 : f32 to vector<2x1xf32>
    %42 = arith.addf %40, %41 : vector<2x1xf32>
    %43 = math.rsqrt %42 : vector<2x1xf32>
    %44 = vector.broadcast %43 : vector<2x1xf32> to vector<2x128xf32>
    %45 = arith.mulf %35, %44 : vector<2x128xf32>
    %c0_30 = arith.constant 0 : index
    %c0_31 = arith.constant 0 : index
    %46 = vector.load %arg11[%c0_30, %c0_31] : memref<1x128xf32, #tpu.memory_space<vmem>>, vector<1x128xf32>
    %47 = vector.broadcast %46 : vector<1x128xf32> to vector<2x128xf32>
    %48 = arith.mulf %45, %47 : vector<2x128xf32>
    %c0_32 = arith.constant 0 : index
    %c0_33 = arith.constant 0 : index
    %49 = vector.load %arg12[%c0_32, %c0_33] : memref<1x128xf32, #tpu.memory_space<vmem>>, vector<1x128xf32>
    %50 = vector.broadcast %49 : vector<1x128xf32> to vector<2x128xf32>
    %51 = arith.addf %48, %50 : vector<2x128xf32>
    %cst_34 = arith.constant 0.000000e+00 : f32
    %52 = vector.broadcast %cst_34 : f32 to vector<2x128xf32>
    %53 = arith.maximumf %51, %52 : vector<2x128xf32>
    %54 = vector.extract_strided_slice %28 {offsets = [0, 128], sizes = [2, 128], strides = [1, 1]} : vector<2x256xf32> to vector<2x128xf32>
    %cst_35 = arith.constant dense<0.000000e+00> : vector<2xf32>
    %55 = vector.multi_reduction <add>, %54, %cst_35 [1] : vector<2x128xf32> to vector<2xf32>
    %56 = vector.shape_cast %55 : vector<2xf32> to vector<2x1xf32>
    %cst_36 = arith.constant 1.280000e+02 : f32
    %57 = vector.broadcast %cst_36 : f32 to vector<2x1xf32>
    %58 = arith.divf %56, %57 : vector<2x1xf32>
    %59 = vector.broadcast %58 : vector<2x1xf32> to vector<2x128xf32>
    %60 = arith.subf %54, %59 : vector<2x128xf32>
    %61 = arith.mulf %60, %60 : vector<2x128xf32>
    %cst_37 = arith.constant dense<0.000000e+00> : vector<2xf32>
    %62 = vector.multi_reduction <add>, %61, %cst_37 [1] : vector<2x128xf32> to vector<2xf32>
    %63 = vector.shape_cast %62 : vector<2xf32> to vector<2x1xf32>
    %cst_38 = arith.constant 1.280000e+02 : f32
    %64 = vector.broadcast %cst_38 : f32 to vector<2x1xf32>
    %65 = arith.divf %63, %64 : vector<2x1xf32>
    %cst_39 = arith.constant 9.99999974E-6 : f32
    %66 = vector.broadcast %cst_39 : f32 to vector<2x1xf32>
    %67 = arith.addf %65, %66 : vector<2x1xf32>
    %68 = math.rsqrt %67 : vector<2x1xf32>
    %69 = vector.broadcast %68 : vector<2x1xf32> to vector<2x128xf32>
    %70 = arith.mulf %60, %69 : vector<2x128xf32>
    %c0_40 = arith.constant 0 : index
    %c0_41 = arith.constant 0 : index
    %71 = vector.load %arg15[%c0_40, %c0_41] : memref<1x128xf32, #tpu.memory_space<vmem>>, vector<1x128xf32>
    %72 = vector.broadcast %71 : vector<1x128xf32> to vector<2x128xf32>
    %73 = arith.mulf %70, %72 : vector<2x128xf32>
    %c0_42 = arith.constant 0 : index
    %c0_43 = arith.constant 0 : index
    %74 = vector.load %arg16[%c0_42, %c0_43] : memref<1x128xf32, #tpu.memory_space<vmem>>, vector<1x128xf32>
    %75 = vector.broadcast %74 : vector<1x128xf32> to vector<2x128xf32>
    %76 = arith.addf %73, %75 : vector<2x128xf32>
    %cst_44 = arith.constant 0.000000e+00 : f32
    %77 = vector.broadcast %cst_44 : f32 to vector<2x128xf32>
    %78 = arith.maximumf %76, %77 : vector<2x128xf32>
    %79 = arith.truncf %53 : vector<2x128xf32> to vector<2x128xbf16>
    %c0_45 = arith.constant 0 : index
    %c0_46 = arith.constant 0 : index
    %80 = vector.load %arg13[%c0_45, %c0_46] : memref<128x128xbf16, #tpu.memory_space<vmem>>, vector<128x128xbf16>
    %cst_47 = arith.constant dense<0.000000e+00> : vector<2x128xf32>
    %81 = tpu.matmul %79, %80, %cst_47 {dimension_numbers = #tpu.dot_dimension_numbers<[1], [0], [0], [1], [0, 0, 1, 1], [], []>} : vector<2x128xbf16>, vector<128x128xbf16>, vector<2x128xf32> -> vector<2x128xf32>
    %c0_48 = arith.constant 0 : index
    %c0_49 = arith.constant 0 : index
    %82 = vector.load %arg14[%c0_48, %c0_49] : memref<1x128xf32, #tpu.memory_space<vmem>>, vector<1x128xf32>
    %83 = vector.broadcast %82 : vector<1x128xf32> to vector<2x128xf32>
    %84 = arith.addf %81, %83 : vector<2x128xf32>
    %cst_50 = arith.constant 0.000000e+00 : f32
    %85 = vector.broadcast %cst_50 : f32 to vector<2x128xf32>
    %86 = arith.maximumf %84, %85 : vector<2x128xf32>
    %87 = arith.truncf %78 : vector<2x128xf32> to vector<2x128xbf16>
    %c0_51 = arith.constant 0 : index
    %c0_52 = arith.constant 0 : index
    %88 = vector.load %arg17[%c0_51, %c0_52] : memref<128x128xbf16, #tpu.memory_space<vmem>>, vector<128x128xbf16>
    %cst_53 = arith.constant dense<0.000000e+00> : vector<2x128xf32>
    %89 = tpu.matmul %87, %88, %cst_53 {dimension_numbers = #tpu.dot_dimension_numbers<[1], [0], [0], [1], [0, 0, 1, 1], [], []>} : vector<2x128xbf16>, vector<128x128xbf16>, vector<2x128xf32> -> vector<2x128xf32>
    %c0_54 = arith.constant 0 : index
    %c0_55 = arith.constant 0 : index
    %90 = vector.load %arg18[%c0_54, %c0_55] : memref<1x128xf32, #tpu.memory_space<vmem>>, vector<1x128xf32>
    %91 = vector.broadcast %90 : vector<1x128xf32> to vector<2x128xf32>
    %92 = arith.addf %89, %91 : vector<2x128xf32>
    %cst_56 = arith.constant 0.000000e+00 : f32
    %93 = vector.broadcast %cst_56 : f32 to vector<2x128xf32>
    %94 = arith.maximumf %92, %93 : vector<2x128xf32>
    %95 = arith.truncf %18 : vector<16x128xf32> to vector<16x128xbf16>
    %c0_57 = arith.constant 0 : index
    %c0_58 = arith.constant 0 : index
    %96 = vector.load %arg19[%c0_57, %c0_58] : memref<128x768xbf16, #tpu.memory_space<vmem>>, vector<128x768xbf16>
    %cst_59 = arith.constant dense<0.000000e+00> : vector<16x768xf32>
    %97 = tpu.matmul %95, %96, %cst_59 {dimension_numbers = #tpu.dot_dimension_numbers<[1], [0], [0], [1], [0, 0, 1, 1], [], []>} : vector<16x128xbf16>, vector<128x768xbf16>, vector<16x768xf32> -> vector<16x768xf32>
    %98 = vector.extract_strided_slice %97 {offsets = [0, 0], sizes = [16, 256], strides = [1, 1]} : vector<16x768xf32> to vector<16x256xf32>
    %99 = vector.extract_strided_slice %97 {offsets = [0, 256], sizes = [16, 256], strides = [1, 1]} : vector<16x768xf32> to vector<16x256xf32>
    %100 = vector.extract_strided_slice %97 {offsets = [0, 512], sizes = [16, 256], strides = [1, 1]} : vector<16x768xf32> to vector<16x256xf32>
    %c1_i32 = arith.constant 1 : i32
    %101 = tpu.dynamic_rotate %98 by %c1_i32 dim 0 : vector<16x256xf32>, i32 -> vector<16x256xf32>
    %102 = vector.broadcast %0 : vector<16x1xf32> to vector<16x256xf32>
    %103 = arith.mulf %102, %101 : vector<16x256xf32>
    %c15_i32 = arith.constant 15 : i32
    %104 = tpu.dynamic_rotate %100 by %c15_i32 dim 0 : vector<16x256xf32>, i32 -> vector<16x256xf32>
    %105 = vector.broadcast %1 : vector<16x1xf32> to vector<16x256xf32>
    %106 = arith.mulf %105, %104 : vector<16x256xf32>
    %107 = arith.addf %99, %103 : vector<16x256xf32>
    %108 = arith.addf %107, %106 : vector<16x256xf32>
    %c0_60 = arith.constant 0 : index
    %c0_61 = arith.constant 0 : index
    %109 = vector.load %arg20[%c0_60, %c0_61] : memref<1x256xf32, #tpu.memory_space<vmem>>, vector<1x256xf32>
    %110 = vector.broadcast %109 : vector<1x256xf32> to vector<16x256xf32>
    %111 = arith.addf %108, %110 : vector<16x256xf32>
    %112 = vector.extract_strided_slice %111 {offsets = [0, 0], sizes = [16, 128], strides = [1, 1]} : vector<16x256xf32> to vector<16x128xf32>
    %cst_62 = arith.constant dense<0.000000e+00> : vector<16xf32>
    %113 = vector.multi_reduction <add>, %112, %cst_62 [1] : vector<16x128xf32> to vector<16xf32>
    %114 = vector.shape_cast %113 : vector<16xf32> to vector<16x1xf32>
    %cst_63 = arith.constant 1.280000e+02 : f32
    %115 = vector.broadcast %cst_63 : f32 to vector<16x1xf32>
    %116 = arith.divf %114, %115 : vector<16x1xf32>
    %117 = vector.broadcast %116 : vector<16x1xf32> to vector<16x128xf32>
    %118 = arith.subf %112, %117 : vector<16x128xf32>
    %119 = arith.mulf %118, %118 : vector<16x128xf32>
    %cst_64 = arith.constant dense<0.000000e+00> : vector<16xf32>
    %120 = vector.multi_reduction <add>, %119, %cst_64 [1] : vector<16x128xf32> to vector<16xf32>
    %121 = vector.shape_cast %120 : vector<16xf32> to vector<16x1xf32>
    %cst_65 = arith.constant 1.280000e+02 : f32
    %122 = vector.broadcast %cst_65 : f32 to vector<16x1xf32>
    %123 = arith.divf %121, %122 : vector<16x1xf32>
    %cst_66 = arith.constant 9.99999974E-6 : f32
    %124 = vector.broadcast %cst_66 : f32 to vector<16x1xf32>
    %125 = arith.addf %123, %124 : vector<16x1xf32>
    %126 = math.rsqrt %125 : vector<16x1xf32>
    %127 = vector.broadcast %126 : vector<16x1xf32> to vector<16x128xf32>
    %128 = arith.mulf %118, %127 : vector<16x128xf32>
    %c0_67 = arith.constant 0 : index
    %c0_68 = arith.constant 0 : index
    %129 = vector.load %arg21[%c0_67, %c0_68] : memref<1x128xf32, #tpu.memory_space<vmem>>, vector<1x128xf32>
    %130 = vector.broadcast %129 : vector<1x128xf32> to vector<16x128xf32>
    %131 = arith.mulf %128, %130 : vector<16x128xf32>
    %c0_69 = arith.constant 0 : index
    %c0_70 = arith.constant 0 : index
    %132 = vector.load %arg22[%c0_69, %c0_70] : memref<1x128xf32, #tpu.memory_space<vmem>>, vector<1x128xf32>
    %133 = vector.broadcast %132 : vector<1x128xf32> to vector<16x128xf32>
    %134 = arith.addf %131, %133 : vector<16x128xf32>
    %cst_71 = arith.constant 0.000000e+00 : f32
    %135 = vector.broadcast %cst_71 : f32 to vector<16x128xf32>
    %136 = arith.maximumf %134, %135 : vector<16x128xf32>
    %137 = vector.extract_strided_slice %111 {offsets = [0, 128], sizes = [16, 128], strides = [1, 1]} : vector<16x256xf32> to vector<16x128xf32>
    %cst_72 = arith.constant dense<0.000000e+00> : vector<16xf32>
    %138 = vector.multi_reduction <add>, %137, %cst_72 [1] : vector<16x128xf32> to vector<16xf32>
    %139 = vector.shape_cast %138 : vector<16xf32> to vector<16x1xf32>
    %cst_73 = arith.constant 1.280000e+02 : f32
    %140 = vector.broadcast %cst_73 : f32 to vector<16x1xf32>
    %141 = arith.divf %139, %140 : vector<16x1xf32>
    %142 = vector.broadcast %141 : vector<16x1xf32> to vector<16x128xf32>
    %143 = arith.subf %137, %142 : vector<16x128xf32>
    %144 = arith.mulf %143, %143 : vector<16x128xf32>
    %cst_74 = arith.constant dense<0.000000e+00> : vector<16xf32>
    %145 = vector.multi_reduction <add>, %144, %cst_74 [1] : vector<16x128xf32> to vector<16xf32>
    %146 = vector.shape_cast %145 : vector<16xf32> to vector<16x1xf32>
    %cst_75 = arith.constant 1.280000e+02 : f32
    %147 = vector.broadcast %cst_75 : f32 to vector<16x1xf32>
    %148 = arith.divf %146, %147 : vector<16x1xf32>
    %cst_76 = arith.constant 9.99999974E-6 : f32
    %149 = vector.broadcast %cst_76 : f32 to vector<16x1xf32>
    %150 = arith.addf %148, %149 : vector<16x1xf32>
    %151 = math.rsqrt %150 : vector<16x1xf32>
    %152 = vector.broadcast %151 : vector<16x1xf32> to vector<16x128xf32>
    %153 = arith.mulf %143, %152 : vector<16x128xf32>
    %c0_77 = arith.constant 0 : index
    %c0_78 = arith.constant 0 : index
    %154 = vector.load %arg25[%c0_77, %c0_78] : memref<1x128xf32, #tpu.memory_space<vmem>>, vector<1x128xf32>
    %155 = vector.broadcast %154 : vector<1x128xf32> to vector<16x128xf32>
    %156 = arith.mulf %153, %155 : vector<16x128xf32>
    %c0_79 = arith.constant 0 : index
    %c0_80 = arith.constant 0 : index
    %157 = vector.load %arg26[%c0_79, %c0_80] : memref<1x128xf32, #tpu.memory_space<vmem>>, vector<1x128xf32>
    %158 = vector.broadcast %157 : vector<1x128xf32> to vector<16x128xf32>
    %159 = arith.addf %156, %158 : vector<16x128xf32>
    %cst_81 = arith.constant 0.000000e+00 : f32
    %160 = vector.broadcast %cst_81 : f32 to vector<16x128xf32>
    %161 = arith.maximumf %159, %160 : vector<16x128xf32>
    %162 = arith.truncf %136 : vector<16x128xf32> to vector<16x128xbf16>
    %c0_82 = arith.constant 0 : index
    %c0_83 = arith.constant 0 : index
    %163 = vector.load %arg23[%c0_82, %c0_83] : memref<128x384xbf16, #tpu.memory_space<vmem>>, vector<128x384xbf16>
    %cst_84 = arith.constant dense<0.000000e+00> : vector<16x384xf32>
    %164 = tpu.matmul %162, %163, %cst_84 {dimension_numbers = #tpu.dot_dimension_numbers<[1], [0], [0], [1], [0, 0, 1, 1], [], []>} : vector<16x128xbf16>, vector<128x384xbf16>, vector<16x384xf32> -> vector<16x384xf32>
    %165 = vector.extract_strided_slice %164 {offsets = [0, 0], sizes = [16, 128], strides = [1, 1]} : vector<16x384xf32> to vector<16x128xf32>
    %166 = vector.extract_strided_slice %164 {offsets = [0, 128], sizes = [16, 128], strides = [1, 1]} : vector<16x384xf32> to vector<16x128xf32>
    %167 = vector.extract_strided_slice %164 {offsets = [0, 256], sizes = [16, 128], strides = [1, 1]} : vector<16x384xf32> to vector<16x128xf32>
    %c1_i32_85 = arith.constant 1 : i32
    %168 = tpu.dynamic_rotate %165 by %c1_i32_85 dim 0 : vector<16x128xf32>, i32 -> vector<16x128xf32>
    %169 = vector.broadcast %0 : vector<16x1xf32> to vector<16x128xf32>
    %170 = arith.mulf %169, %168 : vector<16x128xf32>
    %c15_i32_86 = arith.constant 15 : i32
    %171 = tpu.dynamic_rotate %167 by %c15_i32_86 dim 0 : vector<16x128xf32>, i32 -> vector<16x128xf32>
    %172 = vector.broadcast %1 : vector<16x1xf32> to vector<16x128xf32>
    %173 = arith.mulf %172, %171 : vector<16x128xf32>
    %174 = arith.addf %166, %170 : vector<16x128xf32>
    %175 = arith.addf %174, %173 : vector<16x128xf32>
    %c0_87 = arith.constant 0 : index
    %c0_88 = arith.constant 0 : index
    %176 = vector.load %arg24[%c0_87, %c0_88] : memref<1x128xf32, #tpu.memory_space<vmem>>, vector<1x128xf32>
    %177 = vector.broadcast %176 : vector<1x128xf32> to vector<16x128xf32>
    %178 = arith.addf %175, %177 : vector<16x128xf32>
    %cst_89 = arith.constant 0.000000e+00 : f32
    %179 = vector.broadcast %cst_89 : f32 to vector<16x128xf32>
    %180 = arith.maximumf %178, %179 : vector<16x128xf32>
    %181 = arith.truncf %161 : vector<16x128xf32> to vector<16x128xbf16>
    %c0_90 = arith.constant 0 : index
    %c0_91 = arith.constant 0 : index
    %182 = vector.load %arg27[%c0_90, %c0_91] : memref<128x384xbf16, #tpu.memory_space<vmem>>, vector<128x384xbf16>
    %cst_92 = arith.constant dense<0.000000e+00> : vector<16x384xf32>
    %183 = tpu.matmul %181, %182, %cst_92 {dimension_numbers = #tpu.dot_dimension_numbers<[1], [0], [0], [1], [0, 0, 1, 1], [], []>} : vector<16x128xbf16>, vector<128x384xbf16>, vector<16x384xf32> -> vector<16x384xf32>
    %184 = vector.extract_strided_slice %183 {offsets = [0, 0], sizes = [16, 128], strides = [1, 1]} : vector<16x384xf32> to vector<16x128xf32>
    %185 = vector.extract_strided_slice %183 {offsets = [0, 128], sizes = [16, 128], strides = [1, 1]} : vector<16x384xf32> to vector<16x128xf32>
    %186 = vector.extract_strided_slice %183 {offsets = [0, 256], sizes = [16, 128], strides = [1, 1]} : vector<16x384xf32> to vector<16x128xf32>
    %c1_i32_93 = arith.constant 1 : i32
    %187 = tpu.dynamic_rotate %184 by %c1_i32_93 dim 0 : vector<16x128xf32>, i32 -> vector<16x128xf32>
    %188 = vector.broadcast %0 : vector<16x1xf32> to vector<16x128xf32>
    %189 = arith.mulf %188, %187 : vector<16x128xf32>
    %c15_i32_94 = arith.constant 15 : i32
    %190 = tpu.dynamic_rotate %186 by %c15_i32_94 dim 0 : vector<16x128xf32>, i32 -> vector<16x128xf32>
    %191 = vector.broadcast %1 : vector<16x1xf32> to vector<16x128xf32>
    %192 = arith.mulf %191, %190 : vector<16x128xf32>
    %193 = arith.addf %185, %189 : vector<16x128xf32>
    %194 = arith.addf %193, %192 : vector<16x128xf32>
    %c0_95 = arith.constant 0 : index
    %c0_96 = arith.constant 0 : index
    %195 = vector.load %arg28[%c0_95, %c0_96] : memref<1x128xf32, #tpu.memory_space<vmem>>, vector<1x128xf32>
    %196 = vector.broadcast %195 : vector<1x128xf32> to vector<16x128xf32>
    %197 = arith.addf %194, %196 : vector<16x128xf32>
    %cst_97 = arith.constant 0.000000e+00 : f32
    %198 = vector.broadcast %cst_97 : f32 to vector<16x128xf32>
    %199 = arith.maximumf %197, %198 : vector<16x128xf32>
    %200 = vector.shape_cast %180 : vector<16x128xf32> to vector<2x8x128xf32>
    %cst_98 = arith.constant dense<0.000000e+00> : vector<2x128xf32>
    %201 = vector.multi_reduction <add>, %200, %cst_98 [1] : vector<2x8x128xf32> to vector<2x128xf32>
    %cst_99 = arith.constant 1.250000e-01 : f32
    %202 = vector.broadcast %cst_99 : f32 to vector<2x128xf32>
    %203 = arith.mulf %201, %202 : vector<2x128xf32>
    %204 = vector.shape_cast %199 : vector<16x128xf32> to vector<2x8x128xf32>
    %cst_100 = arith.constant dense<0.000000e+00> : vector<2x128xf32>
    %205 = vector.multi_reduction <add>, %204, %cst_100 [1] : vector<2x8x128xf32> to vector<2x128xf32>
    %cst_101 = arith.constant 1.250000e-01 : f32
    %206 = vector.broadcast %cst_101 : f32 to vector<2x128xf32>
    %207 = arith.mulf %205, %206 : vector<2x128xf32>
    %208 = arith.mulf %203, %203 : vector<2x128xf32>
    %cst_102 = arith.constant dense<0.000000e+00> : vector<2xf32>
    %209 = vector.multi_reduction <add>, %208, %cst_102 [1] : vector<2x128xf32> to vector<2xf32>
    %210 = vector.shape_cast %209 : vector<2xf32> to vector<2x1xf32>
    %cst_103 = arith.constant 1.000000e-24 : f32
    %211 = vector.broadcast %cst_103 : f32 to vector<2x1xf32>
    %212 = arith.maximumf %210, %211 : vector<2x1xf32>
    %213 = math.rsqrt %212 : vector<2x1xf32>
    %214 = vector.broadcast %213 : vector<2x1xf32> to vector<2x128xf32>
    %215 = arith.mulf %203, %214 : vector<2x128xf32>
    %216 = arith.truncf %215 : vector<2x128xf32> to vector<2x128xbf16>
    %217 = arith.mulf %8, %8 : vector<128x128xf32>
    %cst_104 = arith.constant dense<0.000000e+00> : vector<128xf32>
    %218 = vector.multi_reduction <add>, %217, %cst_104 [1] : vector<128x128xf32> to vector<128xf32>
    %219 = vector.shape_cast %218 : vector<128xf32> to vector<128x1xf32>
    %220 = math.rsqrt %219 : vector<128x1xf32>
    %221 = vector.broadcast %220 : vector<128x1xf32> to vector<128x128xf32>
    %222 = arith.mulf %8, %221 : vector<128x128xf32>
    %223 = arith.truncf %222 : vector<128x128xf32> to vector<128x128xbf16>
    %cst_105 = arith.constant dense<0.000000e+00> : vector<2x128xf32>
    %224 = tpu.matmul %216, %223, %cst_105 {dimension_numbers = #tpu.dot_dimension_numbers<[1], [1], [0], [0], [0, 0, 1, 0], [], []>} : vector<2x128xbf16>, vector<128x128xbf16>, vector<2x128xf32> -> vector<2x128xf32>
    %cst_106 = arith.constant 5.000000e-01 : f32
    %225 = vector.broadcast %cst_106 : f32 to vector<2x128xf32>
    %226 = arith.mulf %224, %225 : vector<2x128xf32>
    %cst_107 = arith.constant 5.000000e-01 : f32
    %227 = vector.broadcast %cst_107 : f32 to vector<2x128xf32>
    %228 = arith.addf %226, %227 : vector<2x128xf32>
    %229 = arith.mulf %86, %86 : vector<2x128xf32>
    %cst_108 = arith.constant dense<0.000000e+00> : vector<2xf32>
    %230 = vector.multi_reduction <add>, %229, %cst_108 [1] : vector<2x128xf32> to vector<2xf32>
    %231 = vector.shape_cast %230 : vector<2xf32> to vector<2x1xf32>
    %cst_109 = arith.constant 1.000000e-24 : f32
    %232 = vector.broadcast %cst_109 : f32 to vector<2x1xf32>
    %233 = arith.maximumf %231, %232 : vector<2x1xf32>
    %234 = math.rsqrt %233 : vector<2x1xf32>
    %235 = vector.broadcast %234 : vector<2x1xf32> to vector<2x128xf32>
    %236 = arith.mulf %86, %235 : vector<2x128xf32>
    %237 = arith.truncf %236 : vector<2x128xf32> to vector<2x128xbf16>
    %238 = arith.mulf %15, %15 : vector<128x128xf32>
    %cst_110 = arith.constant dense<0.000000e+00> : vector<128xf32>
    %239 = vector.multi_reduction <add>, %238, %cst_110 [1] : vector<128x128xf32> to vector<128xf32>
    %240 = vector.shape_cast %239 : vector<128xf32> to vector<128x1xf32>
    %241 = math.rsqrt %240 : vector<128x1xf32>
    %242 = vector.broadcast %241 : vector<128x1xf32> to vector<128x128xf32>
    %243 = arith.mulf %15, %242 : vector<128x128xf32>
    %244 = arith.truncf %243 : vector<128x128xf32> to vector<128x128xbf16>
    %cst_111 = arith.constant dense<0.000000e+00> : vector<2x128xf32>
    %245 = tpu.matmul %237, %244, %cst_111 {dimension_numbers = #tpu.dot_dimension_numbers<[1], [1], [0], [0], [0, 0, 1, 0], [], []>} : vector<2x128xbf16>, vector<128x128xbf16>, vector<2x128xf32> -> vector<2x128xf32>
    %cst_112 = arith.constant 5.000000e-01 : f32
    %246 = vector.broadcast %cst_112 : f32 to vector<2x128xf32>
    %247 = arith.mulf %245, %246 : vector<2x128xf32>
    %cst_113 = arith.constant 5.000000e-01 : f32
    %248 = vector.broadcast %cst_113 : f32 to vector<2x128xf32>
    %249 = arith.addf %247, %248 : vector<2x128xf32>
    %250 = arith.mulf %8, %8 : vector<128x128xf32>
    %cst_114 = arith.constant dense<0.000000e+00> : vector<128xf32>
    %251 = vector.multi_reduction <add>, %250, %cst_114 [1] : vector<128x128xf32> to vector<128xf32>
    %252 = vector.shape_cast %251 : vector<128xf32> to vector<128x1xf32>
    %cst_115 = arith.constant 1.000000e-24 : f32
    %253 = vector.broadcast %cst_115 : f32 to vector<128x1xf32>
    %254 = arith.maximumf %252, %253 : vector<128x1xf32>
    %255 = math.rsqrt %254 : vector<128x1xf32>
    %256 = vector.broadcast %255 : vector<128x1xf32> to vector<128x128xf32>
    %257 = arith.mulf %8, %256 : vector<128x128xf32>
    %258 = arith.truncf %257 : vector<128x128xf32> to vector<128x128xbf16>
    %259 = arith.mulf %15, %15 : vector<128x128xf32>
    %cst_116 = arith.constant dense<0.000000e+00> : vector<128xf32>
    %260 = vector.multi_reduction <add>, %259, %cst_116 [1] : vector<128x128xf32> to vector<128xf32>
    %261 = vector.shape_cast %260 : vector<128xf32> to vector<128x1xf32>
    %cst_117 = arith.constant 1.000000e-24 : f32
    %262 = vector.broadcast %cst_117 : f32 to vector<128x1xf32>
    %263 = arith.maximumf %261, %262 : vector<128x1xf32>
    %264 = math.rsqrt %263 : vector<128x1xf32>
    %265 = vector.broadcast %264 : vector<128x1xf32> to vector<128x128xf32>
    %266 = arith.mulf %15, %265 : vector<128x128xf32>
    %267 = arith.truncf %266 : vector<128x128xf32> to vector<128x128xbf16>
    %268 = arith.truncf %207 : vector<2x128xf32> to vector<2x128xbf16>
    %c0_118 = arith.constant 0 : index
    %c0_119 = arith.constant 0 : index
    %269 = vector.load %arg29[%c0_118, %c0_119] : memref<128x128xbf16, #tpu.memory_space<vmem>>, vector<128x128xbf16>
    %cst_120 = arith.constant dense<0.000000e+00> : vector<2x128xf32>
    %270 = tpu.matmul %268, %269, %cst_120 {dimension_numbers = #tpu.dot_dimension_numbers<[1], [0], [0], [1], [0, 0, 1, 1], [], []>} : vector<2x128xbf16>, vector<128x128xbf16>, vector<2x128xf32> -> vector<2x128xf32>
    %c0_121 = arith.constant 0 : index
    %c0_122 = arith.constant 0 : index
    %271 = vector.load %arg30[%c0_121, %c0_122] : memref<128x128xbf16, #tpu.memory_space<vmem>>, vector<128x128xbf16>
    %cst_123 = arith.constant dense<0.000000e+00> : vector<128x128xf32>
    %272 = tpu.matmul %17, %271, %cst_123 {dimension_numbers = #tpu.dot_dimension_numbers<[1], [0], [0], [1], [0, 0, 1, 1], [], []>} : vector<128x128xbf16>, vector<128x128xbf16>, vector<128x128xf32> -> vector<128x128xf32>
    %c0_124 = arith.constant 0 : index
    %c0_125 = arith.constant 0 : index
    %273 = vector.load %arg31[%c0_124, %c0_125] : memref<1x128xf32, #tpu.memory_space<vmem>>, vector<1x128xf32>
    %274 = vector.broadcast %273 : vector<1x128xf32> to vector<128x128xf32>
    %275 = arith.addf %272, %274 : vector<128x128xf32>
    %276 = vector.shape_cast %270 : vector<2x128xf32> to vector<2x1x128xf32>
    %277 = vector.shape_cast %275 : vector<128x128xf32> to vector<1x128x128xf32>
    %278 = vector.broadcast %276 : vector<2x1x128xf32> to vector<2x128x128xf32>
    %279 = vector.broadcast %277 : vector<1x128x128xf32> to vector<2x128x128xf32>
    %280 = arith.addf %278, %279 : vector<2x128x128xf32>
    %281 = arith.mulf %280, %280 : vector<2x128x128xf32>
    %cst_126 = arith.constant dense<0.000000e+00> : vector<2x128xf32>
    %282 = vector.multi_reduction <add>, %281, %cst_126 [2] : vector<2x128x128xf32> to vector<2x128xf32>
    %283 = vector.shape_cast %282 : vector<2x128xf32> to vector<2x128x1xf32>
    %cst_127 = arith.constant 1.000000e-24 : f32
    %284 = vector.broadcast %cst_127 : f32 to vector<2x128x1xf32>
    %285 = arith.maximumf %283, %284 : vector<2x128x1xf32>
    %286 = math.rsqrt %285 : vector<2x128x1xf32>
    %287 = vector.broadcast %286 : vector<2x128x1xf32> to vector<2x128x128xf32>
    %288 = arith.mulf %280, %287 : vector<2x128x128xf32>
    %289 = vector.shape_cast %288 : vector<2x128x128xf32> to vector<256x128xf32>
    %290 = arith.truncf %289 : vector<256x128xf32> to vector<256x128xbf16>
    %cst_128 = arith.constant dense<0.000000e+00> : vector<256x128xf32>
    %291 = tpu.matmul %290, %258, %cst_128 {dimension_numbers = #tpu.dot_dimension_numbers<[1], [1], [0], [0], [0, 0, 1, 0], [], []>} : vector<256x128xbf16>, vector<128x128xbf16>, vector<256x128xf32> -> vector<256x128xf32>
    %292 = vector.shape_cast %291 : vector<256x128xf32> to vector<2x128x128xf32>
    %cst_129 = arith.constant 5.000000e-01 : f32
    %293 = vector.broadcast %cst_129 : f32 to vector<2x128x128xf32>
    %294 = arith.mulf %292, %293 : vector<2x128x128xf32>
    %cst_130 = arith.constant 5.000000e-01 : f32
    %295 = vector.broadcast %cst_130 : f32 to vector<2x128x128xf32>
    %296 = arith.addf %294, %295 : vector<2x128x128xf32>
    %297 = arith.truncf %94 : vector<2x128xf32> to vector<2x128xbf16>
    %c0_131 = arith.constant 0 : index
    %c0_132 = arith.constant 0 : index
    %298 = vector.load %arg32[%c0_131, %c0_132] : memref<128x128xbf16, #tpu.memory_space<vmem>>, vector<128x128xbf16>
    %cst_133 = arith.constant dense<0.000000e+00> : vector<2x128xf32>
    %299 = tpu.matmul %297, %298, %cst_133 {dimension_numbers = #tpu.dot_dimension_numbers<[1], [0], [0], [1], [0, 0, 1, 1], [], []>} : vector<2x128xbf16>, vector<128x128xbf16>, vector<2x128xf32> -> vector<2x128xf32>
    %c0_134 = arith.constant 0 : index
    %c0_135 = arith.constant 0 : index
    %300 = vector.load %arg33[%c0_134, %c0_135] : memref<128x128xbf16, #tpu.memory_space<vmem>>, vector<128x128xbf16>
    %cst_136 = arith.constant dense<0.000000e+00> : vector<128x128xf32>
    %301 = tpu.matmul %16, %300, %cst_136 {dimension_numbers = #tpu.dot_dimension_numbers<[1], [0], [0], [1], [0, 0, 1, 1], [], []>} : vector<128x128xbf16>, vector<128x128xbf16>, vector<128x128xf32> -> vector<128x128xf32>
    %c0_137 = arith.constant 0 : index
    %c0_138 = arith.constant 0 : index
    %302 = vector.load %arg34[%c0_137, %c0_138] : memref<1x128xf32, #tpu.memory_space<vmem>>, vector<1x128xf32>
    %303 = vector.broadcast %302 : vector<1x128xf32> to vector<128x128xf32>
    %304 = arith.addf %301, %303 : vector<128x128xf32>
    %305 = vector.shape_cast %299 : vector<2x128xf32> to vector<2x1x128xf32>
    %306 = vector.shape_cast %304 : vector<128x128xf32> to vector<1x128x128xf32>
    %307 = vector.broadcast %305 : vector<2x1x128xf32> to vector<2x128x128xf32>
    %308 = vector.broadcast %306 : vector<1x128x128xf32> to vector<2x128x128xf32>
    %309 = arith.addf %307, %308 : vector<2x128x128xf32>
    %310 = arith.mulf %309, %309 : vector<2x128x128xf32>
    %cst_139 = arith.constant dense<0.000000e+00> : vector<2x128xf32>
    %311 = vector.multi_reduction <add>, %310, %cst_139 [2] : vector<2x128x128xf32> to vector<2x128xf32>
    %312 = vector.shape_cast %311 : vector<2x128xf32> to vector<2x128x1xf32>
    %cst_140 = arith.constant 1.000000e-24 : f32
    %313 = vector.broadcast %cst_140 : f32 to vector<2x128x1xf32>
    %314 = arith.maximumf %312, %313 : vector<2x128x1xf32>
    %315 = math.rsqrt %314 : vector<2x128x1xf32>
    %316 = vector.broadcast %315 : vector<2x128x1xf32> to vector<2x128x128xf32>
    %317 = arith.mulf %309, %316 : vector<2x128x128xf32>
    %318 = vector.shape_cast %317 : vector<2x128x128xf32> to vector<256x128xf32>
    %319 = arith.truncf %318 : vector<256x128xf32> to vector<256x128xbf16>
    %cst_141 = arith.constant dense<0.000000e+00> : vector<256x128xf32>
    %320 = tpu.matmul %319, %267, %cst_141 {dimension_numbers = #tpu.dot_dimension_numbers<[1], [1], [0], [0], [0, 0, 1, 0], [], []>} : vector<256x128xbf16>, vector<128x128xbf16>, vector<256x128xf32> -> vector<256x128xf32>
    %321 = vector.shape_cast %320 : vector<256x128xf32> to vector<2x128x128xf32>
    %cst_142 = arith.constant 5.000000e-01 : f32
    %322 = vector.broadcast %cst_142 : f32 to vector<2x128x128xf32>
    %323 = arith.mulf %321, %322 : vector<2x128x128xf32>
    %cst_143 = arith.constant 5.000000e-01 : f32
    %324 = vector.broadcast %cst_143 : f32 to vector<2x128x128xf32>
    %325 = arith.addf %323, %324 : vector<2x128x128xf32>
    %326 = vector.shape_cast %249 : vector<2x128xf32> to vector<2x128x1xf32>
    %327 = vector.broadcast %326 : vector<2x128x1xf32> to vector<2x128x128xf32>
    %328 = arith.mulf %296, %327 : vector<2x128x128xf32>
    %329 = vector.shape_cast %228 : vector<2x128xf32> to vector<2x128x1xf32>
    %330 = vector.broadcast %329 : vector<2x128x1xf32> to vector<2x128x128xf32>
    %331 = arith.mulf %325, %330 : vector<2x128x128xf32>
    %c0_144 = arith.constant 0 : index
    %c0_145 = arith.constant 0 : index
    %332 = vector.load %arg35[%c0_144, %c0_145] : memref<2x128xf32, #tpu.memory_space<vmem>>, vector<2x128xf32>
    tpu.vector_store %arg35[%c0_144, %c0_145], %228 {strides = array<i32>} : memref<2x128xf32, #tpu.memory_space<vmem>>, vector<2x128xf32>,
    %c0_146 = arith.constant 0 : index
    %c0_147 = arith.constant 0 : index
    %333 = vector.load %arg36[%c0_146, %c0_147] : memref<2x128xf32, #tpu.memory_space<vmem>>, vector<2x128xf32>
    tpu.vector_store %arg36[%c0_146, %c0_147], %249 {strides = array<i32>} : memref<2x128xf32, #tpu.memory_space<vmem>>, vector<2x128xf32>,
    %c0_148 = arith.constant 0 : index
    %c0_149 = arith.constant 0 : index
    %c0_150 = arith.constant 0 : index
    %334 = vector.load %arg37[%c0_148, %c0_149, %c0_150] : memref<2x128x128xf32, #tpu.memory_space<vmem>>, vector<2x128x128xf32>
    tpu.vector_store %arg37[%c0_148, %c0_149, %c0_150], %331 {strides = array<i32>} : memref<2x128x128xf32, #tpu.memory_space<vmem>>, vector<2x128x128xf32>,
    %c0_151 = arith.constant 0 : index
    %c0_152 = arith.constant 0 : index
    %c0_153 = arith.constant 0 : index
    %335 = vector.load %arg38[%c0_151, %c0_152, %c0_153] : memref<2x128x128xf32, #tpu.memory_space<vmem>>, vector<2x128x128xf32>
    tpu.vector_store %arg38[%c0_151, %c0_152, %c0_153], %328 {strides = array<i32>} : memref<2x128x128xf32, #tpu.memory_space<vmem>>, vector<2x128x128xf32>,
    %c0_154 = arith.constant 0 : index
    %c0_155 = arith.constant 0 : index
    %336 = vector.load %arg39[%c0_154, %c0_155] : memref<2x128xf32, #tpu.memory_space<vmem>>, vector<2x128xf32>
    tpu.vector_store %arg39[%c0_154, %c0_155], %86 {strides = array<i32>} : memref<2x128xf32, #tpu.memory_space<vmem>>, vector<2x128xf32>,
    %c0_156 = arith.constant 0 : index
    %c0_157 = arith.constant 0 : index
    %337 = vector.load %arg40[%c0_156, %c0_157] : memref<2x128xf32, #tpu.memory_space<vmem>>, vector<2x128xf32>
    tpu.vector_store %arg40[%c0_156, %c0_157], %203 {strides = array<i32>} : memref<2x128xf32, #tpu.memory_space<vmem>>, vector<2x128xf32>,
    %c0_158 = arith.constant 0 : index
    %c0_159 = arith.constant 0 : index
    %c0_160 = arith.constant 0 : index
    %338 = vector.load %arg41[%c0_158, %c0_159, %c0_160] : memref<2x128x128xf32, #tpu.memory_space<vmem>>, vector<2x128x128xf32>
    tpu.vector_store %arg41[%c0_158, %c0_159, %c0_160], %296 {strides = array<i32>} : memref<2x128x128xf32, #tpu.memory_space<vmem>>, vector<2x128x128xf32>,
    %c0_161 = arith.constant 0 : index
    %c0_162 = arith.constant 0 : index
    %c0_163 = arith.constant 0 : index
    %339 = vector.load %arg42[%c0_161, %c0_162, %c0_163] : memref<2x128x128xf32, #tpu.memory_space<vmem>>, vector<2x128x128xf32>
    tpu.vector_store %arg42[%c0_161, %c0_162, %c0_163], %325 {strides = array<i32>} : memref<2x128x128xf32, #tpu.memory_space<vmem>>, vector<2x128x128xf32>,
    return
  }
}

</mosaic_0001>

<llo_original>
// kernel: custom_clip_forward.1
$region0: #{custom_clip_forward.1}
  #allocation0 [shape = 'u32[]', space=smem, size = 0x4, offset = 0x4, fixed_abs, tag = 'smem constant byte address 0x4 - core index']
  #allocation1 [shape = 'u32[144,128]{1,0:T(1,128)}', space=vmem, size = 0x12000, scoped, tag = 'internal scratch']
  %s0 = inlined_call_operand.smem [shape: u32[43], index: -1, kind: input, shape index: {}]
  %s1 = sld [smem:[%s0]]
  %s2 = scalar_lea.smem %s0, 1
  %s3 = sld [smem:[%s2]]
  %s4 = scalar_lea.smem %s0, 2
  %s5 = sld [smem:[%s4]]
  %s6 = scalar_lea.smem %s0, 3
  %s7 = sld [smem:[%s6]]
  %s8 = scalar_lea.smem %s0, 4
  %s9 = sld [smem:[%s8]]
  %s10 = scalar_lea.smem %s0, 5
  %s11 = sld [smem:[%s10]]
  %s12 = scalar_lea.smem %s0, 6
  %s13 = sld [smem:[%s12]]
  %s14 = scalar_lea.smem %s0, 7
  %s15 = sld [smem:[%s14]]
  %s16 = scalar_lea.smem %s0, 8
  %s17 = sld [smem:[%s16]]
  %s18 = scalar_lea.smem %s0, 9
  %s19 = sld [smem:[%s18]]
  %s20 = scalar_lea.smem %s0, 10
  %s21 = sld [smem:[%s20]]
  %s22 = scalar_lea.smem %s0, 11
  %s23 = sld [smem:[%s22]]
  %s24 = scalar_lea.smem %s0, 12
  %s25 = sld [smem:[%s24]]
  %s26 = scalar_lea.smem %s0, 13
  %s27 = sld [smem:[%s26]]
  %s28 = scalar_lea.smem %s0, 14
  %s29 = sld [smem:[%s28]]
  %s30 = scalar_lea.smem %s0, 15
  %s31 = sld [smem:[%s30]]
  %s32 = scalar_lea.smem %s0, 16
  %s33 = sld [smem:[%s32]]
  %s34 = scalar_lea.smem %s0, 17
  %s35 = sld [smem:[%s34]]
  %s36 = scalar_lea.smem %s0, 18
  %s37 = sld [smem:[%s36]]
  %s38 = scalar_lea.smem %s0, 19
  %s39 = sld [smem:[%s38]]
  %s40 = scalar_lea.smem %s0, 20
  %s41 = sld [smem:[%s40]]
  %s42 = scalar_lea.smem %s0, 21
  %s43 = sld [smem:[%s42]]
  %s44 = scalar_lea.smem %s0, 22
  %s45 = sld [smem:[%s44]]
  %s46 = scalar_lea.smem %s0, 23
  %s47 = sld [smem:[%s46]]
  %s48 = scalar_lea.smem %s0, 24
  %s49 = sld [smem:[%s48]]
  %s50 = scalar_lea.smem %s0, 25
  %s51 = sld [smem:[%s50]]
  %s52 = scalar_lea.smem %s0, 26
  %s53 = sld [smem:[%s52]]
  %s54 = scalar_lea.smem %s0, 27
  %s55 = sld [smem:[%s54]]
  %s56 = scalar_lea.smem %s0, 28
  %s57 = sld [smem:[%s56]]
  %s58 = scalar_lea.smem %s0, 29
  %s59 = sld [smem:[%s58]]
  %s60 = scalar_lea.smem %s0, 30
  %s61 = sld [smem:[%s60]]
  %s62 = scalar_lea.smem %s0, 31
  %s63 = sld [smem:[%s62]]
  %s64 = scalar_lea.smem %s0, 32
  %s65 = sld [smem:[%s64]]
  %s66 = scalar_lea.smem %s0, 33
  %s67 = sld [smem:[%s66]]
  %s68 = scalar_lea.smem %s0, 34
  %s69 = sld [smem:[%s68]]
  %s70 = scalar_lea.smem %s0, 35
  %s71 = sld [smem:[%s70]]
  %s72 = scalar_lea.smem %s0, 36
  %s73 = sld [smem:[%s72]]
  %s74 = scalar_lea.smem %s0, 37
  %s75 = sld [smem:[%s74]]
  %s76 = scalar_lea.smem %s0, 38
  %s77 = sld [smem:[%s76]]
  %s78 = scalar_lea.smem %s0, 39
  %s79 = sld [smem:[%s78]]
  %s80 = scalar_lea.smem %s0, 40
  %s81 = sld [smem:[%s80]]
  %s82 = scalar_lea.smem %s0, 41
  %s83 = sld [smem:[%s82]]
  %s84 = scalar_lea.smem %s0, 42
  %s85 = sld [smem:[%s84]]
  %86 = xla_tuple %s71, %s73, %s75, %s77, %s79, %s81, %s83, %s85
  %s87 = sld [smem:[#allocation0]]
  $region298: #{custom_clip_forward.1} parent=0
    _
  %s89 = ssub.s32 1, %s87
  %s90 = scalar_select 0, %s89, %s87
  $region1: #{custom_clip_forward.1} parent=0
    #allocation2 [shape = 'u8[512]{0}', space=vmem, size = 0x400, scoped, tag = 'input window, operand 6, single buffered']
    #allocation3 [shape = 's32[1]{0}', space=sflag, size = 0x4, scoped, tag = 'scoped memory for custom_clip_forward.1']
    #allocation4 [shape = 's32[1]{0}', space=sflag, size = 0x4, scoped, tag = 'scoped memory for custom_clip_forward.1']
    #allocation5 [shape = 'u8[32768]{0}', space=vmem, size = 0x8000, scoped, tag = 'input window, operand 7, single buffered']
    #allocation6 [shape = 's32[1]{0}', space=sflag, size = 0x4, scoped, tag = 'scoped memory for custom_clip_forward.1']
    #allocation7 [shape = 'u8[512]{0}', space=vmem, size = 0x400, scoped, tag = 'input window, operand 8, single buffered']
    #allocation8 [shape = 'u8[65536]{0}', space=vmem, size = 0x10000, scoped, tag = 'input window, operand 9, single buffered']
    #allocation9 [shape = 's32[1]{0}', space=sflag, size = 0x4, scoped, tag = 'scoped memory for custom_clip_forward.1']
    #allocation10 [shape = 'u8[1024]{0}', space=vmem, size = 0x400, scoped, tag = 'input window, operand 10, single buffered']
    #allocation11 [shape = 'u8[512]{0}', space=vmem, size = 0x400, scoped, tag = 'input window, operand 11, single buffered']
    #allocation12 [shape = 's32[1]{0}', space=sflag, size = 0x4, scoped, tag = 'scoped memory for custom_clip_forward.1']
    #allocation13 [shape = 'u8[512]{0}', space=vmem, size = 0x400, scoped, tag = 'input window, operand 12, single buffered']
    #allocation14 [shape = 'u8[32768]{0}', space=vmem, size = 0x8000, scoped, tag = 'input window, operand 13, single buffered']
    #allocation15 [shape = 's32[1]{0}', space=sflag, size = 0x4, scoped, tag = 'scoped memory for custom_clip_forward.1']
    #allocation16 [shape = 'u8[512]{0}', space=vmem, size = 0x400, scoped, tag = 'input window, operand 14, single buffered']
    #allocation17 [shape = 'u8[32768]{0}', space=vmem, size = 0x8000, scoped, tag = 'input window, operand 17, single buffered']
    #allocation18 [shape = 's32[1]{0}', space=sflag, size = 0x4, scoped, tag = 'scoped memory for custom_clip_forward.1']
    #allocation19 [shape = 'u8[1024]{0}', space=vmem, size = 0x400, scoped, tag = 'input window, operand 20, single buffered']
    #allocation20 [shape = 'u8[512]{0}', space=vmem, size = 0x400, scoped, tag = 'input window, operand 21, single buffered']
    #allocation21 [shape = 's32[1]{0}', space=sflag, size = 0x4, scoped, tag = 'scoped memory for custom_clip_forward.1']
    #allocation22 [shape = 'u8[512]{0}', space=vmem, size = 0x400, scoped, tag = 'input window, operand 22, single buffered']
    #allocation23 [shape = 'u8[512]{0}', space=vmem, size = 0x400, scoped, tag = 'input window, operand 24, single buffered']
    #allocation24 [shape = 's32[1]{0}', space=sflag, size = 0x4, scoped, tag = 'scoped memory for custom_clip_forward.1']
    #allocation25 [shape = 'u8[512]{0}', space=vmem, size = 0x400, scoped, tag = 'input window, operand 25, single buffered']
    #allocation26 [shape = 'u8[512]{0}', space=vmem, size = 0x400, scoped, tag = 'input window, operand 26, single buffered']
    #allocation27 [shape = 's32[1]{0}', space=sflag, size = 0x4, scoped, tag = 'scoped memory for custom_clip_forward.1']
    #allocation28 [shape = 'u8[512]{0}', space=vmem, size = 0x400, scoped, tag = 'input window, operand 28, single buffered']
    #allocation29 [shape = 'u8[32768]{0}', space=vmem, size = 0x8000, scoped, tag = 'input window, operand 29, single buffered']
    #allocation30 [shape = 's32[1]{0}', space=sflag, size = 0x4, scoped, tag = 'scoped memory for custom_clip_forward.1']
    #allocation31 [shape = 'u8[32768]{0}', space=vmem, size = 0x8000, scoped, tag = 'input window, operand 30, single buffered']
    #allocation32 [shape = 'u8[512]{0}', space=vmem, size = 0x400, scoped, tag = 'input window, operand 31, single buffered']
    #allocation33 [shape = 's32[1]{0}', space=sflag, size = 0x4, scoped, tag = 'scoped memory for custom_clip_forward.1']
    #allocation34 [shape = 'u8[32768]{0}', space=vmem, size = 0x8000, scoped, tag = 'input window, operand 32, single buffered']
    #allocation35 [shape = 'u8[32768]{0}', space=vmem, size = 0x8000, scoped, tag = 'input window, operand 33, single buffered']
    #allocation36 [shape = 's32[1]{0}', space=sflag, size = 0x4, scoped, tag = 'scoped memory for custom_clip_forward.1']
    #allocation37 [shape = 'u8[512]{0}', space=vmem, size = 0x400, scoped, tag = 'input window, operand 34, single buffered']
    #allocation38 [shape = 'u8[1024]{0}', space=vmem, size = 0x400, scoped, tag = 'output window, operand 0, single buffered']
    #allocation39 [shape = 'u8[1024]{0}', space=vmem, size = 0x400, scoped, tag = 'output window, operand 1, single buffered']
    #allocation40 [shape = 's32[1]{0}', space=sflag, size = 0x4, scoped, tag = 'scoped memory for custom_clip_forward.1']
    #allocation41 [shape = 'u8[1024]{0}', space=vmem, size = 0x400, scoped, tag = 'output window, operand 4, single buffered']
    #allocation42 [shape = 'u8[1024]{0}', space=vmem, size = 0x400, scoped, tag = 'output window, operand 5, single buffered']
    #allocation43 [shape = 's32[1]{0}', space=sflag, size = 0x4, scoped, tag = 'scoped memory for custom_clip_forward.1']
    %91 = vsyncpa [#allocation3], 0
    %92 = vsyncpa [#allocation6], 0
    %93 = vsyncpa [#allocation9], 0
    %94 = vsyncpa [#allocation12], 0
    %95 = vsyncpa [#allocation15], 0
    %96 = vsyncpa [#allocation18], 0
    %97 = vsyncpa [#allocation21], 0
    %98 = vsyncpa [#allocation24], 0
    %99 = vsyncpa [#allocation27], 0
    %100 = vsyncpa [#allocation30], 0
    %101 = vsyncpa [#allocation33], 0
    %102 = vsyncpa [#allocation36], 0
    %103 = vsyncpa [#allocation4], 0
    %104 = vsyncpa [#allocation40], 0
    %105 = vsyncpa [#allocation43], 0
    // Predicated region
    $region2: #{custom_clip_forward.1} parent=1 // pred_check
      _
    $region3: #{custom_clip_forward.1} parent=1 // pred_check_branch
      %107 = sbr.rel (0) target = $region5
    $region4: #{custom_clip_forward.1} parent=1 // pred_region
      _
    $region5: #{custom_clip_forward.1} parent=1 // pred_fallthru
      _
    // Predicated region
    $region6: #{custom_clip_forward.1} parent=1 // pred_check
      _
    $region7: #{custom_clip_forward.1} parent=1 // pred_check_branch
      %109 = sbr.rel (0) target = $region9
    $region8: #{custom_clip_forward.1} parent=1 // pred_region
      _
    $region9: #{custom_clip_forward.1} parent=1 // pred_fallthru
      _
    // Predicated region
    $region10: #{custom_clip_forward.1} parent=1 // pred_check
      _
    $region11: #{custom_clip_forward.1} parent=1 // pred_check_branch
      %111 = sbr.rel (0) target = $region13
    $region12: #{custom_clip_forward.1} parent=1 // pred_region
      _
    $region13: #{custom_clip_forward.1} parent=1 // pred_fallthru
      _
    // Predicated region
    $region14: #{custom_clip_forward.1} parent=1 // pred_check
      _
    $region15: #{custom_clip_forward.1} parent=1 // pred_check_branch
      %113 = sbr.rel (0) target = $region17
    $region16: #{custom_clip_forward.1} parent=1 // pred_region
      _
    $region17: #{custom_clip_forward.1} parent=1 // pred_fallthru
      _
    // Predicated region
    $region18: #{custom_clip_forward.1} parent=1 // pred_check
      _
    $region19: #{custom_clip_forward.1} parent=1 // pred_check_branch
      %115 = sbr.rel (0) target = $region21
    $region20: #{custom_clip_forward.1} parent=1 // pred_region
      _
    $region21: #{custom_clip_forward.1} parent=1 // pred_fallthru
      _
    // Predicated region
    $region22: #{custom_clip_forward.1} parent=1 // pred_check
      _
    $region23: #{custom_clip_forward.1} parent=1 // pred_check_branch
      %117 = sbr.rel (0) target = $region25
    $region24: #{custom_clip_forward.1} parent=1 // pred_region
      _
    $region25: #{custom_clip_forward.1} parent=1 // pred_fallthru
      _
    // Predicated region
    $region26: #{custom_clip_forward.1} parent=1 // pred_check
      _
    $region27: #{custom_clip_forward.1} parent=1 // pred_check_branch
      %119 = sbr.rel (0) target = $region29
    $region28: #{custom_clip_forward.1} parent=1 // pred_region
      %s121 = ssub.s32 16, 16
      %122 = vsyncadd [#allocation3], %s121
      %s124 = sshll.u32 [#allocation2], 4
      %s125 = int_to_ptr.vmem [resolvable:$true] %s124
      %127 = dma.hbm_to_vmem [thread:$0]  %s13, 16, %s125, [#allocation3]
    $region29: #{custom_clip_forward.1} parent=1 // pred_fallthru
      _
    // Predicated region
    $region30: #{custom_clip_forward.1} parent=1 // pred_check
      _
    $region31: #{custom_clip_forward.1} parent=1 // pred_check_branch
      %129 = sbr.rel (0) target = $region33
    $region32: #{custom_clip_forward.1} parent=1 // pred_region
      %s131 = ssub.s32 1024, 1024
      %132 = vsyncadd [#allocation6], %s131
      %s133 = sshll.u32 [#allocation5], 4
      %s134 = int_to_ptr.vmem [resolvable:$true] %s133
      %139 = dma.hbm_to_vmem [thread:$0]  %s15, 1024, %s134, [#allocation6], 64, 64, 4
    $region33: #{custom_clip_forward.1} parent=1 // pred_fallthru
      _
    // Predicated region
    $region34: #{custom_clip_forward.1} parent=1 // pred_check
      _
    $region35: #{custom_clip_forward.1} parent=1 // pred_check_branch
      %141 = sbr.rel (0) target = $region37
    $region36: #{custom_clip_forward.1} parent=1 // pred_region
      %s143 = ssub.s32 16, 16
      %144 = vsyncadd [#allocation6], %s143
      %s146 = sshll.u32 [#allocation7], 4
      %s147 = int_to_ptr.vmem [resolvable:$true] %s146
      %149 = dma.hbm_to_vmem [thread:$0]  %s17, 16, %s147, [#allocation6]
    $region37: #{custom_clip_forward.1} parent=1 // pred_fallthru
      _
    // Predicated region
    $region38: #{custom_clip_forward.1} parent=1 // pred_check
      _
    $region39: #{custom_clip_forward.1} parent=1 // pred_check_branch
      %151 = sbr.rel (0) target = $region41
    $region40: #{custom_clip_forward.1} parent=1 // pred_region
      %s153 = ssub.s32 2048, 2048
      %154 = vsyncadd [#allocation9], %s153
      %s155 = sshll.u32 [#allocation8], 4
      %s156 = int_to_ptr.vmem [resolvable:$true] %s155
      %161 = dma.hbm_to_vmem [thread:$0]  %s19, 2048, %s156, [#allocation9], 128, 128, 8
    $region41: #{custom_clip_forward.1} parent=1 // pred_fallthru
      _
    // Predicated region
    $region42: #{custom_clip_forward.1} parent=1 // pred_check
      _
    $region43: #{custom_clip_forward.1} parent=1 // pred_check_branch
      %163 = sbr.rel (0) target = $region45
    $region44: #{custom_clip_forward.1} parent=1 // pred_region
      %s165 = ssub.s32 32, 32
      %166 = vsyncadd [#allocation9], %s165
      %s168 = sshll.u32 [#allocation10], 4
      %s169 = int_to_ptr.vmem [resolvable:$true] %s168
      %171 = dma.hbm_to_vmem [thread:$0]  %s21, 32, %s169, [#allocation9]
    $region45: #{custom_clip_forward.1} parent=1 // pred_fallthru
      _
    // Predicated region
    $region46: #{custom_clip_forward.1} parent=1 // pred_check
      _
    $region47: #{custom_clip_forward.1} parent=1 // pred_check_branch
      %173 = sbr.rel (0) target = $region49
    $region48: #{custom_clip_forward.1} parent=1 // pred_region
      %s175 = ssub.s32 16, 16
      %176 = vsyncadd [#allocation12], %s175
      %s178 = sshll.u32 [#allocation11], 4
      %s179 = int_to_ptr.vmem [resolvable:$true] %s178
      %181 = dma.hbm_to_vmem [thread:$0]  %s23, 16, %s179, [#allocation12]
    $region49: #{custom_clip_forward.1} parent=1 // pred_fallthru
      _
    // Predicated region
    $region50: #{custom_clip_forward.1} parent=1 // pred_check
      _
    $region51: #{custom_clip_forward.1} parent=1 // pred_check_branch
      %183 = sbr.rel (0) target = $region53
    $region52: #{custom_clip_forward.1} parent=1 // pred_region
      %s185 = ssub.s32 16, 16
      %186 = vsyncadd [#allocation12], %s185
      %s188 = sshll.u32 [#allocation13], 4
      %s189 = int_to_ptr.vmem [resolvable:$true] %s188
      %191 = dma.hbm_to_vmem [thread:$0]  %s25, 16, %s189, [#allocation12]
    $region53: #{custom_clip_forward.1} parent=1 // pred_fallthru
      _
    // Predicated region
    $region54: #{custom_clip_forward.1} parent=1 // pred_check
      _
    $region55: #{custom_clip_forward.1} parent=1 // pred_check_branch
      %193 = sbr.rel (0) target = $region57
    $region56: #{custom_clip_forward.1} parent=1 // pred_region
      %s195 = ssub.s32 1024, 1024
      %196 = vsyncadd [#allocation15], %s195
      %s197 = sshll.u32 [#allocation14], 4
      %s198 = int_to_ptr.vmem [resolvable:$true] %s197
      %203 = dma.hbm_to_vmem [thread:$0]  %s27, 1024, %s198, [#allocation15], 64, 64, 4
    $region57: #{custom_clip_forward.1} parent=1 // pred_fallthru
      _
    // Predicated region
    $region58: #{custom_clip_forward.1} parent=1 // pred_check
      _
    $region59: #{custom_clip_forward.1} parent=1 // pred_check_branch
      %205 = sbr.rel (0) target = $region61
    $region60: #{custom_clip_forward.1} parent=1 // pred_region
      %s207 = ssub.s32 16, 16
      %208 = vsyncadd [#allocation15], %s207
      %s210 = sshll.u32 [#allocation16], 4
      %s211 = int_to_ptr.vmem [resolvable:$true] %s210
      %213 = dma.hbm_to_vmem [thread:$0]  %s29, 16, %s211, [#allocation15]
    $region61: #{custom_clip_forward.1} parent=1 // pred_fallthru
      _
    // Predicated region
    $region62: #{custom_clip_forward.1} parent=1 // pred_check
      _
    $region63: #{custom_clip_forward.1} parent=1 // pred_check_branch
      %215 = sbr.rel (0) target = $region65
    $region64: #{custom_clip_forward.1} parent=1 // pred_region
      _
    $region65: #{custom_clip_forward.1} parent=1 // pred_fallthru
      _
    // Predicated region
    $region66: #{custom_clip_forward.1} parent=1 // pred_check
      _
    $region67: #{custom_clip_forward.1} parent=1 // pred_check_branch
      %217 = sbr.rel (0) target = $region69
    $region68: #{custom_clip_forward.1} parent=1 // pred_region
      _
    $region69: #{custom_clip_forward.1} parent=1 // pred_fallthru
      _
    // Predicated region
    $region70: #{custom_clip_forward.1} parent=1 // pred_check
      _
    $region71: #{custom_clip_forward.1} parent=1 // pred_check_branch
      %219 = sbr.rel (0) target = $region73
    $region72: #{custom_clip_forward.1} parent=1 // pred_region
      %s221 = ssub.s32 1024, 1024
      %222 = vsyncadd [#allocation18], %s221
      %s223 = sshll.u32 [#allocation17], 4
      %s224 = int_to_ptr.vmem [resolvable:$true] %s223
      %229 = dma.hbm_to_vmem [thread:$0]  %s35, 1024, %s224, [#allocation18], 64, 64, 4
    $region73: #{custom_clip_forward.1} parent=1 // pred_fallthru
      _
    // Predicated region
    $region74: #{custom_clip_forward.1} parent=1 // pred_check
      _
    $region75: #{custom_clip_forward.1} parent=1 // pred_check_branch
      %231 = sbr.rel (0) target = $region77
    $region76: #{custom_clip_forward.1} parent=1 // pred_region
      _
    $region77: #{custom_clip_forward.1} parent=1 // pred_fallthru
      _
    // Predicated region
    $region78: #{custom_clip_forward.1} parent=1 // pred_check
      _
    $region79: #{custom_clip_forward.1} parent=1 // pred_check_branch
      %233 = sbr.rel (0) target = $region81
    $region80: #{custom_clip_forward.1} parent=1 // pred_region
      _
    $region81: #{custom_clip_forward.1} parent=1 // pred_fallthru
      _
    // Predicated region
    $region82: #{custom_clip_forward.1} parent=1 // pred_check
      _
    $region83: #{custom_clip_forward.1} parent=1 // pred_check_branch
      %235 = sbr.rel (0) target = $region85
    $region84: #{custom_clip_forward.1} parent=1 // pred_region
      %s237 = ssub.s32 32, 32
      %238 = vsyncadd [#allocation18], %s237
      %s240 = sshll.u32 [#allocation19], 4
      %s241 = int_to_ptr.vmem [resolvable:$true] %s240
      %243 = dma.hbm_to_vmem [thread:$0]  %s41, 32, %s241, [#allocation18]
    $region85: #{custom_clip_forward.1} parent=1 // pred_fallthru
      _
    // Predicated region
    $region86: #{custom_clip_forward.1} parent=1 // pred_check
      _
    $region87: #{custom_clip_forward.1} parent=1 // pred_check_branch
      %245 = sbr.rel (0) target = $region89
    $region88: #{custom_clip_forward.1} parent=1 // pred_region
      %s247 = ssub.s32 16, 16
      %248 = vsyncadd [#allocation21], %s247
      %s250 = sshll.u32 [#allocation20], 4
      %s251 = int_to_ptr.vmem [resolvable:$true] %s250
      %253 = dma.hbm_to_vmem [thread:$0]  %s43, 16, %s251, [#allocation21]
    $region89: #{custom_clip_forward.1} parent=1 // pred_fallthru
      _
    // Predicated region
    $region90: #{custom_clip_forward.1} parent=1 // pred_check
      _
    $region91: #{custom_clip_forward.1} parent=1 // pred_check_branch
      %255 = sbr.rel (0) target = $region93
    $region92: #{custom_clip_forward.1} parent=1 // pred_region
      %s257 = ssub.s32 16, 16
      %258 = vsyncadd [#allocation21], %s257
      %s260 = sshll.u32 [#allocation22], 4
      %s261 = int_to_ptr.vmem [resolvable:$true] %s260
      %263 = dma.hbm_to_vmem [thread:$0]  %s45, 16, %s261, [#allocation21]
    $region93: #{custom_clip_forward.1} parent=1 // pred_fallthru
      _
    // Predicated region
    $region94: #{custom_clip_forward.1} parent=1 // pred_check
      _
    $region95: #{custom_clip_forward.1} parent=1 // pred_check_branch
      %265 = sbr.rel (0) target = $region97
    $region96: #{custom_clip_forward.1} parent=1 // pred_region
      _
    $region97: #{custom_clip_forward.1} parent=1 // pred_fallthru
      _
    // Predicated region
    $region98: #{custom_clip_forward.1} parent=1 // pred_check
      _
    $region99: #{custom_clip_forward.1} parent=1 // pred_check_branch
      %267 = sbr.rel (0) target = $region101
    $region100: #{custom_clip_forward.1} parent=1 // pred_region
      %s269 = ssub.s32 16, 16
      %270 = vsyncadd [#allocation24], %s269
      %s272 = sshll.u32 [#allocation23], 4
      %s273 = int_to_ptr.vmem [resolvable:$true] %s272
      %275 = dma.hbm_to_vmem [thread:$0]  %s49, 16, %s273, [#allocation24]
    $region101: #{custom_clip_forward.1} parent=1 // pred_fallthru
      _
    // Predicated region
    $region102: #{custom_clip_forward.1} parent=1 // pred_check
      _
    $region103: #{custom_clip_forward.1} parent=1 // pred_check_branch
      %277 = sbr.rel (0) target = $region105
    $region104: #{custom_clip_forward.1} parent=1 // pred_region
      %s279 = ssub.s32 16, 16
      %280 = vsyncadd [#allocation24], %s279
      %s282 = sshll.u32 [#allocation25], 4
      %s283 = int_to_ptr.vmem [resolvable:$true] %s282
      %285 = dma.hbm_to_vmem [thread:$0]  %s51, 16, %s283, [#allocation24]
    $region105: #{custom_clip_forward.1} parent=1 // pred_fallthru
      _
    // Predicated region
    $region106: #{custom_clip_forward.1} parent=1 // pred_check
      _
    $region107: #{custom_clip_forward.1} parent=1 // pred_check_branch
      %287 = sbr.rel (0) target = $region109
    $region108: #{custom_clip_forward.1} parent=1 // pred_region
      %s289 = ssub.s32 16, 16
      %290 = vsyncadd [#allocation27], %s289
      %s292 = sshll.u32 [#allocation26], 4
      %s293 = int_to_ptr.vmem [resolvable:$true] %s292
      %295 = dma.hbm_to_vmem [thread:$0]  %s53, 16, %s293, [#allocation27]
    $region109: #{custom_clip_forward.1} parent=1 // pred_fallthru
      _
    // Predicated region
    $region110: #{custom_clip_forward.1} parent=1 // pred_check
      _
    $region111: #{custom_clip_forward.1} parent=1 // pred_check_branch
      %297 = sbr.rel (0) target = $region113
    $region112: #{custom_clip_forward.1} parent=1 // pred_region
      _
    $region113: #{custom_clip_forward.1} parent=1 // pred_fallthru
      _
    // Predicated region
    $region114: #{custom_clip_forward.1} parent=1 // pred_check
      _
    $region115: #{custom_clip_forward.1} parent=1 // pred_check_branch
      %299 = sbr.rel (0) target = $region117
    $region116: #{custom_clip_forward.1} parent=1 // pred_region
      %s301 = ssub.s32 16, 16
      %302 = vsyncadd [#allocation27], %s301
      %s304 = sshll.u32 [#allocation28], 4
      %s305 = int_to_ptr.vmem [resolvable:$true] %s304
      %307 = dma.hbm_to_vmem [thread:$0]  %s57, 16, %s305, [#allocation27]
    $region117: #{custom_clip_forward.1} parent=1 // pred_fallthru
      _
    // Predicated region
    $region118: #{custom_clip_forward.1} parent=1 // pred_check
      _
    $region119: #{custom_clip_forward.1} parent=1 // pred_check_branch
      %309 = sbr.rel (0) target = $region121
    $region120: #{custom_clip_forward.1} parent=1 // pred_region
      %s311 = ssub.s32 1024, 1024
      %312 = vsyncadd [#allocation30], %s311
      %s313 = sshll.u32 [#allocation29], 4
      %s314 = int_to_ptr.vmem [resolvable:$true] %s313
      %319 = dma.hbm_to_vmem [thread:$0]  %s59, 1024, %s314, [#allocation30], 64, 64, 4
    $region121: #{custom_clip_forward.1} parent=1 // pred_fallthru
      _
    // Predicated region
    $region122: #{custom_clip_forward.1} parent=1 // pred_check
      _
    $region123: #{custom_clip_forward.1} parent=1 // pred_check_branch
      %321 = sbr.rel (0) target = $region125
    $region124: #{custom_clip_forward.1} parent=1 // pred_region
      %s323 = ssub.s32 1024, 1024
      %324 = vsyncadd [#allocation30], %s323
      %s325 = sshll.u32 [#allocation31], 4
      %s326 = int_to_ptr.vmem [resolvable:$true] %s325
      %331 = dma.hbm_to_vmem [thread:$0]  %s61, 1024, %s326, [#allocation30], 64, 64, 4
    $region125: #{custom_clip_forward.1} parent=1 // pred_fallthru
      _
    // Predicated region
    $region126: #{custom_clip_forward.1} parent=1 // pred_check
      _
    $region127: #{custom_clip_forward.1} parent=1 // pred_check_branch
      %333 = sbr.rel (0) target = $region129
    $region128: #{custom_clip_forward.1} parent=1 // pred_region
      %s335 = ssub.s32 16, 16
      %336 = vsyncadd [#allocation33], %s335
      %s338 = sshll.u32 [#allocation32], 4
      %s339 = int_to_ptr.vmem [resolvable:$true] %s338
      %341 = dma.hbm_to_vmem [thread:$0]  %s63, 16, %s339, [#allocation33]
    $region129: #{custom_clip_forward.1} parent=1 // pred_fallthru
      _
    // Predicated region
    $region130: #{custom_clip_forward.1} parent=1 // pred_check
      _
    $region131: #{custom_clip_forward.1} parent=1 // pred_check_branch
      %343 = sbr.rel (0) target = $region133
    $region132: #{custom_clip_forward.1} parent=1 // pred_region
      %s345 = ssub.s32 1024, 1024
      %346 = vsyncadd [#allocation33], %s345
      %s347 = sshll.u32 [#allocation34], 4
      %s348 = int_to_ptr.vmem [resolvable:$true] %s347
      %353 = dma.hbm_to_vmem [thread:$0]  %s65, 1024, %s348, [#allocation33], 64, 64, 4
    $region133: #{custom_clip_forward.1} parent=1 // pred_fallthru
      _
    // Predicated region
    $region134: #{custom_clip_forward.1} parent=1 // pred_check
      _
    $region135: #{custom_clip_forward.1} parent=1 // pred_check_branch
      %355 = sbr.rel (0) target = $region137
    $region136: #{custom_clip_forward.1} parent=1 // pred_region
      %s357 = ssub.s32 1024, 1024
      %358 = vsyncadd [#allocation36], %s357
      %s359 = sshll.u32 [#allocation35], 4
      %s360 = int_to_ptr.vmem [resolvable:$true] %s359
      %365 = dma.hbm_to_vmem [thread:$0]  %s67, 1024, %s360, [#allocation36], 64, 64, 4
    $region137: #{custom_clip_forward.1} parent=1 // pred_fallthru
      _
    // Predicated region
    $region138: #{custom_clip_forward.1} parent=1 // pred_check
      _
    $region139: #{custom_clip_forward.1} parent=1 // pred_check_branch
      %367 = sbr.rel (0) target = $region141
    $region140: #{custom_clip_forward.1} parent=1 // pred_region
      %s369 = ssub.s32 16, 16
      %370 = vsyncadd [#allocation36], %s369
      %s372 = sshll.u32 [#allocation37], 4
      %s373 = int_to_ptr.vmem [resolvable:$true] %s372
      %375 = dma.hbm_to_vmem [thread:$0]  %s69, 16, %s373, [#allocation36]
    $region141: #{custom_clip_forward.1} parent=1 // pred_fallthru
      _
    // Predicated region
    $region142: #{custom_clip_forward.1} parent=1 // pred_check
      _
    $region143: #{custom_clip_forward.1} parent=1 // pred_check_branch
      %377 = sbr.rel (0) target = $region145
    $region144: #{custom_clip_forward.1} parent=1 // pred_region
      %378 = dma.done [#allocation3], 16
    $region145: #{custom_clip_forward.1} parent=1 // pred_fallthru
      _
    // Predicated region
    $region146: #{custom_clip_forward.1} parent=1 // pred_check
      _
    $region147: #{custom_clip_forward.1} parent=1 // pred_check_branch
      %380 = sbr.rel (0) target = $region149
    $region148: #{custom_clip_forward.1} parent=1 // pred_region
      %381 = dma.done [#allocation6], 1024
    $region149: #{custom_clip_forward.1} parent=1 // pred_fallthru
      _
    // Predicated region
    $region150: #{custom_clip_forward.1} parent=1 // pred_check
      _
    $region151: #{custom_clip_forward.1} parent=1 // pred_check_branch
      %383 = sbr.rel (0) target = $region153
    $region152: #{custom_clip_forward.1} parent=1 // pred_region
      %384 = dma.done [#allocation6], 16
    $region153: #{custom_clip_forward.1} parent=1 // pred_fallthru
      _
    // Predicated region
    $region154: #{custom_clip_forward.1} parent=1 // pred_check
      _
    $region155: #{custom_clip_forward.1} parent=1 // pred_check_branch
      %386 = sbr.rel (0) target = $region157
    $region156: #{custom_clip_forward.1} parent=1 // pred_region
      %387 = dma.done [#allocation9], 2048
    $region157: #{custom_clip_forward.1} parent=1 // pred_fallthru
      _
    // Predicated region
    $region158: #{custom_clip_forward.1} parent=1 // pred_check
      _
    $region159: #{custom_clip_forward.1} parent=1 // pred_check_branch
      %389 = sbr.rel (0) target = $region161
    $region160: #{custom_clip_forward.1} parent=1 // pred_region
      %390 = dma.done [#allocation9], 32
    $region161: #{custom_clip_forward.1} parent=1 // pred_fallthru
      _
    // Predicated region
    $region162: #{custom_clip_forward.1} parent=1 // pred_check
      _
    $region163: #{custom_clip_forward.1} parent=1 // pred_check_branch
      %392 = sbr.rel (0) target = $region165
    $region164: #{custom_clip_forward.1} parent=1 // pred_region
      %393 = dma.done [#allocation12], 16
    $region165: #{custom_clip_forward.1} parent=1 // pred_fallthru
      _
    // Predicated region
    $region166: #{custom_clip_forward.1} parent=1 // pred_check
      _
    $region167: #{custom_clip_forward.1} parent=1 // pred_check_branch
      %395 = sbr.rel (0) target = $region169
    $region168: #{custom_clip_forward.1} parent=1 // pred_region
      %396 = dma.done [#allocation12], 16
    $region169: #{custom_clip_forward.1} parent=1 // pred_fallthru
      _
    // Predicated region
    $region170: #{custom_clip_forward.1} parent=1 // pred_check
      _
    $region171: #{custom_clip_forward.1} parent=1 // pred_check_branch
      %398 = sbr.rel (0) target = $region173
    $region172: #{custom_clip_forward.1} parent=1 // pred_region
      %399 = dma.done [#allocation15], 1024
    $region173: #{custom_clip_forward.1} parent=1 // pred_fallthru
      _
    // Predicated region
    $region174: #{custom_clip_forward.1} parent=1 // pred_check
      _
    $region175: #{custom_clip_forward.1} parent=1 // pred_check_branch
      %401 = sbr.rel (0) target = $region177
    $region176: #{custom_clip_forward.1} parent=1 // pred_region
      %402 = dma.done [#allocation15], 16
    $region177: #{custom_clip_forward.1} parent=1 // pred_fallthru
      _
    // Predicated region
    $region178: #{custom_clip_forward.1} parent=1 // pred_check
      _
    $region179: #{custom_clip_forward.1} parent=1 // pred_check_branch
      %404 = sbr.rel (0) target = $region181
    $region180: #{custom_clip_forward.1} parent=1 // pred_region
      %405 = dma.done [#allocation18], 1024
    $region181: #{custom_clip_forward.1} parent=1 // pred_fallthru
      _
    // Predicated region
    $region182: #{custom_clip_forward.1} parent=1 // pred_check
      _
    $region183: #{custom_clip_forward.1} parent=1 // pred_check_branch
      %407 = sbr.rel (0) target = $region185
    $region184: #{custom_clip_forward.1} parent=1 // pred_region
      %408 = dma.done [#allocation18], 32
    $region185: #{custom_clip_forward.1} parent=1 // pred_fallthru
      _
    // Predicated region
    $region186: #{custom_clip_forward.1} parent=1 // pred_check
      _
    $region187: #{custom_clip_forward.1} parent=1 // pred_check_branch
      %410 = sbr.rel (0) target = $region189
    $region188: #{custom_clip_forward.1} parent=1 // pred_region
      %411 = dma.done [#allocation21], 16
    $region189: #{custom_clip_forward.1} parent=1 // pred_fallthru
      _
    // Predicated region
    $region190: #{custom_clip_forward.1} parent=1 // pred_check
      _
    $region191: #{custom_clip_forward.1} parent=1 // pred_check_branch
      %413 = sbr.rel (0) target = $region193
    $region192: #{custom_clip_forward.1} parent=1 // pred_region
      %414 = dma.done [#allocation21], 16
    $region193: #{custom_clip_forward.1} parent=1 // pred_fallthru
      _
    // Predicated region
    $region194: #{custom_clip_forward.1} parent=1 // pred_check
      _
    $region195: #{custom_clip_forward.1} parent=1 // pred_check_branch
      %416 = sbr.rel (0) target = $region197
    $region196: #{custom_clip_forward.1} parent=1 // pred_region
      %417 = dma.done [#allocation24], 16
    $region197: #{custom_clip_forward.1} parent=1 // pred_fallthru
      _
    // Predicated region
    $region198: #{custom_clip_forward.1} parent=1 // pred_check
      _
    $region199: #{custom_clip_forward.1} parent=1 // pred_check_branch
      %419 = sbr.rel (0) target = $region201
    $region200: #{custom_clip_forward.1} parent=1 // pred_region
      %420 = dma.done [#allocation24], 16
    $region201: #{custom_clip_forward.1} parent=1 // pred_fallthru
      _
    // Predicated region
    $region202: #{custom_clip_forward.1} parent=1 // pred_check
      _
    $region203: #{custom_clip_forward.1} parent=1 // pred_check_branch
      %422 = sbr.rel (0) target = $region205
    $region204: #{custom_clip_forward.1} parent=1 // pred_region
      %423 = dma.done [#allocation27], 16
    $region205: #{custom_clip_forward.1} parent=1 // pred_fallthru
      _
    // Predicated region
    $region206: #{custom_clip_forward.1} parent=1 // pred_check
      _
    $region207: #{custom_clip_forward.1} parent=1 // pred_check_branch
      %425 = sbr.rel (0) target = $region209
    $region208: #{custom_clip_forward.1} parent=1 // pred_region
      %426 = dma.done [#allocation27], 16
    $region209: #{custom_clip_forward.1} parent=1 // pred_fallthru
      _
    // Predicated region
    $region210: #{custom_clip_forward.1} parent=1 // pred_check
      _
    $region211: #{custom_clip_forward.1} parent=1 // pred_check_branch
      %428 = sbr.rel (0) target = $region213
    $region212: #{custom_clip_forward.1} parent=1 // pred_region
      %429 = dma.done [#allocation30], 1024
    $region213: #{custom_clip_forward.1} parent=1 // pred_fallthru
      _
    // Predicated region
    $region214: #{custom_clip_forward.1} parent=1 // pred_check
      _
    $region215: #{custom_clip_forward.1} parent=1 // pred_check_branch
      %431 = sbr.rel (0) target = $region217
    $region216: #{custom_clip_forward.1} parent=1 // pred_region
      %432 = dma.done [#allocation30], 1024
    $region217: #{custom_clip_forward.1} parent=1 // pred_fallthru
      _
    // Predicated region
    $region218: #{custom_clip_forward.1} parent=1 // pred_check
      _
    $region219: #{custom_clip_forward.1} parent=1 // pred_check_branch
      %434 = sbr.rel (0) target = $region221
    $region220: #{custom_clip_forward.1} parent=1 // pred_region
      %435 = dma.done [#allocation33], 16
    $region221: #{custom_clip_forward.1} parent=1 // pred_fallthru
      _
    // Predicated region
    $region222: #{custom_clip_forward.1} parent=1 // pred_check
      _
    $region223: #{custom_clip_forward.1} parent=1 // pred_check_branch
      %437 = sbr.rel (0) target = $region225
    $region224: #{custom_clip_forward.1} parent=1 // pred_region
      %438 = dma.done [#allocation33], 1024
    $region225: #{custom_clip_forward.1} parent=1 // pred_fallthru
      _
    // Predicated region
    $region226: #{custom_clip_forward.1} parent=1 // pred_check
      _
    $region227: #{custom_clip_forward.1} parent=1 // pred_check_branch
      %440 = sbr.rel (0) target = $region229
    $region228: #{custom_clip_forward.1} parent=1 // pred_region
      %441 = dma.done [#allocation36], 1024
    $region229: #{custom_clip_forward.1} parent=1 // pred_fallthru
      _
    // Predicated region
    $region230: #{custom_clip_forward.1} parent=1 // pred_check
      _
    $region231: #{custom_clip_forward.1} parent=1 // pred_check_branch
      %443 = sbr.rel (0) target = $region233
    $region232: #{custom_clip_forward.1} parent=1 // pred_region
      %444 = dma.done [#allocation36], 16
    $region233: #{custom_clip_forward.1} parent=1 // pred_fallthru
      _
    %v446 = vld [vmem:[%s7] sm:$0xff]
    %v447 = vld [vmem:[%s7 + $0x8] sm:$0xff]
    %v448 = vld [vmem:[%s9] sm:$0xff]
    %v449 = vld [vmem:[%s9 + $0x8] sm:$0xff]
    %v450 = vld [vmem:[%s3] sm:$0xff]
    %v451 = vld [vmem:[%s3 + $0x8] sm:$0xff]
    %v452 = vld [vmem:[%s3 + $0x10] sm:$0xff]
    %v453 = vld [vmem:[%s3 + $0x18] sm:$0xff]
    %v454 = vld [vmem:[%s3 + $0x20] sm:$0xff]
    %v455 = vld [vmem:[%s3 + $0x28] sm:$0xff]
    %v456 = vld [vmem:[%s3 + $0x30] sm:$0xff]
    %v457 = vld [vmem:[%s3 + $0x38] sm:$0xff]
    %v458 = vld [vmem:[%s3 + $0x40] sm:$0xff]
    %v459 = vld [vmem:[%s3 + $0x48] sm:$0xff]
    %v460 = vld [vmem:[%s3 + $0x50] sm:$0xff]
    %v461 = vld [vmem:[%s3 + $0x58] sm:$0xff]
    %v462 = vld [vmem:[%s3 + $0x60] sm:$0xff]
    %v463 = vld [vmem:[%s3 + $0x68] sm:$0xff]
    %v464 = vld [vmem:[%s3 + $0x70] sm:$0xff]
    %v465 = vld [vmem:[%s3 + $0x78] sm:$0xff]
    %v466 = vpack.c.bf16 %v451, %v450
    %v467 = vpack.c.bf16 %v453, %v452
    %v468 = vpack.c.bf16 %v455, %v454
    %v469 = vpack.c.bf16 %v457, %v456
    %v470 = vpack.c.bf16 %v459, %v458
    %v471 = vpack.c.bf16 %v461, %v460
    %v472 = vpack.c.bf16 %v463, %v462
    %v473 = vpack.c.bf16 %v465, %v464
    %v474 = vld [vmem:[%s11] sm:$0xf]
    %v475 = vld [vmem:[%s11 + $0x4] sm:$0xf]
    %v476 = vld [vmem:[%s11 + $0x8] sm:$0xf]
    %v477 = vld [vmem:[%s11 + $0xc] sm:$0xf]
    %v478 = vld [vmem:[%s11 + $0x10] sm:$0xf]
    %v479 = vld [vmem:[%s11 + $0x14] sm:$0xf]
    %v480 = vld [vmem:[%s11 + $0x18] sm:$0xf]
    %v481 = vld [vmem:[%s11 + $0x1c] sm:$0xf]
    %v482 = vld [vmem:[%s11 + $0x20] sm:$0xf]
    %v483 = vld [vmem:[%s11 + $0x24] sm:$0xf]
    %v484 = vld [vmem:[%s11 + $0x28] sm:$0xf]
    %v485 = vld [vmem:[%s11 + $0x2c] sm:$0xf]
    %v486 = vld [vmem:[%s11 + $0x30] sm:$0xf]
    %v487 = vld [vmem:[%s11 + $0x34] sm:$0xf]
    %v488 = vld [vmem:[%s11 + $0x38] sm:$0xf]
    %v489 = vld [vmem:[%s11 + $0x3c] sm:$0xf]
    %v490 = vld [vmem:[#allocation2] sm:$0x1]
    %v492 = vlaneseq
    %v493 = vshrl.u32 %v492, 7
    %v494 = vsub.s32 0, %v493
    %v495 = vrot.slane %v490, %v494
    %v513 = vunpack.c.l.b16 %v474
    %v514 = vunpack.c.l.b16 %v475
    %v515 = vunpack.c.l.b16 %v476
    %v516 = vunpack.c.l.b16 %v477
    %v517 = vunpack.c.l.b16 %v478
    %v518 = vunpack.c.l.b16 %v479
    %v519 = vunpack.c.l.b16 %v480
    %v520 = vunpack.c.l.b16 %v481
    %v521 = vunpack.c.l.b16 %v482
    %v522 = vunpack.c.l.b16 %v483
    %v523 = vunpack.c.l.b16 %v484
    %v524 = vunpack.c.l.b16 %v485
    %v525 = vunpack.c.l.b16 %v486
    %v526 = vunpack.c.l.b16 %v487
    %v527 = vunpack.c.l.b16 %v488
    %v528 = vunpack.c.l.b16 %v489
    %v529 = vpack.c.b16 %v514, %v513
    %v530 = vpack.c.b16 %v516, %v515
    %v531 = vpack.c.b16 %v518, %v517
    %v532 = vpack.c.b16 %v520, %v519
    %v533 = vpack.c.b16 %v522, %v521
    %v534 = vpack.c.b16 %v524, %v523
    %v535 = vpack.c.b16 %v526, %v525
    %v536 = vpack.c.b16 %v528, %v527
    %545 = vmatprep.subr.bf16.mxu0 0
    %546 = vmatpush1.bf16.msra.mxu0 %v536
    %547 = vmatprep.subr.bf16.mxu0 0
    %548 = vmatpush1.bf16.msra.mxu0 %v535
    %549 = vmatprep.subr.bf16.mxu0 0
    %550 = vmatpush1.bf16.msra.mxu0 %v534
    %551 = vmatprep.subr.bf16.mxu0 0
    %552 = vmatpush1.bf16.msra.mxu0 %v533
    %553 = vmatprep.subr.bf16.mxu0 0
    %554 = vmatpush1.bf16.msra.mxu0 %v532
    %555 = vmatprep.subr.bf16.mxu0 0
    %556 = vmatpush1.bf16.msra.mxu0 %v531
    %557 = vmatprep.subr.bf16.mxu0 0
    %558 = vmatpush1.bf16.msra.mxu0 %v530
    %559 = vmatprep.subr.bf16.mxu0 0
    %560 = vmatpush1.bf16.msra.mxu0 %v529
    %561 = vmatprep.subr.bf16.mxu0 0
    %562 = vmatpush2.bf16.msra.mxu0 0
    %563 = vmatprep.subr.bf16.mxu0 0
    %564 = vmatpush2.bf16.msra.mxu0 0
    %565 = vmatprep.subr.bf16.mxu0 0
    %566 = vmatpush2.bf16.msra.mxu0 0
    %567 = vmatprep.subr.bf16.mxu0 0
    %568 = vmatpush2.bf16.msra.mxu0 0
    %569 = vmatprep.subr.bf16.mxu0 0
    %570 = vmatpush2.bf16.msra.mxu0 0
    %571 = vmatprep.subr.bf16.mxu0 0
    %572 = vmatpush2.bf16.msra.mxu0 0
    %573 = vmatprep.subr.bf16.mxu0 0
    %574 = vmatpush2.bf16.msra.mxu0 0
    %575 = vmatprep.subr.bf16.mxu0 0
    %576 = vmatpush2.bf16.msra.mxu0 0
    %577 = vmatprep.mubr.bf16.mxu0 0
    %578 = vmatmul.mubr.bf16.gmra.mxu0 %v466
    %v579 = vpop.f32.mrf.mxu0
    %v580 = vadd.f32 %v495, %v579
    %v581 = vpop.f32.mrf.mxu0
    %v582 = vpop.f32.mrf.mxu0
    %v583 = vadd.f32 %v495, %v582
    %v584 = vpop.f32.mrf.mxu0
    %585 = vmatprep.mubr.bf16.mxu0 0
    %586 = vmatmul.mubr.bf16.gmra.mxu0 %v467
    %v587 = vpop.f32.mrf.mxu0
    %v588 = vadd.f32 %v495, %v587
    %v589 = vpop.f32.mrf.mxu0
    %v590 = vpop.f32.mrf.mxu0
    %v591 = vadd.f32 %v495, %v590
    %v592 = vpop.f32.mrf.mxu0
    %593 = vmatprep.mubr.bf16.mxu0 0
    %594 = vmatmul.mubr.bf16.gmra.mxu0 %v468
    %v595 = vpop.f32.mrf.mxu0
    %v596 = vadd.f32 %v495, %v595
    %v597 = vpop.f32.mrf.mxu0
    %v598 = vpop.f32.mrf.mxu0
    %v599 = vadd.f32 %v495, %v598
    %v600 = vpop.f32.mrf.mxu0
    %601 = vmatprep.mubr.bf16.mxu0 0
    %602 = vmatmul.mubr.bf16.gmra.mxu0 %v469
    %v603 = vpop.f32.mrf.mxu0
    %v604 = vadd.f32 %v495, %v603
    %v605 = vpop.f32.mrf.mxu0
    %v606 = vpop.f32.mrf.mxu0
    %v607 = vadd.f32 %v495, %v606
    %v608 = vpop.f32.mrf.mxu0
    %609 = vmatprep.mubr.bf16.mxu0 0
    %610 = vmatmul.mubr.bf16.gmra.mxu0 %v470
    %v611 = vpop.f32.mrf.mxu0
    %v612 = vadd.f32 %v495, %v611
    %v613 = vpop.f32.mrf.mxu0
    %v614 = vpop.f32.mrf.mxu0
    %v615 = vadd.f32 %v495, %v614
    %v616 = vpop.f32.mrf.mxu0
    %617 = vmatprep.mubr.bf16.mxu0 0
    %618 = vmatmul.mubr.bf16.gmra.mxu0 %v471
    %v619 = vpop.f32.mrf.mxu0
    %v620 = vadd.f32 %v495, %v619
    %v621 = vpop.f32.mrf.mxu0
    %v622 = vpop.f32.mrf.mxu0
    %v623 = vadd.f32 %v495, %v622
    %v624 = vpop.f32.mrf.mxu0
    %625 = vmatprep.mubr.bf16.mxu0 0
    %626 = vmatmul.mubr.bf16.gmra.mxu0 %v472
    %v627 = vpop.f32.mrf.mxu0
    %v628 = vadd.f32 %v495, %v627
    %v629 = vpop.f32.mrf.mxu0
    %v630 = vpop.f32.mrf.mxu0
    %v631 = vadd.f32 %v495, %v630
    %v632 = vpop.f32.mrf.mxu0
    %633 = vmatprep.mubr.bf16.mxu0 0
    %634 = vmatmul.mubr.bf16.gmra.mxu0 %v473
    %v635 = vpop.f32.mrf.mxu0
    %v636 = vadd.f32 %v495, %v635
    %v637 = vpop.f32.mrf.mxu0
    %v638 = vpop.f32.mrf.mxu0
    %v639 = vadd.f32 %v495, %v638
    %v640 = vpop.f32.mrf.mxu0
    %641 = vdwg.mxu0
    %v642 = vld [vmem:[%s5] sm:$0xff]
    %v643 = vld [vmem:[%s5 + $0x8] sm:$0xff]
    %v644 = vld [vmem:[%s5 + $0x10] sm:$0xff]
    %v645 = vld [vmem:[%s5 + $0x18] sm:$0xff]
    %v646 = vld [vmem:[%s5 + $0x20] sm:$0xff]
    %v647 = vld [vmem:[%s5 + $0x28] sm:$0xff]
    %v648 = vld [vmem:[%s5 + $0x30] sm:$0xff]
    %v649 = vld [vmem:[%s5 + $0x38] sm:$0xff]
    %v650 = vld [vmem:[%s5 + $0x40] sm:$0xff]
    %v651 = vld [vmem:[%s5 + $0x48] sm:$0xff]
    %v652 = vld [vmem:[%s5 + $0x50] sm:$0xff]
    %v653 = vld [vmem:[%s5 + $0x58] sm:$0xff]
    %v654 = vld [vmem:[%s5 + $0x60] sm:$0xff]
    %v655 = vld [vmem:[%s5 + $0x68] sm:$0xff]
    %v656 = vld [vmem:[%s5 + $0x70] sm:$0xff]
    %v657 = vld [vmem:[%s5 + $0x78] sm:$0xff]
    %v658 = vpack.c.bf16 %v643, %v642
    %v659 = vpack.c.bf16 %v645, %v644
    %v660 = vpack.c.bf16 %v647, %v646
    %v661 = vpack.c.bf16 %v649, %v648
    %v662 = vpack.c.bf16 %v651, %v650
    %v663 = vpack.c.bf16 %v653, %v652
    %v664 = vpack.c.bf16 %v655, %v654
    %v665 = vpack.c.bf16 %v657, %v656
    %v666 = vld [vmem:[#allocation5] sm:$0xf]
    %v667 = vld [vmem:[#allocation5 + $0x4] sm:$0xf]
    %v668 = vld [vmem:[#allocation5 + $0x8] sm:$0xf]
    %v669 = vld [vmem:[#allocation5 + $0xc] sm:$0xf]
    %v670 = vld [vmem:[#allocation5 + $0x10] sm:$0xf]
    %v671 = vld [vmem:[#allocation5 + $0x14] sm:$0xf]
    %v672 = vld [vmem:[#allocation5 + $0x18] sm:$0xf]
    %v673 = vld [vmem:[#allocation5 + $0x1c] sm:$0xf]
    %v674 = vld [vmem:[#allocation5 + $0x20] sm:$0xf]
    %v675 = vld [vmem:[#allocation5 + $0x24] sm:$0xf]
    %v676 = vld [vmem:[#allocation5 + $0x28] sm:$0xf]
    %v677 = vld [vmem:[#allocation5 + $0x2c] sm:$0xf]
    %v678 = vld [vmem:[#allocation5 + $0x30] sm:$0xf]
    %v679 = vld [vmem:[#allocation5 + $0x34] sm:$0xf]
    %v680 = vld [vmem:[#allocation5 + $0x38] sm:$0xf]
    %v681 = vld [vmem:[#allocation5 + $0x3c] sm:$0xf]
    %v682 = vld [vmem:[#allocation7] sm:$0x1]
    %v684 = vlaneseq
    %v685 = vshrl.u32 %v684, 7
    %v686 = vsub.s32 0, %v685
    %v687 = vrot.slane %v682, %v686
    %v705 = vunpack.c.l.b16 %v666
    %v706 = vunpack.c.l.b16 %v667
    %v707 = vunpack.c.l.b16 %v668
    %v708 = vunpack.c.l.b16 %v669
    %v709 = vunpack.c.l.b16 %v670
    %v710 = vunpack.c.l.b16 %v671
    %v711 = vunpack.c.l.b16 %v672
    %v712 = vunpack.c.l.b16 %v673
    %v713 = vunpack.c.l.b16 %v674
    %v714 = vunpack.c.l.b16 %v675
    %v715 = vunpack.c.l.b16 %v676
    %v716 = vunpack.c.l.b16 %v677
    %v717 = vunpack.c.l.b16 %v678
    %v718 = vunpack.c.l.b16 %v679
    %v719 = vunpack.c.l.b16 %v680
    %v720 = vunpack.c.l.b16 %v681
    %v721 = vpack.c.b16 %v706, %v705
    %v722 = vpack.c.b16 %v708, %v707
    %v723 = vpack.c.b16 %v710, %v709
    %v724 = vpack.c.b16 %v712, %v711
    %v725 = vpack.c.b16 %v714, %v713
    %v726 = vpack.c.b16 %v716, %v715
    %v727 = vpack.c.b16 %v718, %v717
    %v728 = vpack.c.b16 %v720, %v719
    %737 = vmatprep.subr.bf16.mxu0 0
    %738 = vmatpush1.bf16.msra.mxu0 %v728
    %739 = vmatprep.subr.bf16.mxu0 0
    %740 = vmatpush1.bf16.msra.mxu0 %v727
    %741 = vmatprep.subr.bf16.mxu0 0
    %742 = vmatpush1.bf16.msra.mxu0 %v726
    %743 = vmatprep.subr.bf16.mxu0 0
    %744 = vmatpush1.bf16.msra.mxu0 %v725
    %745 = vmatprep.subr.bf16.mxu0 0
    %746 = vmatpush1.bf16.msra.mxu0 %v724
    %747 = vmatprep.subr.bf16.mxu0 0
    %748 = vmatpush1.bf16.msra.mxu0 %v723
    %749 = vmatprep.subr.bf16.mxu0 0
    %750 = vmatpush1.bf16.msra.mxu0 %v722
    %751 = vmatprep.subr.bf16.mxu0 0
    %752 = vmatpush1.bf16.msra.mxu0 %v721
    %753 = vmatprep.subr.bf16.mxu0 0
    %754 = vmatpush2.bf16.msra.mxu0 0
    %755 = vmatprep.subr.bf16.mxu0 0
    %756 = vmatpush2.bf16.msra.mxu0 0
    %757 = vmatprep.subr.bf16.mxu0 0
    %758 = vmatpush2.bf16.msra.mxu0 0
    %759 = vmatprep.subr.bf16.mxu0 0
    %760 = vmatpush2.bf16.msra.mxu0 0
    %761 = vmatprep.subr.bf16.mxu0 0
    %762 = vmatpush2.bf16.msra.mxu0 0
    %763 = vmatprep.subr.bf16.mxu0 0
    %764 = vmatpush2.bf16.msra.mxu0 0
    %765 = vmatprep.subr.bf16.mxu0 0
    %766 = vmatpush2.bf16.msra.mxu0 0
    %767 = vmatprep.subr.bf16.mxu0 0
    %768 = vmatpush2.bf16.msra.mxu0 0
    %769 = vmatprep.mubr.bf16.mxu0 0
    %770 = vmatmul.mubr.bf16.gmra.mxu0 %v658
    %v771 = vpop.f32.mrf.mxu0
    %v772 = vadd.f32 %v687, %v771
    %v773 = vpop.f32.mrf.mxu0
    %v774 = vpop.f32.mrf.mxu0
    %v775 = vadd.f32 %v687, %v774
    %v776 = vpop.f32.mrf.mxu0
    %777 = vmatprep.mubr.bf16.mxu0 0
    %778 = vmatmul.mubr.bf16.gmra.mxu0 %v659
    %v779 = vpop.f32.mrf.mxu0
    %v780 = vadd.f32 %v687, %v779
    %v781 = vpop.f32.mrf.mxu0
    %v782 = vpop.f32.mrf.mxu0
    %v783 = vadd.f32 %v687, %v782
    %v784 = vpop.f32.mrf.mxu0
    %785 = vmatprep.mubr.bf16.mxu0 0
    %786 = vmatmul.mubr.bf16.gmra.mxu0 %v660
    %v787 = vpop.f32.mrf.mxu0
    %v788 = vadd.f32 %v687, %v787
    %v789 = vpop.f32.mrf.mxu0
    %v790 = vpop.f32.mrf.mxu0
    %v791 = vadd.f32 %v687, %v790
    %v792 = vpop.f32.mrf.mxu0
    %793 = vmatprep.mubr.bf16.mxu0 0
    %794 = vmatmul.mubr.bf16.gmra.mxu0 %v661
    %v795 = vpop.f32.mrf.mxu0
    %v796 = vadd.f32 %v687, %v795
    %v797 = vpop.f32.mrf.mxu0
    %v798 = vpop.f32.mrf.mxu0
    %v799 = vadd.f32 %v687, %v798
    %v800 = vpop.f32.mrf.mxu0
    %801 = vmatprep.mubr.bf16.mxu0 0
    %802 = vmatmul.mubr.bf16.gmra.mxu0 %v662
    %v803 = vpop.f32.mrf.mxu0
    %v804 = vadd.f32 %v687, %v803
    %v805 = vpop.f32.mrf.mxu0
    %v806 = vpop.f32.mrf.mxu0
    %v807 = vadd.f32 %v687, %v806
    %v808 = vpop.f32.mrf.mxu0
    %809 = vmatprep.mubr.bf16.mxu0 0
    %810 = vmatmul.mubr.bf16.gmra.mxu0 %v663
    %v811 = vpop.f32.mrf.mxu0
    %v812 = vadd.f32 %v687, %v811
    %v813 = vpop.f32.mrf.mxu0
    %v814 = vpop.f32.mrf.mxu0
    %v815 = vadd.f32 %v687, %v814
    %v816 = vpop.f32.mrf.mxu0
    %817 = vmatprep.mubr.bf16.mxu0 0
    %818 = vmatmul.mubr.bf16.gmra.mxu0 %v664
    %v819 = vpop.f32.mrf.mxu0
    %v820 = vadd.f32 %v687, %v819
    %v821 = vpop.f32.mrf.mxu0
    %v822 = vpop.f32.mrf.mxu0
    %v823 = vadd.f32 %v687, %v822
    %v824 = vpop.f32.mrf.mxu0
    %825 = vmatprep.mubr.bf16.mxu0 0
    %826 = vmatmul.mubr.bf16.gmra.mxu0 %v665
    %v827 = vpop.f32.mrf.mxu0
    %v828 = vadd.f32 %v687, %v827
    %v829 = vpop.f32.mrf.mxu0
    %v830 = vpop.f32.mrf.mxu0
    %v831 = vadd.f32 %v687, %v830
    %v832 = vpop.f32.mrf.mxu0
    %833 = vdwg.mxu0
    %v834 = vpack.c.bf16 %v583, %v580
    %v835 = vpack.c.bf16 %v591, %v588
    %v836 = vpack.c.bf16 %v599, %v596
    %v837 = vpack.c.bf16 %v607, %v604
    %v838 = vpack.c.bf16 %v615, %v612
    %v839 = vpack.c.bf16 %v623, %v620
    %v840 = vpack.c.bf16 %v631, %v628
    %v841 = vpack.c.bf16 %v639, %v636
    %v842 = vpack.c.bf16 %v775, %v772
    %v843 = vpack.c.bf16 %v783, %v780
    %v844 = vpack.c.bf16 %v791, %v788
    %v845 = vpack.c.bf16 %v799, %v796
    %v846 = vpack.c.bf16 %v807, %v804
    %v847 = vpack.c.bf16 %v815, %v812
    %v848 = vpack.c.bf16 %v823, %v820
    %v849 = vpack.c.bf16 %v831, %v828
    %v850 = vld [vmem:[%s1] sm:$0xff]
    %v851 = vld [vmem:[%s1 + $0x8] sm:$0xff]
    %v852 = vrot.slane %v850, 4
    %v853 = vadd.f32 %v850, %v852
    %v854 = vrot.slane %v853, 2
    %v855 = vadd.f32 %v853, %v854
    %v856 = vrot.slane %v855, 1
    %v857 = vadd.f32 %v855, %v856
    %v858 = vrot.slane %v851, 4
    %v859 = vadd.f32 %v851, %v858
    %v860 = vrot.slane %v859, 2
    %v861 = vadd.f32 %v859, %v860
    %v862 = vrot.slane %v861, 1
    %v863 = vadd.f32 %v861, %v862
    %v864 = vmul.f32 %v857, 0.125
    %v865 = vmul.f32 %v863, 0.125
    %v866 = vpack.c.bf16 %v864, %v864
    %v867 = vpack.c.bf16 %v865, %v865
    %v868 = vld [vmem:[#allocation8] sm:$0xff]
    %v869 = vld [vmem:[#allocation8 + $0x8] sm:$0xff]
    %v870 = vld [vmem:[#allocation8 + $0x10] sm:$0xff]
    %v871 = vld [vmem:[#allocation8 + $0x18] sm:$0xff]
    %v872 = vld [vmem:[#allocation8 + $0x20] sm:$0xff]
    %v873 = vld [vmem:[#allocation8 + $0x28] sm:$0xff]
    %v874 = vld [vmem:[#allocation8 + $0x30] sm:$0xff]
    %v875 = vld [vmem:[#allocation8 + $0x38] sm:$0xff]
    %v876 = vld [vmem:[#allocation8 + $0x40] sm:$0xff]
    %v877 = vld [vmem:[#allocation8 + $0x48] sm:$0xff]
    %v878 = vld [vmem:[#allocation8 + $0x50] sm:$0xff]
    %v879 = vld [vmem:[#allocation8 + $0x58] sm:$0xff]
    %v880 = vld [vmem:[#allocation8 + $0x60] sm:$0xff]
    %v881 = vld [vmem:[#allocation8 + $0x68] sm:$0xff]
    %v882 = vld [vmem:[#allocation8 + $0x70] sm:$0xff]
    %v883 = vld [vmem:[#allocation8 + $0x78] sm:$0xff]
    %v884 = vld [vmem:[#allocation10] sm:$0x3]
    %v886 = vlaneseq
    %v887 = vshrl.u32 %v886, 7
    %v888 = vsub.s32 0, %v887
    %v889 = vrot.slane %v884, %v888
    %v890 = vlaneseq
    %v891 = vshrl.u32 %v890, 7
    %v892 = vsub.s32 1, %v891
    %v893 = vrot.slane %v884, %v892
    %v898 = vunpack.c.l.b16 %v866
    %v899 = vunpack.c.l.b16 %v867
    %vm900 = vcmask 1041409
    %v901 = vsel %vm900, %v899, %v898
    %v902 = vpack.c.b16 %v901, %v901
    %v920 = vunpack.c.l.b16 %v868
    %v921 = vunpack.c.h.b16 %v868
    %v922 = vunpack.c.l.b16 %v869
    %v923 = vunpack.c.h.b16 %v869
    %v924 = vunpack.c.l.b16 %v870
    %v925 = vunpack.c.h.b16 %v870
    %v926 = vunpack.c.l.b16 %v871
    %v927 = vunpack.c.h.b16 %v871
    %v928 = vunpack.c.l.b16 %v872
    %v929 = vunpack.c.h.b16 %v872
    %v930 = vunpack.c.l.b16 %v873
    %v931 = vunpack.c.h.b16 %v873
    %v932 = vunpack.c.l.b16 %v874
    %v933 = vunpack.c.h.b16 %v874
    %v934 = vunpack.c.l.b16 %v875
    %v935 = vunpack.c.h.b16 %v875
    %v936 = vunpack.c.l.b16 %v876
    %v937 = vunpack.c.h.b16 %v876
    %v938 = vunpack.c.l.b16 %v877
    %v939 = vunpack.c.h.b16 %v877
    %v940 = vunpack.c.l.b16 %v878
    %v941 = vunpack.c.h.b16 %v878
    %v942 = vunpack.c.l.b16 %v879
    %v943 = vunpack.c.h.b16 %v879
    %v944 = vunpack.c.l.b16 %v880
    %v945 = vunpack.c.h.b16 %v880
    %v946 = vunpack.c.l.b16 %v881
    %v947 = vunpack.c.h.b16 %v881
    %v948 = vunpack.c.l.b16 %v882
    %v949 = vunpack.c.h.b16 %v882
    %v950 = vunpack.c.l.b16 %v883
    %v951 = vunpack.c.h.b16 %v883
    %v952 = vpack.c.b16 %v922, %v920
    %v953 = vpack.c.b16 %v923, %v921
    %v954 = vpack.c.b16 %v926, %v924
    %v955 = vpack.c.b16 %v927, %v925
    %v956 = vpack.c.b16 %v930, %v928
    %v957 = vpack.c.b16 %v931, %v929
    %v958 = vpack.c.b16 %v934, %v932
    %v959 = vpack.c.b16 %v935, %v933
    %v960 = vpack.c.b16 %v938, %v936
    %v961 = vpack.c.b16 %v939, %v937
    %v962 = vpack.c.b16 %v942, %v940
    %v963 = vpack.c.b16 %v943, %v941
    %v964 = vpack.c.b16 %v946, %v944
    %v965 = vpack.c.b16 %v947, %v945
    %v966 = vpack.c.b16 %v950, %v948
    %v967 = vpack.c.b16 %v951, %v949
    %984 = vmatprep.subr.bf16.mxu0 %v967
    %985 = vmatpush1.bf16.msra.mxu0 %v966
    %986 = vmatprep.subr.bf16.mxu0 %v965
    %987 = vmatpush1.bf16.msra.mxu0 %v964
    %988 = vmatprep.subr.bf16.mxu0 %v963
    %989 = vmatpush1.bf16.msra.mxu0 %v962
    %990 = vmatprep.subr.bf16.mxu0 %v961
    %991 = vmatpush1.bf16.msra.mxu0 %v960
    %992 = vmatprep.subr.bf16.mxu0 %v959
    %993 = vmatpush1.bf16.msra.mxu0 %v958
    %994 = vmatprep.subr.bf16.mxu0 %v957
    %995 = vmatpush1.bf16.msra.mxu0 %v956
    %996 = vmatprep.subr.bf16.mxu0 %v955
    %997 = vmatpush1.bf16.msra.mxu0 %v954
    %998 = vmatprep.subr.bf16.mxu0 %v953
    %999 = vmatpush1.bf16.msra.mxu0 %v952
    %1000 = vmatprep.subr.bf16.mxu0 0
    %1001 = vmatpush2.bf16.msra.mxu0 0
    %1002 = vmatprep.subr.bf16.mxu0 0
    %1003 = vmatpush2.bf16.msra.mxu0 0
    %1004 = vmatprep.subr.bf16.mxu0 0
    %1005 = vmatpush2.bf16.msra.mxu0 0
    %1006 = vmatprep.subr.bf16.mxu0 0
    %1007 = vmatpush2.bf16.msra.mxu0 0
    %1008 = vmatprep.subr.bf16.mxu0 0
    %1009 = vmatpush2.bf16.msra.mxu0 0
    %1010 = vmatprep.subr.bf16.mxu0 0
    %1011 = vmatpush2.bf16.msra.mxu0 0
    %1012 = vmatprep.subr.bf16.mxu0 0
    %1013 = vmatpush2.bf16.msra.mxu0 0
    %1014 = vmatprep.subr.bf16.mxu0 0
    %1015 = vmatpush2.bf16.msra.mxu0 0
    %1016 = vmatprep.mubr.bf16.mxu0 0
    %1017 = vmatmul.mubr.bf16.gmra.mxu0 %v902
    %v1018 = vpop.f32.mrf.mxu0
    %v1019 = vadd.f32 %v889, %v1018
    %v1020 = vpop.f32.mrf.mxu0
    %v1021 = vadd.f32 %v893, %v1020
    %v1022 = vpop.f32.mrf.mxu0
    %v1023 = vpop.f32.mrf.mxu0
    %1024 = vdwg.mxu0
    %vm1025 = vcmask 1041408
    %v1026 = vsel %vm1025, %v1019, 0.0
    %1027 = vadd.xlane.f32.xlu0 %v1026
    %v1028 = vpop.xlane.xlu0 %1027
    %v1029 = vrcp.pop 128.0
    %v1030 = vmul.f32 %v1028, %v1029
    %v1031 = vsub.f32 %v1019, %v1030
    %v1032 = vmul.f32 %v1031, %v1031
    %v1033 = vsel %vm1025, %v1032, 0.0
    %1034 = vadd.xlane.f32.xlu0 %v1033
    %v1035 = vpop.xlane.xlu0 %1034
    %v1036 = vmul.f32 %v1035, %v1029
    %v1037 = vadd.f32 %v1036, 1e-05
    %v1038 = vrsqrt.pop %v1037
    %v1039 = vmul.f32 %v1031, %v1038
    %v1040 = vld [vmem:[#allocation11] sm:$0x1]
    %v1042 = vlaneseq
    %v1043 = vshrl.u32 %v1042, 7
    %v1044 = vsub.s32 0, %v1043
    %v1045 = vrot.slane %v1040, %v1044
    %v1047 = vmul.f32 %v1039, %v1045
    %v1048 = vld [vmem:[#allocation13] sm:$0x1]
    %v1050 = vlaneseq
    %v1051 = vshrl.u32 %v1050, 7
    %v1052 = vsub.s32 0, %v1051
    %v1053 = vrot.slane %v1048, %v1052
    %v1055 = vadd.f32 %v1047, %v1053
    %v1056 = vmax.f32 %v1055, 0.0
    %v1057 = vsel %vm1025, %v1021, 0.0
    %1058 = vadd.xlane.f32.xlu0 %v1057
    %v1059 = vpop.xlane.xlu0 %1058
    %v1060 = vmul.f32 %v1059, %v1029
    %v1061 = vsub.f32 %v1021, %v1060
    %v1062 = vmul.f32 %v1061, %v1061
    %v1063 = vsel %vm1025, %v1062, 0.0
    %1064 = vadd.xlane.f32.xlu0 %v1063
    %v1065 = vpop.xlane.xlu0 %1064
    %v1066 = vmul.f32 %v1065, %v1029
    %v1067 = vadd.f32 %v1066, 1e-05
    %v1068 = vrsqrt.pop %v1067
    %v1069 = vmul.f32 %v1061, %v1068
    %v1070 = vld [vmem:[%s31] sm:$0x1]
    %v1072 = vlaneseq
    %v1073 = vshrl.u32 %v1072, 7
    %v1074 = vsub.s32 0, %v1073
    %v1075 = vrot.slane %v1070, %v1074
    %v1077 = vmul.f32 %v1069, %v1075
    %v1078 = vld [vmem:[%s33] sm:$0x1]
    %v1080 = vlaneseq
    %v1081 = vshrl.u32 %v1080, 7
    %v1082 = vsub.s32 0, %v1081
    %v1083 = vrot.slane %v1078, %v1082
    %v1085 = vadd.f32 %v1077, %v1083
    %v1086 = vmax.f32 %v1085, 0.0
    %v1087 = vpack.c.bf16 %v1056, %v1056
    %v1088 = vld [vmem:[#allocation14] sm:$0xf]
    %v1089 = vld [vmem:[#allocation14 + $0x4] sm:$0xf]
    %v1090 = vld [vmem:[#allocation14 + $0x8] sm:$0xf]
    %v1091 = vld [vmem:[#allocation14 + $0xc] sm:$0xf]
    %v1092 = vld [vmem:[#allocation14 + $0x10] sm:$0xf]
    %v1093 = vld [vmem:[#allocation14 + $0x14] sm:$0xf]
    %v1094 = vld [vmem:[#allocation14 + $0x18] sm:$0xf]
    %v1095 = vld [vmem:[#allocation14 + $0x1c] sm:$0xf]
    %v1096 = vld [vmem:[#allocation14 + $0x20] sm:$0xf]
    %v1097 = vld [vmem:[#allocation14 + $0x24] sm:$0xf]
    %v1098 = vld [vmem:[#allocation14 + $0x28] sm:$0xf]
    %v1099 = vld [vmem:[#allocation14 + $0x2c] sm:$0xf]
    %v1100 = vld [vmem:[#allocation14 + $0x30] sm:$0xf]
    %v1101 = vld [vmem:[#allocation14 + $0x34] sm:$0xf]
    %v1102 = vld [vmem:[#allocation14 + $0x38] sm:$0xf]
    %v1103 = vld [vmem:[#allocation14 + $0x3c] sm:$0xf]
    %v1104 = vld [vmem:[#allocation16] sm:$0x1]
    %v1106 = vlaneseq
    %v1107 = vshrl.u32 %v1106, 7
    %v1108 = vsub.s32 0, %v1107
    %v1109 = vrot.slane %v1104, %v1108
    %v1127 = vunpack.c.l.b16 %v1088
    %v1128 = vunpack.c.l.b16 %v1089
    %v1129 = vunpack.c.l.b16 %v1090
    %v1130 = vunpack.c.l.b16 %v1091
    %v1131 = vunpack.c.l.b16 %v1092
    %v1132 = vunpack.c.l.b16 %v1093
    %v1133 = vunpack.c.l.b16 %v1094
    %v1134 = vunpack.c.l.b16 %v1095
    %v1135 = vunpack.c.l.b16 %v1096
    %v1136 = vunpack.c.l.b16 %v1097
    %v1137 = vunpack.c.l.b16 %v1098
    %v1138 = vunpack.c.l.b16 %v1099
    %v1139 = vunpack.c.l.b16 %v1100
    %v1140 = vunpack.c.l.b16 %v1101
    %v1141 = vunpack.c.l.b16 %v1102
    %v1142 = vunpack.c.l.b16 %v1103
    %v1143 = vpack.c.b16 %v1128, %v1127
    %v1144 = vpack.c.b16 %v1130, %v1129
    %v1145 = vpack.c.b16 %v1132, %v1131
    %v1146 = vpack.c.b16 %v1134, %v1133
    %v1147 = vpack.c.b16 %v1136, %v1135
    %v1148 = vpack.c.b16 %v1138, %v1137
    %v1149 = vpack.c.b16 %v1140, %v1139
    %v1150 = vpack.c.b16 %v1142, %v1141
    %1159 = vmatprep.subr.bf16.mxu0 0
    %1160 = vmatpush1.bf16.msra.mxu0 %v1150
    %1161 = vmatprep.subr.bf16.mxu0 0
    %1162 = vmatpush1.bf16.msra.mxu0 %v1149
    %1163 = vmatprep.subr.bf16.mxu0 0
    %1164 = vmatpush1.bf16.msra.mxu0 %v1148
    %1165 = vmatprep.subr.bf16.mxu0 0
    %1166 = vmatpush1.bf16.msra.mxu0 %v1147
    %1167 = vmatprep.subr.bf16.mxu0 0
    %1168 = vmatpush1.bf16.msra.mxu0 %v1146
    %1169 = vmatprep.subr.bf16.mxu0 0
    %1170 = vmatpush1.bf16.msra.mxu0 %v1145
    %1171 = vmatprep.subr.bf16.mxu0 0
    %1172 = vmatpush1.bf16.msra.mxu0 %v1144
    %1173 = vmatprep.subr.bf16.mxu0 0
    %1174 = vmatpush1.bf16.msra.mxu0 %v1143
    %1175 = vmatprep.subr.bf16.mxu0 0
    %1176 = vmatpush2.bf16.msra.mxu0 0
    %1177 = vmatprep.subr.bf16.mxu0 0
    %1178 = vmatpush2.bf16.msra.mxu0 0
    %1179 = vmatprep.subr.bf16.mxu0 0
    %1180 = vmatpush2.bf16.msra.mxu0 0
    %1181 = vmatprep.subr.bf16.mxu0 0
    %1182 = vmatpush2.bf16.msra.mxu0 0
    %1183 = vmatprep.subr.bf16.mxu0 0
    %1184 = vmatpush2.bf16.msra.mxu0 0
    %1185 = vmatprep.subr.bf16.mxu0 0
    %1186 = vmatpush2.bf16.msra.mxu0 0
    %1187 = vmatprep.subr.bf16.mxu0 0
    %1188 = vmatpush2.bf16.msra.mxu0 0
    %1189 = vmatprep.subr.bf16.mxu0 0
    %1190 = vmatpush2.bf16.msra.mxu0 0
    %1191 = vmatprep.mubr.bf16.mxu0 0
    %1192 = vmatmul.mubr.bf16.gmra.mxu0 %v1087
    %v1193 = vpop.f32.mrf.mxu0
    %v1194 = vadd.f32 %v1109, %v1193
    %v1195 = vpop.f32.mrf.mxu0
    %v1196 = vpop.f32.mrf.mxu0
    %v1197 = vpop.f32.mrf.mxu0
    %1198 = vdwg.mxu0
    %v1199 = vmax.f32 %v1194, 0.0
    %v1200 = vpack.c.bf16 %v1086, %v1086
    %v1201 = vld [vmem:[#allocation17] sm:$0xf]
    %v1202 = vld [vmem:[#allocation17 + $0x4] sm:$0xf]
    %v1203 = vld [vmem:[#allocation17 + $0x8] sm:$0xf]
    %v1204 = vld [vmem:[#allocation17 + $0xc] sm:$0xf]
    %v1205 = vld [vmem:[#allocation17 + $0x10] sm:$0xf]
    %v1206 = vld [vmem:[#allocation17 + $0x14] sm:$0xf]
    %v1207 = vld [vmem:[#allocation17 + $0x18] sm:$0xf]
    %v1208 = vld [vmem:[#allocation17 + $0x1c] sm:$0xf]
    %v1209 = vld [vmem:[#allocation17 + $0x20] sm:$0xf]
    %v1210 = vld [vmem:[#allocation17 + $0x24] sm:$0xf]
    %v1211 = vld [vmem:[#allocation17 + $0x28] sm:$0xf]
    %v1212 = vld [vmem:[#allocation17 + $0x2c] sm:$0xf]
    %v1213 = vld [vmem:[#allocation17 + $0x30] sm:$0xf]
    %v1214 = vld [vmem:[#allocation17 + $0x34] sm:$0xf]
    %v1215 = vld [vmem:[#allocation17 + $0x38] sm:$0xf]
    %v1216 = vld [vmem:[#allocation17 + $0x3c] sm:$0xf]
    %v1217 = vld [vmem:[%s37] sm:$0x1]
    %v1219 = vlaneseq
    %v1220 = vshrl.u32 %v1219, 7
    %v1221 = vsub.s32 0, %v1220
    %v1222 = vrot.slane %v1217, %v1221
    %v1240 = vunpack.c.l.b16 %v1201
    %v1241 = vunpack.c.l.b16 %v1202
    %v1242 = vunpack.c.l.b16 %v1203
    %v1243 = vunpack.c.l.b16 %v1204
    %v1244 = vunpack.c.l.b16 %v1205
    %v1245 = vunpack.c.l.b16 %v1206
    %v1246 = vunpack.c.l.b16 %v1207
    %v1247 = vunpack.c.l.b16 %v1208
    %v1248 = vunpack.c.l.b16 %v1209
    %v1249 = vunpack.c.l.b16 %v1210
    %v1250 = vunpack.c.l.b16 %v1211
    %v1251 = vunpack.c.l.b16 %v1212
    %v1252 = vunpack.c.l.b16 %v1213
    %v1253 = vunpack.c.l.b16 %v1214
    %v1254 = vunpack.c.l.b16 %v1215
    %v1255 = vunpack.c.l.b16 %v1216
    %v1256 = vpack.c.b16 %v1241, %v1240
    %v1257 = vpack.c.b16 %v1243, %v1242
    %v1258 = vpack.c.b16 %v1245, %v1244
    %v1259 = vpack.c.b16 %v1247, %v1246
    %v1260 = vpack.c.b16 %v1249, %v1248
    %v1261 = vpack.c.b16 %v1251, %v1250
    %v1262 = vpack.c.b16 %v1253, %v1252
    %v1263 = vpack.c.b16 %v1255, %v1254
    %1272 = vmatprep.subr.bf16.mxu0 0
    %1273 = vmatpush1.bf16.msra.mxu0 %v1263
    %1274 = vmatprep.subr.bf16.mxu0 0
    %1275 = vmatpush1.bf16.msra.mxu0 %v1262
    %1276 = vmatprep.subr.bf16.mxu0 0
    %1277 = vmatpush1.bf16.msra.mxu0 %v1261
    %1278 = vmatprep.subr.bf16.mxu0 0
    %1279 = vmatpush1.bf16.msra.mxu0 %v1260
    %1280 = vmatprep.subr.bf16.mxu0 0
    %1281 = vmatpush1.bf16.msra.mxu0 %v1259
    %1282 = vmatprep.subr.bf16.mxu0 0
    %1283 = vmatpush1.bf16.msra.mxu0 %v1258
    %1284 = vmatprep.subr.bf16.mxu0 0
    %1285 = vmatpush1.bf16.msra.mxu0 %v1257
    %1286 = vmatprep.subr.bf16.mxu0 0
    %1287 = vmatpush1.bf16.msra.mxu0 %v1256
    %1288 = vmatprep.subr.bf16.mxu0 0
    %1289 = vmatpush2.bf16.msra.mxu0 0
    %1290 = vmatprep.subr.bf16.mxu0 0
    %1291 = vmatpush2.bf16.msra.mxu0 0
    %1292 = vmatprep.subr.bf16.mxu0 0
    %1293 = vmatpush2.bf16.msra.mxu0 0
    %1294 = vmatprep.subr.bf16.mxu0 0
    %1295 = vmatpush2.bf16.msra.mxu0 0
    %1296 = vmatprep.subr.bf16.mxu0 0
    %1297 = vmatpush2.bf16.msra.mxu0 0
    %1298 = vmatprep.subr.bf16.mxu0 0
    %1299 = vmatpush2.bf16.msra.mxu0 0
    %1300 = vmatprep.subr.bf16.mxu0 0
    %1301 = vmatpush2.bf16.msra.mxu0 0
    %1302 = vmatprep.subr.bf16.mxu0 0
    %1303 = vmatpush2.bf16.msra.mxu0 0
    %1304 = vmatprep.mubr.bf16.mxu0 0
    %1305 = vmatmul.mubr.bf16.gmra.mxu0 %v1200
    %v1306 = vpop.f32.mrf.mxu0
    %v1307 = vadd.f32 %v1222, %v1306
    %v1308 = vpop.f32.mrf.mxu0
    %v1309 = vpop.f32.mrf.mxu0
    %v1310 = vpop.f32.mrf.mxu0
    %1311 = vdwg.mxu0
    %v1312 = vmax.f32 %v1307, 0.0
    %v1313 = vpack.c.bf16 %v851, %v850
    %v1314 = vld [vmem:[%s39] sm:$0xff]
    %v1315 = vld [vmem:[%s39 + $0x8] sm:$0xff]
    %v1316 = vld [vmem:[%s39 + $0x10] sm:$0xff]
    %v1317 = vld [vmem:[%s39 + $0x18] sm:$0xff]
    %v1318 = vld [vmem:[%s39 + $0x20] sm:$0xff]
    %v1319 = vld [vmem:[%s39 + $0x28] sm:$0xff]
    %v1320 = vld [vmem:[%s39 + $0x30] sm:$0xff]
    %v1321 = vld [vmem:[%s39 + $0x38] sm:$0xff]
    %v1322 = vld [vmem:[%s39 + $0x40] sm:$0xff]
    %v1323 = vld [vmem:[%s39 + $0x48] sm:$0xff]
    %v1324 = vld [vmem:[%s39 + $0x50] sm:$0xff]
    %v1325 = vld [vmem:[%s39 + $0x58] sm:$0xff]
    %v1326 = vld [vmem:[%s39 + $0x60] sm:$0xff]
    %v1327 = vld [vmem:[%s39 + $0x68] sm:$0xff]
    %v1328 = vld [vmem:[%s39 + $0x70] sm:$0xff]
    %v1329 = vld [vmem:[%s39 + $0x78] sm:$0xff]
    %v1330 = vld [vmem:[%s39 + $0x80] sm:$0xff]
    %v1331 = vld [vmem:[%s39 + $0x88] sm:$0xff]
    %v1332 = vld [vmem:[%s39 + $0x90] sm:$0xff]
    %v1333 = vld [vmem:[%s39 + $0x98] sm:$0xff]
    %v1334 = vld [vmem:[%s39 + $0xa0] sm:$0xff]
    %v1335 = vld [vmem:[%s39 + $0xa8] sm:$0xff]
    %v1336 = vld [vmem:[%s39 + $0xb0] sm:$0xff]
    %v1337 = vld [vmem:[%s39 + $0xb8] sm:$0xff]
    %v1338 = vld [vmem:[%s39 + $0xc0] sm:$0xff]
    %v1339 = vld [vmem:[%s39 + $0xc8] sm:$0xff]
    %v1340 = vld [vmem:[%s39 + $0xd0] sm:$0xff]
    %v1341 = vld [vmem:[%s39 + $0xd8] sm:$0xff]
    %v1342 = vld [vmem:[%s39 + $0xe0] sm:$0xff]
    %v1343 = vld [vmem:[%s39 + $0xe8] sm:$0xff]
    %v1344 = vld [vmem:[%s39 + $0xf0] sm:$0xff]
    %v1345 = vld [vmem:[%s39 + $0xf8] sm:$0xff]
    %v1346 = vld [vmem:[%s39 + $0x100] sm:$0xff]
    %v1347 = vld [vmem:[%s39 + $0x108] sm:$0xff]
    %v1348 = vld [vmem:[%s39 + $0x110] sm:$0xff]
    %v1349 = vld [vmem:[%s39 + $0x118] sm:$0xff]
    %v1350 = vld [vmem:[%s39 + $0x120] sm:$0xff]
    %v1351 = vld [vmem:[%s39 + $0x128] sm:$0xff]
    %v1352 = vld [vmem:[%s39 + $0x130] sm:$0xff]
    %v1353 = vld [vmem:[%s39 + $0x138] sm:$0xff]
    %v1354 = vld [vmem:[%s39 + $0x140] sm:$0xff]
    %v1355 = vld [vmem:[%s39 + $0x148] sm:$0xff]
    %v1356 = vld [vmem:[%s39 + $0x150] sm:$0xff]
    %v1357 = vld [vmem:[%s39 + $0x158] sm:$0xff]
    %v1358 = vld [vmem:[%s39 + $0x160] sm:$0xff]
    %v1359 = vld [vmem:[%s39 + $0x168] sm:$0xff]
    %v1360 = vld [vmem:[%s39 + $0x170] sm:$0xff]
    %v1361 = vld [vmem:[%s39 + $0x178] sm:$0xff]
    %v1410 = vunpack.c.l.b16 %v1314
    %v1411 = vunpack.c.h.b16 %v1314
    %v1412 = vunpack.c.l.b16 %v1315
    %v1413 = vunpack.c.h.b16 %v1315
    %v1414 = vunpack.c.l.b16 %v1316
    %v1415 = vunpack.c.h.b16 %v1316
    %v1416 = vunpack.c.l.b16 %v1317
    %v1417 = vunpack.c.h.b16 %v1317
    %v1418 = vunpack.c.l.b16 %v1318
    %v1419 = vunpack.c.h.b16 %v1318
    %v1420 = vunpack.c.l.b16 %v1319
    %v1421 = vunpack.c.h.b16 %v1319
    %v1422 = vunpack.c.l.b16 %v1320
    %v1423 = vunpack.c.h.b16 %v1320
    %v1424 = vunpack.c.l.b16 %v1321
    %v1425 = vunpack.c.h.b16 %v1321
    %v1426 = vunpack.c.l.b16 %v1322
    %v1427 = vunpack.c.h.b16 %v1322
    %v1428 = vunpack.c.l.b16 %v1323
    %v1429 = vunpack.c.h.b16 %v1323
    %v1430 = vunpack.c.l.b16 %v1324
    %v1431 = vunpack.c.h.b16 %v1324
    %v1432 = vunpack.c.l.b16 %v1325
    %v1433 = vunpack.c.h.b16 %v1325
    %v1434 = vunpack.c.l.b16 %v1326
    %v1435 = vunpack.c.h.b16 %v1326
    %v1436 = vunpack.c.l.b16 %v1327
    %v1437 = vunpack.c.h.b16 %v1327
    %v1438 = vunpack.c.l.b16 %v1328
    %v1439 = vunpack.c.h.b16 %v1328
    %v1440 = vunpack.c.l.b16 %v1329
    %v1441 = vunpack.c.h.b16 %v1329
    %v1442 = vunpack.c.l.b16 %v1330
    %v1443 = vunpack.c.h.b16 %v1330
    %v1444 = vunpack.c.l.b16 %v1331
    %v1445 = vunpack.c.h.b16 %v1331
    %v1446 = vunpack.c.l.b16 %v1332
    %v1447 = vunpack.c.h.b16 %v1332
    %v1448 = vunpack.c.l.b16 %v1333
    %v1449 = vunpack.c.h.b16 %v1333
    %v1450 = vunpack.c.l.b16 %v1334
    %v1451 = vunpack.c.h.b16 %v1334
    %v1452 = vunpack.c.l.b16 %v1335
    %v1453 = vunpack.c.h.b16 %v1335
    %v1454 = vunpack.c.l.b16 %v1336
    %v1455 = vunpack.c.h.b16 %v1336
    %v1456 = vunpack.c.l.b16 %v1337
    %v1457 = vunpack.c.h.b16 %v1337
    %v1458 = vunpack.c.l.b16 %v1338
    %v1459 = vunpack.c.h.b16 %v1338
    %v1460 = vunpack.c.l.b16 %v1339
    %v1461 = vunpack.c.h.b16 %v1339
    %v1462 = vunpack.c.l.b16 %v1340
    %v1463 = vunpack.c.h.b16 %v1340
    %v1464 = vunpack.c.l.b16 %v1341
    %v1465 = vunpack.c.h.b16 %v1341
    %v1466 = vunpack.c.l.b16 %v1342
    %v1467 = vunpack.c.h.b16 %v1342
    %v1468 = vunpack.c.l.b16 %v1343
    %v1469 = vunpack.c.h.b16 %v1343
    %v1470 = vunpack.c.l.b16 %v1344
    %v1471 = vunpack.c.h.b16 %v1344
    %v1472 = vunpack.c.l.b16 %v1345
    %v1473 = vunpack.c.h.b16 %v1345
    %v1474 = vunpack.c.l.b16 %v1346
    %v1475 = vunpack.c.h.b16 %v1346
    %v1476 = vunpack.c.l.b16 %v1347
    %v1477 = vunpack.c.h.b16 %v1347
    %v1478 = vunpack.c.l.b16 %v1348
    %v1479 = vunpack.c.h.b16 %v1348
    %v1480 = vunpack.c.l.b16 %v1349
    %v1481 = vunpack.c.h.b16 %v1349
    %v1482 = vunpack.c.l.b16 %v1350
    %v1483 = vunpack.c.h.b16 %v1350
    %v1484 = vunpack.c.l.b16 %v1351
    %v1485 = vunpack.c.h.b16 %v1351
    %v1486 = vunpack.c.l.b16 %v1352
    %v1487 = vunpack.c.h.b16 %v1352
    %v1488 = vunpack.c.l.b16 %v1353
    %v1489 = vunpack.c.h.b16 %v1353
    %v1490 = vunpack.c.l.b16 %v1354
    %v1491 = vunpack.c.h.b16 %v1354
    %v1492 = vunpack.c.l.b16 %v1355
    %v1493 = vunpack.c.h.b16 %v1355
    %v1494 = vunpack.c.l.b16 %v1356
    %v1495 = vunpack.c.h.b16 %v1356
    %v1496 = vunpack.c.l.b16 %v1357
    %v1497 = vunpack.c.h.b16 %v1357
    %v1498 = vunpack.c.l.b16 %v1358
    %v1499 = vunpack.c.h.b16 %v1358
    %v1500 = vunpack.c.l.b16 %v1359
    %v1501 = vunpack.c.h.b16 %v1359
    %v1502 = vunpack.c.l.b16 %v1360
    %v1503 = vunpack.c.h.b16 %v1360
    %v1504 = vunpack.c.l.b16 %v1361
    %v1505 = vunpack.c.h.b16 %v1361
    %v1506 = vpack.c.b16 %v1416, %v1410
    %v1507 = vpack.c.b16 %v1417, %v1411
    %v1508 = vpack.c.b16 %v1418, %v1412
    %v1509 = vpack.c.b16 %v1419, %v1413
    %v1510 = vpack.c.b16 %v1420, %v1414
    %v1511 = vpack.c.b16 %v1421, %v1415
    %v1512 = vpack.c.b16 %v1428, %v1422
    %v1513 = vpack.c.b16 %v1429, %v1423
    %v1514 = vpack.c.b16 %v1430, %v1424
    %v1515 = vpack.c.b16 %v1431, %v1425
    %v1516 = vpack.c.b16 %v1432, %v1426
    %v1517 = vpack.c.b16 %v1433, %v1427
    %v1518 = vpack.c.b16 %v1440, %v1434
    %v1519 = vpack.c.b16 %v1441, %v1435
    %v1520 = vpack.c.b16 %v1442, %v1436
    %v1521 = vpack.c.b16 %v1443, %v1437
    %v1522 = vpack.c.b16 %v1444, %v1438
    %v1523 = vpack.c.b16 %v1445, %v1439
    %v1524 = vpack.c.b16 %v1452, %v1446
    %v1525 = vpack.c.b16 %v1453, %v1447
    %v1526 = vpack.c.b16 %v1454, %v1448
    %v1527 = vpack.c.b16 %v1455, %v1449
    %v1528 = vpack.c.b16 %v1456, %v1450
    %v1529 = vpack.c.b16 %v1457, %v1451
    %v1530 = vpack.c.b16 %v1464, %v1458
    %v1531 = vpack.c.b16 %v1465, %v1459
    %v1532 = vpack.c.b16 %v1466, %v1460
    %v1533 = vpack.c.b16 %v1467, %v1461
    %v1534 = vpack.c.b16 %v1468, %v1462
    %v1535 = vpack.c.b16 %v1469, %v1463
    %v1536 = vpack.c.b16 %v1476, %v1470
    %v1537 = vpack.c.b16 %v1477, %v1471
    %v1538 = vpack.c.b16 %v1478, %v1472
    %v1539 = vpack.c.b16 %v1479, %v1473
    %v1540 = vpack.c.b16 %v1480, %v1474
    %v1541 = vpack.c.b16 %v1481, %v1475
    %v1542 = vpack.c.b16 %v1488, %v1482
    %v1543 = vpack.c.b16 %v1489, %v1483
    %v1544 = vpack.c.b16 %v1490, %v1484
    %v1545 = vpack.c.b16 %v1491, %v1485
    %v1546 = vpack.c.b16 %v1492, %v1486
    %v1547 = vpack.c.b16 %v1493, %v1487
    %v1548 = vpack.c.b16 %v1500, %v1494
    %v1549 = vpack.c.b16 %v1501, %v1495
    %v1550 = vpack.c.b16 %v1502, %v1496
    %v1551 = vpack.c.b16 %v1503, %v1497
    %v1552 = vpack.c.b16 %v1504, %v1498
    %v1553 = vpack.c.b16 %v1505, %v1499
    %1602 = vmatprep.subr.bf16.mxu0 %v1549
    %1603 = vmatpush1.bf16.msra.mxu0 %v1548
    %1604 = vmatprep.subr.bf16.mxu0 %v1543
    %1605 = vmatpush1.bf16.msra.mxu0 %v1542
    %1606 = vmatprep.subr.bf16.mxu0 %v1537
    %1607 = vmatpush1.bf16.msra.mxu0 %v1536
    %1608 = vmatprep.subr.bf16.mxu0 %v1531
    %1609 = vmatpush1.bf16.msra.mxu0 %v1530
    %1610 = vmatprep.subr.bf16.mxu0 %v1525
    %1611 = vmatpush1.bf16.msra.mxu0 %v1524
    %1612 = vmatprep.subr.bf16.mxu0 %v1519
    %1613 = vmatpush1.bf16.msra.mxu0 %v1518
    %1614 = vmatprep.subr.bf16.mxu0 %v1513
    %1615 = vmatpush1.bf16.msra.mxu0 %v1512
    %1616 = vmatprep.subr.bf16.mxu0 %v1507
    %1617 = vmatpush1.bf16.msra.mxu0 %v1506
    %1618 = vmatprep.subr.bf16.mxu0 0
    %1619 = vmatpush2.bf16.msra.mxu0 0
    %1620 = vmatprep.subr.bf16.mxu0 0
    %1621 = vmatpush2.bf16.msra.mxu0 0
    %1622 = vmatprep.subr.bf16.mxu0 0
    %1623 = vmatpush2.bf16.msra.mxu0 0
    %1624 = vmatprep.subr.bf16.mxu0 0
    %1625 = vmatpush2.bf16.msra.mxu0 0
    %1626 = vmatprep.subr.bf16.mxu0 0
    %1627 = vmatpush2.bf16.msra.mxu0 0
    %1628 = vmatprep.subr.bf16.mxu0 0
    %1629 = vmatpush2.bf16.msra.mxu0 0
    %1630 = vmatprep.subr.bf16.mxu0 0
    %1631 = vmatpush2.bf16.msra.mxu0 0
    %1632 = vmatprep.subr.bf16.mxu0 0
    %1633 = vmatpush2.bf16.msra.mxu0 0
    %1634 = vmatprep.mubr.bf16.mxu0 0
    %1635 = vmatmul.mubr.bf16.gmra.mxu0 %v1313
    %v1636 = vpop.f32.mrf.mxu0
    %v1637 = vadd.f32 0.0, %v1636
    %v1638 = vpop.f32.mrf.mxu0
    %v1639 = vadd.f32 0.0, %v1638
    %v1640 = vpop.f32.mrf.mxu0
    %v1641 = vadd.f32 0.0, %v1640
    %v1642 = vpop.f32.mrf.mxu0
    %v1643 = vadd.f32 0.0, %v1642
    %1644 = vdwg.mxu0
    %1645 = vmatprep.subr.bf16.mxu0 %v1551
    %1646 = vmatpush1.bf16.msra.mxu0 %v1550
    %1647 = vmatprep.subr.bf16.mxu0 %v1545
    %1648 = vmatpush1.bf16.msra.mxu0 %v1544
    %1649 = vmatprep.subr.bf16.mxu0 %v1539
    %1650 = vmatpush1.bf16.msra.mxu0 %v1538
    %1651 = vmatprep.subr.bf16.mxu0 %v1533
    %1652 = vmatpush1.bf16.msra.mxu0 %v1532
    %1653 = vmatprep.subr.bf16.mxu0 %v1527
    %1654 = vmatpush1.bf16.msra.mxu0 %v1526
    %1655 = vmatprep.subr.bf16.mxu0 %v1521
    %1656 = vmatpush1.bf16.msra.mxu0 %v1520
    %1657 = vmatprep.subr.bf16.mxu0 %v1515
    %1658 = vmatpush1.bf16.msra.mxu0 %v1514
    %1659 = vmatprep.subr.bf16.mxu0 %v1509
    %1660 = vmatpush1.bf16.msra.mxu0 %v1508
    %1661 = vmatprep.subr.bf16.mxu0 0
    %1662 = vmatpush2.bf16.msra.mxu0 0
    %1663 = vmatprep.subr.bf16.mxu0 0
    %1664 = vmatpush2.bf16.msra.mxu0 0
    %1665 = vmatprep.subr.bf16.mxu0 0
    %1666 = vmatpush2.bf16.msra.mxu0 0
    %1667 = vmatprep.subr.bf16.mxu0 0
    %1668 = vmatpush2.bf16.msra.mxu0 0
    %1669 = vmatprep.subr.bf16.mxu0 0
    %1670 = vmatpush2.bf16.msra.mxu0 0
    %1671 = vmatprep.subr.bf16.mxu0 0
    %1672 = vmatpush2.bf16.msra.mxu0 0
    %1673 = vmatprep.subr.bf16.mxu0 0
    %1674 = vmatpush2.bf16.msra.mxu0 0
    %1675 = vmatprep.subr.bf16.mxu0 0
    %1676 = vmatpush2.bf16.msra.mxu0 0
    %1677 = vmatprep.mubr.bf16.mxu0 0
    %1678 = vmatmul.mubr.bf16.gmra.mxu0 %v1313
    %v1679 = vpop.f32.mrf.mxu0
    %v1680 = vadd.f32 0.0, %v1679
    %v1681 = vpop.f32.mrf.mxu0
    %v1682 = vadd.f32 0.0, %v1681
    %v1683 = vpop.f32.mrf.mxu0
    %v1684 = vadd.f32 0.0, %v1683
    %v1685 = vpop.f32.mrf.mxu0
    %v1686 = vadd.f32 0.0, %v1685
    %1687 = vdwg.mxu0
    %1688 = vmatprep.subr.bf16.mxu0 %v1553
    %1689 = vmatpush1.bf16.msra.mxu0 %v1552
    %1690 = vmatprep.subr.bf16.mxu0 %v1547
    %1691 = vmatpush1.bf16.msra.mxu0 %v1546
    %1692 = vmatprep.subr.bf16.mxu0 %v1541
    %1693 = vmatpush1.bf16.msra.mxu0 %v1540
    %1694 = vmatprep.subr.bf16.mxu0 %v1535
    %1695 = vmatpush1.bf16.msra.mxu0 %v1534
    %1696 = vmatprep.subr.bf16.mxu0 %v1529
    %1697 = vmatpush1.bf16.msra.mxu0 %v1528
    %1698 = vmatprep.subr.bf16.mxu0 %v1523
    %1699 = vmatpush1.bf16.msra.mxu0 %v1522
    %1700 = vmatprep.subr.bf16.mxu0 %v1517
    %1701 = vmatpush1.bf16.msra.mxu0 %v1516
    %1702 = vmatprep.subr.bf16.mxu0 %v1511
    %1703 = vmatpush1.bf16.msra.mxu0 %v1510
    %1704 = vmatprep.subr.bf16.mxu0 0
    %1705 = vmatpush2.bf16.msra.mxu0 0
    %1706 = vmatprep.subr.bf16.mxu0 0
    %1707 = vmatpush2.bf16.msra.mxu0 0
    %1708 = vmatprep.subr.bf16.mxu0 0
    %1709 = vmatpush2.bf16.msra.mxu0 0
    %1710 = vmatprep.subr.bf16.mxu0 0
    %1711 = vmatpush2.bf16.msra.mxu0 0
    %1712 = vmatprep.subr.bf16.mxu0 0
    %1713 = vmatpush2.bf16.msra.mxu0 0
    %1714 = vmatprep.subr.bf16.mxu0 0
    %1715 = vmatpush2.bf16.msra.mxu0 0
    %1716 = vmatprep.subr.bf16.mxu0 0
    %1717 = vmatpush2.bf16.msra.mxu0 0
    %1718 = vmatprep.subr.bf16.mxu0 0
    %1719 = vmatpush2.bf16.msra.mxu0 0
    %1720 = vmatprep.mubr.bf16.mxu0 0
    %1721 = vmatmul.mubr.bf16.gmra.mxu0 %v1313
    %v1722 = vpop.f32.mrf.mxu0
    %v1723 = vadd.f32 0.0, %v1722
    %v1724 = vpop.f32.mrf.mxu0
    %v1725 = vadd.f32 0.0, %v1724
    %v1726 = vpop.f32.mrf.mxu0
    %v1727 = vadd.f32 0.0, %v1726
    %v1728 = vpop.f32.mrf.mxu0
    %v1729 = vadd.f32 0.0, %v1728
    %1730 = vdwg.mxu0
    %v1731 = vrot.slane %v1637, 7
    %v1732 = vrot.slane %v1639, 7
    %v1733 = vrot.slane %v1641, 7
    %v1734 = vrot.slane %v1643, 7
    %v1735 = vlaneseq
    %v1736 = vshrl.u32 %v1735, 7
    %vm1737 = vcmp.lt.s32.totalorder %v1736, 1
    %v1738 = vsel %vm1737, %v1731, %v1733
    %v1739 = vsel %vm1737, %v1732, %v1734
    %v1740 = vsel %vm1737, %v1733, %v1731
    %v1741 = vsel %vm1737, %v1734, %v1732
    %1743 = vset.pattern.permute.xlu0 0
    %1744 = vperm.xlu0 %1743, %v446
    %v1745 = vpop.permute.xlu0 %1744
    %1748 = vset.pattern.permute.xlu0 0
    %1749 = vperm.xlu0 %1748, %v447
    %v1750 = vpop.permute.xlu0 %1749
    %v1752 = vmul.f32 %v1745, %v1740
    %v1753 = vmul.f32 %v1745, %v1741
    %v1754 = vmul.f32 %v1750, %v1738
    %v1755 = vmul.f32 %v1750, %v1739
    %v1756 = vrot.slane %v1723, 1
    %v1757 = vrot.slane %v1725, 1
    %v1758 = vrot.slane %v1727, 1
    %v1759 = vrot.slane %v1729, 1
    %vm1760 = vcmp.lt.s32.totalorder %v1736, 7
    %v1761 = vsel %vm1760, %v1756, %v1758
    %v1762 = vsel %vm1760, %v1757, %v1759
    %v1763 = vsel %vm1760, %v1758, %v1756
    %v1764 = vsel %vm1760, %v1759, %v1757
    %1766 = vset.pattern.permute.xlu0 0
    %1767 = vperm.xlu0 %1766, %v448
    %v1768 = vpop.permute.xlu0 %1767
    %1771 = vset.pattern.permute.xlu0 0
    %1772 = vperm.xlu0 %1771, %v449
    %v1773 = vpop.permute.xlu0 %1772
    %v1775 = vmul.f32 %v1768, %v1761
    %v1776 = vmul.f32 %v1768, %v1762
    %v1777 = vmul.f32 %v1773, %v1763
    %v1778 = vmul.f32 %v1773, %v1764
    %v1779 = vadd.f32 %v1680, %v1752
    %v1780 = vadd.f32 %v1682, %v1753
    %v1781 = vadd.f32 %v1684, %v1754
    %v1782 = vadd.f32 %v1686, %v1755
    %v1783 = vadd.f32 %v1779, %v1775
    %v1784 = vadd.f32 %v1780, %v1776
    %v1785 = vadd.f32 %v1781, %v1777
    %v1786 = vadd.f32 %v1782, %v1778
    %v1787 = vld [vmem:[#allocation19] sm:$0x3]
    %v1789 = vlaneseq
    %v1790 = vshrl.u32 %v1789, 7
    %v1791 = vsub.s32 0, %v1790
    %v1792 = vrot.slane %v1787, %v1791
    %v1793 = vlaneseq
    %v1794 = vshrl.u32 %v1793, 7
    %v1795 = vsub.s32 1, %v1794
    %v1796 = vrot.slane %v1787, %v1795
    %v1799 = vadd.f32 %v1783, %v1792
    %v1800 = vadd.f32 %v1784, %v1796
    %v1801 = vadd.f32 %v1785, %v1792
    %v1802 = vadd.f32 %v1786, %v1796
    %1803 = vadd.xlane.f32.xlu0 %v1799
    %v1804 = vpop.xlane.xlu0 %1803
    %1805 = vadd.xlane.f32.xlu0 %v1801
    %v1806 = vpop.xlane.xlu0 %1805
    %v1807 = vmul.f32 %v1804, %v1029
    %v1808 = vmul.f32 %v1806, %v1029
    %v1809 = vsub.f32 %v1799, %v1807
    %v1810 = vsub.f32 %v1801, %v1808
    %v1811 = vmul.f32 %v1809, %v1809
    %v1812 = vmul.f32 %v1810, %v1810
    %1813 = vadd.xlane.f32.xlu0 %v1811
    %v1814 = vpop.xlane.xlu0 %1813
    %1815 = vadd.xlane.f32.xlu0 %v1812
    %v1816 = vpop.xlane.xlu0 %1815
    %v1817 = vmul.f32 %v1814, %v1029
    %v1818 = vmul.f32 %v1816, %v1029
    %v1819 = vadd.f32 %v1817, 1e-05
    %v1820 = vadd.f32 %v1818, 1e-05
    %v1821 = vrsqrt.pop %v1819
    %v1822 = vrsqrt.pop %v1820
    %v1823 = vmul.f32 %v1809, %v1821
    %v1824 = vmul.f32 %v1810, %v1822
    %v1825 = vld [vmem:[#allocation20] sm:$0x1]
    %v1827 = vlaneseq
    %v1828 = vshrl.u32 %v1827, 7
    %v1829 = vsub.s32 0, %v1828
    %v1830 = vrot.slane %v1825, %v1829
    %v1832 = vmul.f32 %v1823, %v1830
    %v1833 = vmul.f32 %v1824, %v1830
    %v1834 = vld [vmem:[#allocation22] sm:$0x1]
    %v1836 = vlaneseq
    %v1837 = vshrl.u32 %v1836, 7
    %v1838 = vsub.s32 0, %v1837
    %v1839 = vrot.slane %v1834, %v1838
    %v1841 = vadd.f32 %v1832, %v1839
    %v1842 = vadd.f32 %v1833, %v1839
    %v1843 = vmax.f32 %v1841, 0.0
    %v1844 = vmax.f32 %v1842, 0.0
    %1845 = vadd.xlane.f32.xlu0 %v1800
    %v1846 = vpop.xlane.xlu0 %1845
    %1847 = vadd.xlane.f32.xlu0 %v1802
    %v1848 = vpop.xlane.xlu0 %1847
    %v1849 = vmul.f32 %v1846, %v1029
    %v1850 = vmul.f32 %v1848, %v1029
    %v1851 = vsub.f32 %v1800, %v1849
    %v1852 = vsub.f32 %v1802, %v1850
    %v1853 = vmul.f32 %v1851, %v1851
    %v1854 = vmul.f32 %v1852, %v1852
    %1855 = vadd.xlane.f32.xlu0 %v1853
    %v1856 = vpop.xlane.xlu0 %1855
    %1857 = vadd.xlane.f32.xlu0 %v1854
    %v1858 = vpop.xlane.xlu0 %1857
    %v1859 = vmul.f32 %v1856, %v1029
    %v1860 = vmul.f32 %v1858, %v1029
    %v1861 = vadd.f32 %v1859, 1e-05
    %v1862 = vadd.f32 %v1860, 1e-05
    %v1863 = vrsqrt.pop %v1861
    %v1864 = vrsqrt.pop %v1862
    %v1865 = vmul.f32 %v1851, %v1863
    %v1866 = vmul.f32 %v1852, %v1864
    %v1867 = vld [vmem:[#allocation25] sm:$0x1]
    %v1869 = vlaneseq
    %v1870 = vshrl.u32 %v1869, 7
    %v1871 = vsub.s32 0, %v1870
    %v1872 = vrot.slane %v1867, %v1871
    %v1874 = vmul.f32 %v1865, %v1872
    %v1875 = vmul.f32 %v1866, %v1872
    %v1876 = vld [vmem:[#allocation26] sm:$0x1]
    %v1878 = vlaneseq
    %v1879 = vshrl.u32 %v1878, 7
    %v1880 = vsub.s32 0, %v1879
    %v1881 = vrot.slane %v1876, %v1880
    %v1883 = vadd.f32 %v1874, %v1881
    %v1884 = vadd.f32 %v1875, %v1881
    %v1885 = vmax.f32 %v1883, 0.0
    %v1886 = vmax.f32 %v1884, 0.0
    %v1887 = vpack.c.bf16 %v1844, %v1843
    %v1888 = vld [vmem:[%s47] sm:$0xff]
    %v1889 = vld [vmem:[%s47 + $0x8] sm:$0xf]
    %v1890 = vld [vmem:[%s47 + $0xc] sm:$0xff]
    %v1891 = vld [vmem:[%s47 + $0x14] sm:$0xf]
    %v1892 = vld [vmem:[%s47 + $0x18] sm:$0xff]
    %v1893 = vld [vmem:[%s47 + $0x20] sm:$0xf]
    %v1894 = vld [vmem:[%s47 + $0x24] sm:$0xff]
    %v1895 = vld [vmem:[%s47 + $0x2c] sm:$0xf]
    %v1896 = vld [vmem:[%s47 + $0x30] sm:$0xff]
    %v1897 = vld [vmem:[%s47 + $0x38] sm:$0xf]
    %v1898 = vld [vmem:[%s47 + $0x3c] sm:$0xff]
    %v1899 = vld [vmem:[%s47 + $0x44] sm:$0xf]
    %v1900 = vld [vmem:[%s47 + $0x48] sm:$0xff]
    %v1901 = vld [vmem:[%s47 + $0x50] sm:$0xf]
    %v1902 = vld [vmem:[%s47 + $0x54] sm:$0xff]
    %v1903 = vld [vmem:[%s47 + $0x5c] sm:$0xf]
    %v1904 = vld [vmem:[%s47 + $0x60] sm:$0xff]
    %v1905 = vld [vmem:[%s47 + $0x68] sm:$0xf]
    %v1906 = vld [vmem:[%s47 + $0x6c] sm:$0xff]
    %v1907 = vld [vmem:[%s47 + $0x74] sm:$0xf]
    %v1908 = vld [vmem:[%s47 + $0x78] sm:$0xff]
    %v1909 = vld [vmem:[%s47 + $0x80] sm:$0xf]
    %v1910 = vld [vmem:[%s47 + $0x84] sm:$0xff]
    %v1911 = vld [vmem:[%s47 + $0x8c] sm:$0xf]
    %v1912 = vld [vmem:[%s47 + $0x90] sm:$0xff]
    %v1913 = vld [vmem:[%s47 + $0x98] sm:$0xf]
    %v1914 = vld [vmem:[%s47 + $0x9c] sm:$0xff]
    %v1915 = vld [vmem:[%s47 + $0xa4] sm:$0xf]
    %v1916 = vld [vmem:[%s47 + $0xa8] sm:$0xff]
    %v1917 = vld [vmem:[%s47 + $0xb0] sm:$0xf]
    %v1918 = vld [vmem:[%s47 + $0xb4] sm:$0xff]
    %v1919 = vld [vmem:[%s47 + $0xbc] sm:$0xf]
    %v1952 = vunpack.c.l.b16 %v1888
    %v1953 = vunpack.c.h.b16 %v1888
    %v1954 = vunpack.c.l.b16 %v1889
    %v1955 = vunpack.c.l.b16 %v1890
    %v1956 = vunpack.c.h.b16 %v1890
    %v1957 = vunpack.c.l.b16 %v1891
    %v1958 = vunpack.c.l.b16 %v1892
    %v1959 = vunpack.c.h.b16 %v1892
    %v1960 = vunpack.c.l.b16 %v1893
    %v1961 = vunpack.c.l.b16 %v1894
    %v1962 = vunpack.c.h.b16 %v1894
    %v1963 = vunpack.c.l.b16 %v1895
    %v1964 = vunpack.c.l.b16 %v1896
    %v1965 = vunpack.c.h.b16 %v1896
    %v1966 = vunpack.c.l.b16 %v1897
    %v1967 = vunpack.c.l.b16 %v1898
    %v1968 = vunpack.c.h.b16 %v1898
    %v1969 = vunpack.c.l.b16 %v1899
    %v1970 = vunpack.c.l.b16 %v1900
    %v1971 = vunpack.c.h.b16 %v1900
    %v1972 = vunpack.c.l.b16 %v1901
    %v1973 = vunpack.c.l.b16 %v1902
    %v1974 = vunpack.c.h.b16 %v1902
    %v1975 = vunpack.c.l.b16 %v1903
    %v1976 = vunpack.c.l.b16 %v1904
    %v1977 = vunpack.c.h.b16 %v1904
    %v1978 = vunpack.c.l.b16 %v1905
    %v1979 = vunpack.c.l.b16 %v1906
    %v1980 = vunpack.c.h.b16 %v1906
    %v1981 = vunpack.c.l.b16 %v1907
    %v1982 = vunpack.c.l.b16 %v1908
    %v1983 = vunpack.c.h.b16 %v1908
    %v1984 = vunpack.c.l.b16 %v1909
    %v1985 = vunpack.c.l.b16 %v1910
    %v1986 = vunpack.c.h.b16 %v1910
    %v1987 = vunpack.c.l.b16 %v1911
    %v1988 = vunpack.c.l.b16 %v1912
    %v1989 = vunpack.c.h.b16 %v1912
    %v1990 = vunpack.c.l.b16 %v1913
    %v1991 = vunpack.c.l.b16 %v1914
    %v1992 = vunpack.c.h.b16 %v1914
    %v1993 = vunpack.c.l.b16 %v1915
    %v1994 = vunpack.c.l.b16 %v1916
    %v1995 = vunpack.c.h.b16 %v1916
    %v1996 = vunpack.c.l.b16 %v1917
    %v1997 = vunpack.c.l.b16 %v1918
    %v1998 = vunpack.c.h.b16 %v1918
    %v1999 = vunpack.c.l.b16 %v1919
    %v2000 = vpack.c.b16 %v1955, %v1952
    %v2001 = vpack.c.b16 %v1956, %v1953
    %v2002 = vpack.c.b16 %v1957, %v1954
    %v2003 = vpack.c.b16 %v1961, %v1958
    %v2004 = vpack.c.b16 %v1962, %v1959
    %v2005 = vpack.c.b16 %v1963, %v1960
    %v2006 = vpack.c.b16 %v1967, %v1964
    %v2007 = vpack.c.b16 %v1968, %v1965
    %v2008 = vpack.c.b16 %v1969, %v1966
    %v2009 = vpack.c.b16 %v1973, %v1970
    %v2010 = vpack.c.b16 %v1974, %v1971
    %v2011 = vpack.c.b16 %v1975, %v1972
    %v2012 = vpack.c.b16 %v1979, %v1976
    %v2013 = vpack.c.b16 %v1980, %v1977
    %v2014 = vpack.c.b16 %v1981, %v1978
    %v2015 = vpack.c.b16 %v1985, %v1982
    %v2016 = vpack.c.b16 %v1986, %v1983
    %v2017 = vpack.c.b16 %v1987, %v1984
    %v2018 = vpack.c.b16 %v1991, %v1988
    %v2019 = vpack.c.b16 %v1992, %v1989
    %v2020 = vpack.c.b16 %v1993, %v1990
    %v2021 = vpack.c.b16 %v1997, %v1994
    %v2022 = vpack.c.b16 %v1998, %v1995
    %v2023 = vpack.c.b16 %v1999, %v1996
    %2048 = vmatprep.subr.bf16.mxu0 %v2022
    %2049 = vmatpush1.bf16.msra.mxu0 %v2021
    %2050 = vmatprep.subr.bf16.mxu0 %v2019
    %2051 = vmatpush1.bf16.msra.mxu0 %v2018
    %2052 = vmatprep.subr.bf16.mxu0 %v2016
    %2053 = vmatpush1.bf16.msra.mxu0 %v2015
    %2054 = vmatprep.subr.bf16.mxu0 %v2013
    %2055 = vmatpush1.bf16.msra.mxu0 %v2012
    %2056 = vmatprep.subr.bf16.mxu0 %v2010
    %2057 = vmatpush1.bf16.msra.mxu0 %v2009
    %2058 = vmatprep.subr.bf16.mxu0 %v2007
    %2059 = vmatpush1.bf16.msra.mxu0 %v2006
    %2060 = vmatprep.subr.bf16.mxu0 %v2004
    %2061 = vmatpush1.bf16.msra.mxu0 %v2003
    %2062 = vmatprep.subr.bf16.mxu0 %v2001
    %2063 = vmatpush1.bf16.msra.mxu0 %v2000
    %2064 = vmatprep.subr.bf16.mxu0 0
    %2065 = vmatpush2.bf16.msra.mxu0 0
    %2066 = vmatprep.subr.bf16.mxu0 0
    %2067 = vmatpush2.bf16.msra.mxu0 0
    %2068 = vmatprep.subr.bf16.mxu0 0
    %2069 = vmatpush2.bf16.msra.mxu0 0
    %2070 = vmatprep.subr.bf16.mxu0 0
    %2071 = vmatpush2.bf16.msra.mxu0 0
    %2072 = vmatprep.subr.bf16.mxu0 0
    %2073 = vmatpush2.bf16.msra.mxu0 0
    %2074 = vmatprep.subr.bf16.mxu0 0
    %2075 = vmatpush2.bf16.msra.mxu0 0
    %2076 = vmatprep.subr.bf16.mxu0 0
    %2077 = vmatpush2.bf16.msra.mxu0 0
    %2078 = vmatprep.subr.bf16.mxu0 0
    %2079 = vmatpush2.bf16.msra.mxu0 0
    %2080 = vmatprep.mubr.bf16.mxu0 0
    %2081 = vmatmul.mubr.bf16.gmra.mxu0 %v1887
    %v2082 = vpop.f32.mrf.mxu0
    %v2083 = vadd.f32 0.0, %v2082
    %v2084 = vpop.f32.mrf.mxu0
    %v2085 = vadd.f32 0.0, %v2084
    %v2086 = vpop.f32.mrf.mxu0
    %v2087 = vadd.f32 0.0, %v2086
    %v2088 = vpop.f32.mrf.mxu0
    %v2089 = vadd.f32 0.0, %v2088
    %2090 = vdwg.mxu0
    %2091 = vmatprep.subr.bf16.mxu0 0
    %2092 = vmatpush1.bf16.msra.mxu0 %v2023
    %2093 = vmatprep.subr.bf16.mxu0 0
    %2094 = vmatpush1.bf16.msra.mxu0 %v2020
    %2095 = vmatprep.subr.bf16.mxu0 0
    %2096 = vmatpush1.bf16.msra.mxu0 %v2017
    %2097 = vmatprep.subr.bf16.mxu0 0
    %2098 = vmatpush1.bf16.msra.mxu0 %v2014
    %2099 = vmatprep.subr.bf16.mxu0 0
    %2100 = vmatpush1.bf16.msra.mxu0 %v2011
    %2101 = vmatprep.subr.bf16.mxu0 0
    %2102 = vmatpush1.bf16.msra.mxu0 %v2008
    %2103 = vmatprep.subr.bf16.mxu0 0
    %2104 = vmatpush1.bf16.msra.mxu0 %v2005
    %2105 = vmatprep.subr.bf16.mxu0 0
    %2106 = vmatpush1.bf16.msra.mxu0 %v2002
    %2107 = vmatprep.subr.bf16.mxu0 0
    %2108 = vmatpush2.bf16.msra.mxu0 0
    %2109 = vmatprep.subr.bf16.mxu0 0
    %2110 = vmatpush2.bf16.msra.mxu0 0
    %2111 = vmatprep.subr.bf16.mxu0 0
    %2112 = vmatpush2.bf16.msra.mxu0 0
    %2113 = vmatprep.subr.bf16.mxu0 0
    %2114 = vmatpush2.bf16.msra.mxu0 0
    %2115 = vmatprep.subr.bf16.mxu0 0
    %2116 = vmatpush2.bf16.msra.mxu0 0
    %2117 = vmatprep.subr.bf16.mxu0 0
    %2118 = vmatpush2.bf16.msra.mxu0 0
    %2119 = vmatprep.subr.bf16.mxu0 0
    %2120 = vmatpush2.bf16.msra.mxu0 0
    %2121 = vmatprep.subr.bf16.mxu0 0
    %2122 = vmatpush2.bf16.msra.mxu0 0
    %2123 = vmatprep.mubr.bf16.mxu0 0
    %2124 = vmatmul.mubr.bf16.gmra.mxu0 %v1887
    %v2125 = vpop.f32.mrf.mxu0
    %v2126 = vadd.f32 0.0, %v2125
    %v2127 = vpop.f32.mrf.mxu0
    %v2128 = vpop.f32.mrf.mxu0
    %v2129 = vadd.f32 0.0, %v2128
    %v2130 = vpop.f32.mrf.mxu0
    %2131 = vdwg.mxu0
    %v2132 = vrot.slane %v2083, 7
    %v2133 = vrot.slane %v2087, 7
    %v2134 = vsel %vm1737, %v2132, %v2133
    %v2135 = vsel %vm1737, %v2133, %v2132
    %v2136 = vmul.f32 %v1745, %v2135
    %v2137 = vmul.f32 %v1750, %v2134
    %v2138 = vrot.slane %v2126, 1
    %v2139 = vrot.slane %v2129, 1
    %v2140 = vsel %vm1760, %v2138, %v2139
    %v2141 = vsel %vm1760, %v2139, %v2138
    %v2142 = vmul.f32 %v1768, %v2140
    %v2143 = vmul.f32 %v1773, %v2141
    %v2144 = vadd.f32 %v2085, %v2136
    %v2145 = vadd.f32 %v2089, %v2137
    %v2146 = vadd.f32 %v2144, %v2142
    %v2147 = vadd.f32 %v2145, %v2143
    %v2148 = vld [vmem:[#allocation23] sm:$0x1]
    %v2150 = vlaneseq
    %v2151 = vshrl.u32 %v2150, 7
    %v2152 = vsub.s32 0, %v2151
    %v2153 = vrot.slane %v2148, %v2152
    %v2155 = vadd.f32 %v2146, %v2153
    %v2156 = vadd.f32 %v2147, %v2153
    %v2157 = vmax.f32 %v2155, 0.0
    %v2158 = vmax.f32 %v2156, 0.0
    %v2159 = vpack.c.bf16 %v1886, %v1885
    %v2160 = vld [vmem:[%s55] sm:$0xff]
    %v2161 = vld [vmem:[%s55 + $0x8] sm:$0xf]
    %v2162 = vld [vmem:[%s55 + $0xc] sm:$0xff]
    %v2163 = vld [vmem:[%s55 + $0x14] sm:$0xf]
    %v2164 = vld [vmem:[%s55 + $0x18] sm:$0xff]
    %v2165 = vld [vmem:[%s55 + $0x20] sm:$0xf]
    %v2166 = vld [vmem:[%s55 + $0x24] sm:$0xff]
    %v2167 = vld [vmem:[%s55 + $0x2c] sm:$0xf]
    %v2168 = vld [vmem:[%s55 + $0x30] sm:$0xff]
    %v2169 = vld [vmem:[%s55 + $0x38] sm:$0xf]
    %v2170 = vld [vmem:[%s55 + $0x3c] sm:$0xff]
    %v2171 = vld [vmem:[%s55 + $0x44] sm:$0xf]
    %v2172 = vld [vmem:[%s55 + $0x48] sm:$0xff]
    %v2173 = vld [vmem:[%s55 + $0x50] sm:$0xf]
    %v2174 = vld [vmem:[%s55 + $0x54] sm:$0xff]
    %v2175 = vld [vmem:[%s55 + $0x5c] sm:$0xf]
    %v2176 = vld [vmem:[%s55 + $0x60] sm:$0xff]
    %v2177 = vld [vmem:[%s55 + $0x68] sm:$0xf]
    %v2178 = vld [vmem:[%s55 + $0x6c] sm:$0xff]
    %v2179 = vld [vmem:[%s55 + $0x74] sm:$0xf]
    %v2180 = vld [vmem:[%s55 + $0x78] sm:$0xff]
    %v2181 = vld [vmem:[%s55 + $0x80] sm:$0xf]
    %v2182 = vld [vmem:[%s55 + $0x84] sm:$0xff]
    %v2183 = vld [vmem:[%s55 + $0x8c] sm:$0xf]
    %v2184 = vld [vmem:[%s55 + $0x90] sm:$0xff]
    %v2185 = vld [vmem:[%s55 + $0x98] sm:$0xf]
    %v2186 = vld [vmem:[%s55 + $0x9c] sm:$0xff]
    %v2187 = vld [vmem:[%s55 + $0xa4] sm:$0xf]
    %v2188 = vld [vmem:[%s55 + $0xa8] sm:$0xff]
    %v2189 = vld [vmem:[%s55 + $0xb0] sm:$0xf]
    %v2190 = vld [vmem:[%s55 + $0xb4] sm:$0xff]
    %v2191 = vld [vmem:[%s55 + $0xbc] sm:$0xf]
    %v2224 = vunpack.c.l.b16 %v2160
    %v2225 = vunpack.c.h.b16 %v2160
    %v2226 = vunpack.c.l.b16 %v2161
    %v2227 = vunpack.c.l.b16 %v2162
    %v2228 = vunpack.c.h.b16 %v2162
    %v2229 = vunpack.c.l.b16 %v2163
    %v2230 = vunpack.c.l.b16 %v2164
    %v2231 = vunpack.c.h.b16 %v2164
    %v2232 = vunpack.c.l.b16 %v2165
    %v2233 = vunpack.c.l.b16 %v2166
    %v2234 = vunpack.c.h.b16 %v2166
    %v2235 = vunpack.c.l.b16 %v2167
    %v2236 = vunpack.c.l.b16 %v2168
    %v2237 = vunpack.c.h.b16 %v2168
    %v2238 = vunpack.c.l.b16 %v2169
    %v2239 = vunpack.c.l.b16 %v2170
    %v2240 = vunpack.c.h.b16 %v2170
    %v2241 = vunpack.c.l.b16 %v2171
    %v2242 = vunpack.c.l.b16 %v2172
    %v2243 = vunpack.c.h.b16 %v2172
    %v2244 = vunpack.c.l.b16 %v2173
    %v2245 = vunpack.c.l.b16 %v2174
    %v2246 = vunpack.c.h.b16 %v2174
    %v2247 = vunpack.c.l.b16 %v2175
    %v2248 = vunpack.c.l.b16 %v2176
    %v2249 = vunpack.c.h.b16 %v2176
    %v2250 = vunpack.c.l.b16 %v2177
    %v2251 = vunpack.c.l.b16 %v2178
    %v2252 = vunpack.c.h.b16 %v2178
    %v2253 = vunpack.c.l.b16 %v2179
    %v2254 = vunpack.c.l.b16 %v2180
    %v2255 = vunpack.c.h.b16 %v2180
    %v2256 = vunpack.c.l.b16 %v2181
    %v2257 = vunpack.c.l.b16 %v2182
    %v2258 = vunpack.c.h.b16 %v2182
    %v2259 = vunpack.c.l.b16 %v2183
    %v2260 = vunpack.c.l.b16 %v2184
    %v2261 = vunpack.c.h.b16 %v2184
    %v2262 = vunpack.c.l.b16 %v2185
    %v2263 = vunpack.c.l.b16 %v2186
    %v2264 = vunpack.c.h.b16 %v2186
    %v2265 = vunpack.c.l.b16 %v2187
    %v2266 = vunpack.c.l.b16 %v2188
    %v2267 = vunpack.c.h.b16 %v2188
    %v2268 = vunpack.c.l.b16 %v2189
    %v2269 = vunpack.c.l.b16 %v2190
    %v2270 = vunpack.c.h.b16 %v2190
    %v2271 = vunpack.c.l.b16 %v2191
    %v2272 = vpack.c.b16 %v2227, %v2224
    %v2273 = vpack.c.b16 %v2228, %v2225
    %v2274 = vpack.c.b16 %v2229, %v2226
    %v2275 = vpack.c.b16 %v2233, %v2230
    %v2276 = vpack.c.b16 %v2234, %v2231
    %v2277 = vpack.c.b16 %v2235, %v2232
    %v2278 = vpack.c.b16 %v2239, %v2236
    %v2279 = vpack.c.b16 %v2240, %v2237
    %v2280 = vpack.c.b16 %v2241, %v2238
    %v2281 = vpack.c.b16 %v2245, %v2242
    %v2282 = vpack.c.b16 %v2246, %v2243
    %v2283 = vpack.c.b16 %v2247, %v2244
    %v2284 = vpack.c.b16 %v2251, %v2248
    %v2285 = vpack.c.b16 %v2252, %v2249
    %v2286 = vpack.c.b16 %v2253, %v2250
    %v2287 = vpack.c.b16 %v2257, %v2254
    %v2288 = vpack.c.b16 %v2258, %v2255
    %v2289 = vpack.c.b16 %v2259, %v2256
    %v2290 = vpack.c.b16 %v2263, %v2260
    %v2291 = vpack.c.b16 %v2264, %v2261
    %v2292 = vpack.c.b16 %v2265, %v2262
    %v2293 = vpack.c.b16 %v2269, %v2266
    %v2294 = vpack.c.b16 %v2270, %v2267
    %v2295 = vpack.c.b16 %v2271, %v2268
    %2320 = vmatprep.subr.bf16.mxu0 %v2294
    %2321 = vmatpush1.bf16.msra.mxu0 %v2293
    %2322 = vmatprep.subr.bf16.mxu0 %v2291
    %2323 = vmatpush1.bf16.msra.mxu0 %v2290
    %2324 = vmatprep.subr.bf16.mxu0 %v2288
    %2325 = vmatpush1.bf16.msra.mxu0 %v2287
    %2326 = vmatprep.subr.bf16.mxu0 %v2285
    %2327 = vmatpush1.bf16.msra.mxu0 %v2284
    %2328 = vmatprep.subr.bf16.mxu0 %v2282
    %2329 = vmatpush1.bf16.msra.mxu0 %v2281
    %2330 = vmatprep.subr.bf16.mxu0 %v2279
    %2331 = vmatpush1.bf16.msra.mxu0 %v2278
    %2332 = vmatprep.subr.bf16.mxu0 %v2276
    %2333 = vmatpush1.bf16.msra.mxu0 %v2275
    %2334 = vmatprep.subr.bf16.mxu0 %v2273
    %2335 = vmatpush1.bf16.msra.mxu0 %v2272
    %2336 = vmatprep.subr.bf16.mxu0 0
    %2337 = vmatpush2.bf16.msra.mxu0 0
    %2338 = vmatprep.subr.bf16.mxu0 0
    %2339 = vmatpush2.bf16.msra.mxu0 0
    %2340 = vmatprep.subr.bf16.mxu0 0
    %2341 = vmatpush2.bf16.msra.mxu0 0
    %2342 = vmatprep.subr.bf16.mxu0 0
    %2343 = vmatpush2.bf16.msra.mxu0 0
    %2344 = vmatprep.subr.bf16.mxu0 0
    %2345 = vmatpush2.bf16.msra.mxu0 0
    %2346 = vmatprep.subr.bf16.mxu0 0
    %2347 = vmatpush2.bf16.msra.mxu0 0
    %2348 = vmatprep.subr.bf16.mxu0 0
    %2349 = vmatpush2.bf16.msra.mxu0 0
    %2350 = vmatprep.subr.bf16.mxu0 0
    %2351 = vmatpush2.bf16.msra.mxu0 0
    %2352 = vmatprep.mubr.bf16.mxu0 0
    %2353 = vmatmul.mubr.bf16.gmra.mxu0 %v2159
    %v2354 = vpop.f32.mrf.mxu0
    %v2355 = vadd.f32 0.0, %v2354
    %v2356 = vpop.f32.mrf.mxu0
    %v2357 = vadd.f32 0.0, %v2356
    %v2358 = vpop.f32.mrf.mxu0
    %v2359 = vadd.f32 0.0, %v2358
    %v2360 = vpop.f32.mrf.mxu0
    %v2361 = vadd.f32 0.0, %v2360
    %2362 = vdwg.mxu0
    %2363 = vmatprep.subr.bf16.mxu0 0
    %2364 = vmatpush1.bf16.msra.mxu0 %v2295
    %2365 = vmatprep.subr.bf16.mxu0 0
    %2366 = vmatpush1.bf16.msra.mxu0 %v2292
    %2367 = vmatprep.subr.bf16.mxu0 0
    %2368 = vmatpush1.bf16.msra.mxu0 %v2289
    %2369 = vmatprep.subr.bf16.mxu0 0
    %2370 = vmatpush1.bf16.msra.mxu0 %v2286
    %2371 = vmatprep.subr.bf16.mxu0 0
    %2372 = vmatpush1.bf16.msra.mxu0 %v2283
    %2373 = vmatprep.subr.bf16.mxu0 0
    %2374 = vmatpush1.bf16.msra.mxu0 %v2280
    %2375 = vmatprep.subr.bf16.mxu0 0
    %2376 = vmatpush1.bf16.msra.mxu0 %v2277
    %2377 = vmatprep.subr.bf16.mxu0 0
    %2378 = vmatpush1.bf16.msra.mxu0 %v2274
    %2379 = vmatprep.subr.bf16.mxu0 0
    %2380 = vmatpush2.bf16.msra.mxu0 0
    %2381 = vmatprep.subr.bf16.mxu0 0
    %2382 = vmatpush2.bf16.msra.mxu0 0
    %2383 = vmatprep.subr.bf16.mxu0 0
    %2384 = vmatpush2.bf16.msra.mxu0 0
    %2385 = vmatprep.subr.bf16.mxu0 0
    %2386 = vmatpush2.bf16.msra.mxu0 0
    %2387 = vmatprep.subr.bf16.mxu0 0
    %2388 = vmatpush2.bf16.msra.mxu0 0
    %2389 = vmatprep.subr.bf16.mxu0 0
    %2390 = vmatpush2.bf16.msra.mxu0 0
    %2391 = vmatprep.subr.bf16.mxu0 0
    %2392 = vmatpush2.bf16.msra.mxu0 0
    %2393 = vmatprep.subr.bf16.mxu0 0
    %2394 = vmatpush2.bf16.msra.mxu0 0
    %2395 = vmatprep.mubr.bf16.mxu0 0
    %2396 = vmatmul.mubr.bf16.gmra.mxu0 %v2159
    %v2397 = vpop.f32.mrf.mxu0
    %v2398 = vadd.f32 0.0, %v2397
    %v2399 = vpop.f32.mrf.mxu0
    %v2400 = vpop.f32.mrf.mxu0
    %v2401 = vadd.f32 0.0, %v2400
    %v2402 = vpop.f32.mrf.mxu0
    %2403 = vdwg.mxu0
    %v2404 = vrot.slane %v2355, 7
    %v2405 = vrot.slane %v2359, 7
    %v2406 = vsel %vm1737, %v2404, %v2405
    %v2407 = vsel %vm1737, %v2405, %v2404
    %v2408 = vmul.f32 %v1745, %v2407
    %v2409 = vmul.f32 %v1750, %v2406
    %v2410 = vrot.slane %v2398, 1
    %v2411 = vrot.slane %v2401, 1
    %v2412 = vsel %vm1760, %v2410, %v2411
    %v2413 = vsel %vm1760, %v2411, %v2410
    %v2414 = vmul.f32 %v1768, %v2412
    %v2415 = vmul.f32 %v1773, %v2413
    %v2416 = vadd.f32 %v2357, %v2408
    %v2417 = vadd.f32 %v2361, %v2409
    %v2418 = vadd.f32 %v2416, %v2414
    %v2419 = vadd.f32 %v2417, %v2415
    %v2420 = vld [vmem:[#allocation28] sm:$0x1]
    %v2422 = vlaneseq
    %v2423 = vshrl.u32 %v2422, 7
    %v2424 = vsub.s32 0, %v2423
    %v2425 = vrot.slane %v2420, %v2424
    %v2427 = vadd.f32 %v2418, %v2425
    %v2428 = vadd.f32 %v2419, %v2425
    %v2429 = vmax.f32 %v2427, 0.0
    %v2430 = vmax.f32 %v2428, 0.0
    %v2431 = vrot.slane %v2157, 4
    %v2432 = vadd.f32 %v2157, %v2431
    %v2433 = vrot.slane %v2432, 2
    %v2434 = vadd.f32 %v2432, %v2433
    %v2435 = vrot.slane %v2434, 1
    %v2436 = vadd.f32 %v2434, %v2435
    %v2437 = vrot.slane %v2158, 4
    %v2438 = vadd.f32 %v2158, %v2437
    %v2439 = vrot.slane %v2438, 2
    %v2440 = vadd.f32 %v2438, %v2439
    %v2441 = vrot.slane %v2440, 1
    %v2442 = vadd.f32 %v2440, %v2441
    %v2443 = vmul.f32 %v2436, 0.125
    %v2444 = vmul.f32 %v2442, 0.125
    %v2445 = vrot.slane %v2429, 4
    %v2446 = vadd.f32 %v2429, %v2445
    %v2447 = vrot.slane %v2446, 2
    %v2448 = vadd.f32 %v2446, %v2447
    %v2449 = vrot.slane %v2448, 1
    %v2450 = vadd.f32 %v2448, %v2449
    %v2451 = vrot.slane %v2430, 4
    %v2452 = vadd.f32 %v2430, %v2451
    %v2453 = vrot.slane %v2452, 2
    %v2454 = vadd.f32 %v2452, %v2453
    %v2455 = vrot.slane %v2454, 1
    %v2456 = vadd.f32 %v2454, %v2455
    %v2457 = vmul.f32 %v2450, 0.125
    %v2458 = vmul.f32 %v2456, 0.125
    %v2459 = vmul.f32 %v2443, %v2443
    %v2460 = vmul.f32 %v2444, %v2444
    %v2463 = vsel %vm900, %v2460, %v2459
    %v2465 = vsel %vm1025, %v2463, 0.0
    %2466 = vadd.xlane.f32.xlu0 %v2465
    %v2467 = vpop.xlane.xlu0 %2466
    %v2468 = vmax.f32 %v2467, 1e-24
    %v2469 = vrsqrt.pop %v2468
    %v2471 = vrot.slane %v2469, 1
    %v2474 = vmul.f32 %v2443, %v2469
    %v2475 = vmul.f32 %v2444, %v2471
    %v2476 = vpack.c.bf16 %v2474, %v2474
    %v2477 = vpack.c.bf16 %v2475, %v2475
    %v2478 = vmul.f32 %v580, %v580
    %v2479 = vmul.f32 %v583, %v583
    %v2480 = vmul.f32 %v588, %v588
    %v2481 = vmul.f32 %v591, %v591
    %v2482 = vmul.f32 %v596, %v596
    %v2483 = vmul.f32 %v599, %v599
    %v2484 = vmul.f32 %v604, %v604
    %v2485 = vmul.f32 %v607, %v607
    %v2486 = vmul.f32 %v612, %v612
    %v2487 = vmul.f32 %v615, %v615
    %v2488 = vmul.f32 %v620, %v620
    %v2489 = vmul.f32 %v623, %v623
    %v2490 = vmul.f32 %v628, %v628
    %v2491 = vmul.f32 %v631, %v631
    %v2492 = vmul.f32 %v636, %v636
    %v2493 = vmul.f32 %v639, %v639
    %2494 = vadd.xlane.f32.xlu0 %v2478
    %v2495 = vpop.xlane.xlu0 %2494
    %2496 = vadd.xlane.f32.xlu0 %v2479
    %v2497 = vpop.xlane.xlu0 %2496
    %2498 = vadd.xlane.f32.xlu0 %v2480
    %v2499 = vpop.xlane.xlu0 %2498
    %2500 = vadd.xlane.f32.xlu0 %v2481
    %v2501 = vpop.xlane.xlu0 %2500
    %2502 = vadd.xlane.f32.xlu0 %v2482
    %v2503 = vpop.xlane.xlu0 %2502
    %2504 = vadd.xlane.f32.xlu0 %v2483
    %v2505 = vpop.xlane.xlu0 %2504
    %2506 = vadd.xlane.f32.xlu0 %v2484
    %v2507 = vpop.xlane.xlu0 %2506
    %2508 = vadd.xlane.f32.xlu0 %v2485
    %v2509 = vpop.xlane.xlu0 %2508
    %2510 = vadd.xlane.f32.xlu0 %v2486
    %v2511 = vpop.xlane.xlu0 %2510
    %2512 = vadd.xlane.f32.xlu0 %v2487
    %v2513 = vpop.xlane.xlu0 %2512
    %2514 = vadd.xlane.f32.xlu0 %v2488
    %v2515 = vpop.xlane.xlu0 %2514
    %2516 = vadd.xlane.f32.xlu0 %v2489
    %v2517 = vpop.xlane.xlu0 %2516
    %2518 = vadd.xlane.f32.xlu0 %v2490
    %v2519 = vpop.xlane.xlu0 %2518
    %2520 = vadd.xlane.f32.xlu0 %v2491
    %v2521 = vpop.xlane.xlu0 %2520
    %2522 = vadd.xlane.f32.xlu0 %v2492
    %v2523 = vpop.xlane.xlu0 %2522
    %2524 = vadd.xlane.f32.xlu0 %v2493
    %v2525 = vpop.xlane.xlu0 %2524
    %v2526 = vrsqrt.pop %v2495
    %v2527 = vrsqrt.pop %v2497
    %v2528 = vrsqrt.pop %v2499
    %v2529 = vrsqrt.pop %v2501
    %v2530 = vrsqrt.pop %v2503
    %v2531 = vrsqrt.pop %v2505
    %v2532 = vrsqrt.pop %v2507
    %v2533 = vrsqrt.pop %v2509
    %v2534 = vrsqrt.pop %v2511
    %v2535 = vrsqrt.pop %v2513
    %v2536 = vrsqrt.pop %v2515
    %v2537 = vrsqrt.pop %v2517
    %v2538 = vrsqrt.pop %v2519
    %v2539 = vrsqrt.pop %v2521
    %v2540 = vrsqrt.pop %v2523
    %v2541 = vrsqrt.pop %v2525
    %v2542 = vmul.f32 %v580, %v2526
    %v2543 = vmul.f32 %v583, %v2527
    %v2544 = vmul.f32 %v588, %v2528
    %v2545 = vmul.f32 %v591, %v2529
    %v2546 = vmul.f32 %v596, %v2530
    %v2547 = vmul.f32 %v599, %v2531
    %v2548 = vmul.f32 %v604, %v2532
    %v2549 = vmul.f32 %v607, %v2533
    %v2550 = vmul.f32 %v612, %v2534
    %v2551 = vmul.f32 %v615, %v2535
    %v2552 = vmul.f32 %v620, %v2536
    %v2553 = vmul.f32 %v623, %v2537
    %v2554 = vmul.f32 %v628, %v2538
    %v2555 = vmul.f32 %v631, %v2539
    %v2556 = vmul.f32 %v636, %v2540
    %v2557 = vmul.f32 %v639, %v2541
    %v2558 = vpack.c.bf16 %v2543, %v2542
    %v2559 = vpack.c.bf16 %v2545, %v2544
    %v2560 = vpack.c.bf16 %v2547, %v2546
    %v2561 = vpack.c.bf16 %v2549, %v2548
    %v2562 = vpack.c.bf16 %v2551, %v2550
    %v2563 = vpack.c.bf16 %v2553, %v2552
    %v2564 = vpack.c.bf16 %v2555, %v2554
    %v2565 = vpack.c.bf16 %v2557, %v2556
    %v2568 = vunpack.c.l.b16 %v2476
    %v2569 = vunpack.c.l.b16 %v2477
    %v2570 = vrot.slane %v2569, 7
    %v2571 = vsel %vm900, %v2570, %v2568
    %v2572 = vpack.c.b16 %v2571, %v2571
    %2574 = vmatprep.subr.bf16.mxu0 0
    %2575 = vmatpush1.bf16.xpose.msra.mxu0 %v2565
    %2576 = vmatprep.subr.bf16.mxu0 0
    %2577 = vmatpush1.bf16.xpose.msra.mxu0 %v2564
    %2578 = vmatprep.subr.bf16.mxu0 0
    %2579 = vmatpush1.bf16.xpose.msra.mxu0 %v2563
    %2580 = vmatprep.subr.bf16.mxu0 0
    %2581 = vmatpush1.bf16.xpose.msra.mxu0 %v2562
    %2582 = vmatprep.subr.bf16.mxu0 0
    %2583 = vmatpush1.bf16.xpose.msra.mxu0 %v2561
    %2584 = vmatprep.subr.bf16.mxu0 0
    %2585 = vmatpush1.bf16.xpose.msra.mxu0 %v2560
    %2586 = vmatprep.subr.bf16.mxu0 0
    %2587 = vmatpush1.bf16.xpose.msra.mxu0 %v2559
    %2588 = vmatprep.subr.bf16.mxu0 0
    %2589 = vmatpush1.bf16.xpose.msra.mxu0 %v2558
    %2590 = vmatprep.subr.bf16.mxu0 0
    %2591 = vmatpush2.bf16.xpose.msra.mxu0 0
    %2592 = vmatprep.subr.bf16.mxu0 0
    %2593 = vmatpush2.bf16.xpose.msra.mxu0 0
    %2594 = vmatprep.subr.bf16.mxu0 0
    %2595 = vmatpush2.bf16.xpose.msra.mxu0 0
    %2596 = vmatprep.subr.bf16.mxu0 0
    %2597 = vmatpush2.bf16.xpose.msra.mxu0 0
    %2598 = vmatprep.subr.bf16.mxu0 0
    %2599 = vmatpush2.bf16.xpose.msra.mxu0 0
    %2600 = vmatprep.subr.bf16.mxu0 0
    %2601 = vmatpush2.bf16.xpose.msra.mxu0 0
    %2602 = vmatprep.subr.bf16.mxu0 0
    %2603 = vmatpush2.bf16.xpose.msra.mxu0 0
    %2604 = vmatprep.subr.bf16.mxu0 0
    %2605 = vmatpush2.bf16.xpose.msra.mxu0 0
    %2606 = vmatprep.mubr.bf16.mxu0 0
    %2607 = vmatmul.mubr.bf16.gmra.mxu0 %v2572
    %v2608 = vpop.f32.mrf.mxu0
    %v2609 = vadd.f32 0.0, %v2608
    %v2610 = vpop.f32.mrf.mxu0
    %v2611 = vpop.f32.mrf.mxu0
    %v2612 = vpop.f32.mrf.mxu0
    %2613 = vdwg.mxu0
    %v2614 = vmul.f32 %v2609, 0.5
    %v2615 = vadd.f32 %v2614, 0.5
    %v2616 = vmul.f32 %v1199, %v1199
    %v2617 = vsel %vm1025, %v2616, 0.0
    %2618 = vadd.xlane.f32.xlu0 %v2617
    %v2619 = vpop.xlane.xlu0 %2618
    %v2620 = vmax.f32 %v2619, 1e-24
    %v2621 = vrsqrt.pop %v2620
    %v2622 = vmul.f32 %v1199, %v2621
    %v2623 = vpack.c.bf16 %v2622, %v2622
    %v2624 = vmul.f32 %v772, %v772
    %v2625 = vmul.f32 %v775, %v775
    %v2626 = vmul.f32 %v780, %v780
    %v2627 = vmul.f32 %v783, %v783
    %v2628 = vmul.f32 %v788, %v788
    %v2629 = vmul.f32 %v791, %v791
    %v2630 = vmul.f32 %v796, %v796
    %v2631 = vmul.f32 %v799, %v799
    %v2632 = vmul.f32 %v804, %v804
    %v2633 = vmul.f32 %v807, %v807
    %v2634 = vmul.f32 %v812, %v812
    %v2635 = vmul.f32 %v815, %v815
    %v2636 = vmul.f32 %v820, %v820
    %v2637 = vmul.f32 %v823, %v823
    %v2638 = vmul.f32 %v828, %v828
    %v2639 = vmul.f32 %v831, %v831
    %2640 = vadd.xlane.f32.xlu0 %v2624
    %v2641 = vpop.xlane.xlu0 %2640
    %2642 = vadd.xlane.f32.xlu0 %v2625
    %v2643 = vpop.xlane.xlu0 %2642
    %2644 = vadd.xlane.f32.xlu0 %v2626
    %v2645 = vpop.xlane.xlu0 %2644
    %2646 = vadd.xlane.f32.xlu0 %v2627
    %v2647 = vpop.xlane.xlu0 %2646
    %2648 = vadd.xlane.f32.xlu0 %v2628
    %v2649 = vpop.xlane.xlu0 %2648
    %2650 = vadd.xlane.f32.xlu0 %v2629
    %v2651 = vpop.xlane.xlu0 %2650
    %2652 = vadd.xlane.f32.xlu0 %v2630
    %v2653 = vpop.xlane.xlu0 %2652
    %2654 = vadd.xlane.f32.xlu0 %v2631
    %v2655 = vpop.xlane.xlu0 %2654
    %2656 = vadd.xlane.f32.xlu0 %v2632
    %v2657 = vpop.xlane.xlu0 %2656
    %2658 = vadd.xlane.f32.xlu0 %v2633
    %v2659 = vpop.xlane.xlu0 %2658
    %2660 = vadd.xlane.f32.xlu0 %v2634
    %v2661 = vpop.xlane.xlu0 %2660
    %2662 = vadd.xlane.f32.xlu0 %v2635
    %v2663 = vpop.xlane.xlu0 %2662
    %2664 = vadd.xlane.f32.xlu0 %v2636
    %v2665 = vpop.xlane.xlu0 %2664
    %2666 = vadd.xlane.f32.xlu0 %v2637
    %v2667 = vpop.xlane.xlu0 %2666
    %2668 = vadd.xlane.f32.xlu0 %v2638
    %v2669 = vpop.xlane.xlu0 %2668
    %2670 = vadd.xlane.f32.xlu0 %v2639
    %v2671 = vpop.xlane.xlu0 %2670
    %v2672 = vrsqrt.pop %v2641
    %v2673 = vrsqrt.pop %v2643
    %v2674 = vrsqrt.pop %v2645
    %v2675 = vrsqrt.pop %v2647
    %v2676 = vrsqrt.pop %v2649
    %v2677 = vrsqrt.pop %v2651
    %v2678 = vrsqrt.pop %v2653
    %v2679 = vrsqrt.pop %v2655
    %v2680 = vrsqrt.pop %v2657
    %v2681 = vrsqrt.pop %v2659
    %v2682 = vrsqrt.pop %v2661
    %v2683 = vrsqrt.pop %v2663
    %v2684 = vrsqrt.pop %v2665
    %v2685 = vrsqrt.pop %v2667
    %v2686 = vrsqrt.pop %v2669
    %v2687 = vrsqrt.pop %v2671
    %v2688 = vmul.f32 %v772, %v2672
    %v2689 = vmul.f32 %v775, %v2673
    %v2690 = vmul.f32 %v780, %v2674
    %v2691 = vmul.f32 %v783, %v2675
    %v2692 = vmul.f32 %v788, %v2676
    %v2693 = vmul.f32 %v791, %v2677
    %v2694 = vmul.f32 %v796, %v2678
    %v2695 = vmul.f32 %v799, %v2679
    %v2696 = vmul.f32 %v804, %v2680
    %v2697 = vmul.f32 %v807, %v2681
    %v2698 = vmul.f32 %v812, %v2682
    %v2699 = vmul.f32 %v815, %v2683
    %v2700 = vmul.f32 %v820, %v2684
    %v2701 = vmul.f32 %v823, %v2685
    %v2702 = vmul.f32 %v828, %v2686
    %v2703 = vmul.f32 %v831, %v2687
    %v2704 = vpack.c.bf16 %v2689, %v2688
    %v2705 = vpack.c.bf16 %v2691, %v2690
    %v2706 = vpack.c.bf16 %v2693, %v2692
    %v2707 = vpack.c.bf16 %v2695, %v2694
    %v2708 = vpack.c.bf16 %v2697, %v2696
    %v2709 = vpack.c.bf16 %v2699, %v2698
    %v2710 = vpack.c.bf16 %v2701, %v2700
    %v2711 = vpack.c.bf16 %v2703, %v2702
    %2712 = vmatprep.subr.bf16.mxu0 0
    %2713 = vmatpush1.bf16.xpose.msra.mxu0 %v2711
    %2714 = vmatprep.subr.bf16.mxu0 0
    %2715 = vmatpush1.bf16.xpose.msra.mxu0 %v2710
    %2716 = vmatprep.subr.bf16.mxu0 0
    %2717 = vmatpush1.bf16.xpose.msra.mxu0 %v2709
    %2718 = vmatprep.subr.bf16.mxu0 0
    %2719 = vmatpush1.bf16.xpose.msra.mxu0 %v2708
    %2720 = vmatprep.subr.bf16.mxu0 0
    %2721 = vmatpush1.bf16.xpose.msra.mxu0 %v2707
    %2722 = vmatprep.subr.bf16.mxu0 0
    %2723 = vmatpush1.bf16.xpose.msra.mxu0 %v2706
    %2724 = vmatprep.subr.bf16.mxu0 0
    %2725 = vmatpush1.bf16.xpose.msra.mxu0 %v2705
    %2726 = vmatprep.subr.bf16.mxu0 0
    %2727 = vmatpush1.bf16.xpose.msra.mxu0 %v2704
    %2728 = vmatprep.subr.bf16.mxu0 0
    %2729 = vmatpush2.bf16.xpose.msra.mxu0 0
    %2730 = vmatprep.subr.bf16.mxu0 0
    %2731 = vmatpush2.bf16.xpose.msra.mxu0 0
    %2732 = vmatprep.subr.bf16.mxu0 0
    %2733 = vmatpush2.bf16.xpose.msra.mxu0 0
    %2734 = vmatprep.subr.bf16.mxu0 0
    %2735 = vmatpush2.bf16.xpose.msra.mxu0 0
    %2736 = vmatprep.subr.bf16.mxu0 0
    %2737 = vmatpush2.bf16.xpose.msra.mxu0 0
    %2738 = vmatprep.subr.bf16.mxu0 0
    %2739 = vmatpush2.bf16.xpose.msra.mxu0 0
    %2740 = vmatprep.subr.bf16.mxu0 0
    %2741 = vmatpush2.bf16.xpose.msra.mxu0 0
    %2742 = vmatprep.subr.bf16.mxu0 0
    %2743 = vmatpush2.bf16.xpose.msra.mxu0 0
    %2744 = vmatprep.mubr.bf16.mxu0 0
    %2745 = vmatmul.mubr.bf16.gmra.mxu0 %v2623
    %v2746 = vpop.f32.mrf.mxu0
    %v2747 = vadd.f32 0.0, %v2746
    %v2748 = vpop.f32.mrf.mxu0
    %v2749 = vpop.f32.mrf.mxu0
    %v2750 = vpop.f32.mrf.mxu0
    %2751 = vdwg.mxu0
    %v2752 = vmul.f32 %v2747, 0.5
    %v2753 = vadd.f32 %v2752, 0.5
    %v2754 = vmax.f32 %v2495, 1e-24
    %v2755 = vmax.f32 %v2497, 1e-24
    %v2756 = vmax.f32 %v2499, 1e-24
    %v2757 = vmax.f32 %v2501, 1e-24
    %v2758 = vmax.f32 %v2503, 1e-24
    %v2759 = vmax.f32 %v2505, 1e-24
    %v2760 = vmax.f32 %v2507, 1e-24
    %v2761 = vmax.f32 %v2509, 1e-24
    %v2762 = vmax.f32 %v2511, 1e-24
    %v2763 = vmax.f32 %v2513, 1e-24
    %v2764 = vmax.f32 %v2515, 1e-24
    %v2765 = vmax.f32 %v2517, 1e-24
    %v2766 = vmax.f32 %v2519, 1e-24
    %v2767 = vmax.f32 %v2521, 1e-24
    %v2768 = vmax.f32 %v2523, 1e-24
    %v2769 = vmax.f32 %v2525, 1e-24
    %v2770 = vrsqrt.pop %v2754
    %v2771 = vrsqrt.pop %v2755
    %v2772 = vrsqrt.pop %v2756
    %v2773 = vrsqrt.pop %v2757
    %v2774 = vrsqrt.pop %v2758
    %v2775 = vrsqrt.pop %v2759
    %v2776 = vrsqrt.pop %v2760
    %v2777 = vrsqrt.pop %v2761
    %v2778 = vrsqrt.pop %v2762
    %v2779 = vrsqrt.pop %v2763
    %v2780 = vrsqrt.pop %v2764
    %v2781 = vrsqrt.pop %v2765
    %v2782 = vrsqrt.pop %v2766
    %v2783 = vrsqrt.pop %v2767
    %v2784 = vrsqrt.pop %v2768
    %v2785 = vrsqrt.pop %v2769
    %v2786 = vmul.f32 %v580, %v2770
    %v2787 = vmul.f32 %v583, %v2771
    %v2788 = vmul.f32 %v588, %v2772
    %v2789 = vmul.f32 %v591, %v2773
    %v2790 = vmul.f32 %v596, %v2774
    %v2791 = vmul.f32 %v599, %v2775
    %v2792 = vmul.f32 %v604, %v2776
    %v2793 = vmul.f32 %v607, %v2777
    %v2794 = vmul.f32 %v612, %v2778
    %v2795 = vmul.f32 %v615, %v2779
    %v2796 = vmul.f32 %v620, %v2780
    %v2797 = vmul.f32 %v623, %v2781
    %v2798 = vmul.f32 %v628, %v2782
    %v2799 = vmul.f32 %v631, %v2783
    %v2800 = vmul.f32 %v636, %v2784
    %v2801 = vmul.f32 %v639, %v2785
    %v2802 = vpack.c.bf16 %v2787, %v2786
    %v2803 = vpack.c.bf16 %v2789, %v2788
    %v2804 = vpack.c.bf16 %v2791, %v2790
    %v2805 = vpack.c.bf16 %v2793, %v2792
    %v2806 = vpack.c.bf16 %v2795, %v2794
    %v2807 = vpack.c.bf16 %v2797, %v2796
    %v2808 = vpack.c.bf16 %v2799, %v2798
    %v2809 = vpack.c.bf16 %v2801, %v2800
    %v2810 = vmax.f32 %v2641, 1e-24
    %v2811 = vmax.f32 %v2643, 1e-24
    %v2812 = vmax.f32 %v2645, 1e-24
    %v2813 = vmax.f32 %v2647, 1e-24
    %v2814 = vmax.f32 %v2649, 1e-24
    %v2815 = vmax.f32 %v2651, 1e-24
    %v2816 = vmax.f32 %v2653, 1e-24
    %v2817 = vmax.f32 %v2655, 1e-24
    %v2818 = vmax.f32 %v2657, 1e-24
    %v2819 = vmax.f32 %v2659, 1e-24
    %v2820 = vmax.f32 %v2661, 1e-24
    %v2821 = vmax.f32 %v2663, 1e-24
    %v2822 = vmax.f32 %v2665, 1e-24
    %v2823 = vmax.f32 %v2667, 1e-24
    %v2824 = vmax.f32 %v2669, 1e-24
    %v2825 = vmax.f32 %v2671, 1e-24
    %v2826 = vrsqrt.pop %v2810
    %v2827 = vrsqrt.pop %v2811
    %v2828 = vrsqrt.pop %v2812
    %v2829 = vrsqrt.pop %v2813
    %v2830 = vrsqrt.pop %v2814
    %v2831 = vrsqrt.pop %v2815
    %v2832 = vrsqrt.pop %v2816
    %v2833 = vrsqrt.pop %v2817
    %v2834 = vrsqrt.pop %v2818
    %v2835 = vrsqrt.pop %v2819
    %v2836 = vrsqrt.pop %v2820
    %v2837 = vrsqrt.pop %v2821
    %v2838 = vrsqrt.pop %v2822
    %v2839 = vrsqrt.pop %v2823
    %v2840 = vrsqrt.pop %v2824
    %v2841 = vrsqrt.pop %v2825
    %v2842 = vmul.f32 %v772, %v2826
    %v2843 = vmul.f32 %v775, %v2827
    %v2844 = vmul.f32 %v780, %v2828
    %v2845 = vmul.f32 %v783, %v2829
    %v2846 = vmul.f32 %v788, %v2830
    %v2847 = vmul.f32 %v791, %v2831
    %v2848 = vmul.f32 %v796, %v2832
    %v2849 = vmul.f32 %v799, %v2833
    %v2850 = vmul.f32 %v804, %v2834
    %v2851 = vmul.f32 %v807, %v2835
    %v2852 = vmul.f32 %v812, %v2836
    %v2853 = vmul.f32 %v815, %v2837
    %v2854 = vmul.f32 %v820, %v2838
    %v2855 = vmul.f32 %v823, %v2839
    %v2856 = vmul.f32 %v828, %v2840
    %v2857 = vmul.f32 %v831, %v2841
    %v2858 = vpack.c.bf16 %v2843, %v2842
    %v2859 = vpack.c.bf16 %v2845, %v2844
    %v2860 = vpack.c.bf16 %v2847, %v2846
    %v2861 = vpack.c.bf16 %v2849, %v2848
    %v2862 = vpack.c.bf16 %v2851, %v2850
    %v2863 = vpack.c.bf16 %v2853, %v2852
    %v2864 = vpack.c.bf16 %v2855, %v2854
    %v2865 = vpack.c.bf16 %v2857, %v2856
    %v2866 = vpack.c.bf16 %v2457, %v2457
    %v2867 = vpack.c.bf16 %v2458, %v2458
    %v2868 = vld [vmem:[#allocation29] sm:$0xf]
    %v2869 = vld [vmem:[#allocation29 + $0x4] sm:$0xf]
    %v2870 = vld [vmem:[#allocation29 + $0x8] sm:$0xf]
    %v2871 = vld [vmem:[#allocation29 + $0xc] sm:$0xf]
    %v2872 = vld [vmem:[#allocation29 + $0x10] sm:$0xf]
    %v2873 = vld [vmem:[#allocation29 + $0x14] sm:$0xf]
    %v2874 = vld [vmem:[#allocation29 + $0x18] sm:$0xf]
    %v2875 = vld [vmem:[#allocation29 + $0x1c] sm:$0xf]
    %v2876 = vld [vmem:[#allocation29 + $0x20] sm:$0xf]
    %v2877 = vld [vmem:[#allocation29 + $0x24] sm:$0xf]
    %v2878 = vld [vmem:[#allocation29 + $0x28] sm:$0xf]
    %v2879 = vld [vmem:[#allocation29 + $0x2c] sm:$0xf]
    %v2880 = vld [vmem:[#allocation29 + $0x30] sm:$0xf]
    %v2881 = vld [vmem:[#allocation29 + $0x34] sm:$0xf]
    %v2882 = vld [vmem:[#allocation29 + $0x38] sm:$0xf]
    %v2883 = vld [vmem:[#allocation29 + $0x3c] sm:$0xf]
    %v2886 = vunpack.c.l.b16 %v2866
    %v2887 = vunpack.c.l.b16 %v2867
    %v2888 = vsel %vm900, %v2887, %v2886
    %v2889 = vpack.c.b16 %v2888, %v2888
    %v2907 = vunpack.c.l.b16 %v2868
    %v2908 = vunpack.c.l.b16 %v2869
    %v2909 = vunpack.c.l.b16 %v2870
    %v2910 = vunpack.c.l.b16 %v2871
    %v2911 = vunpack.c.l.b16 %v2872
    %v2912 = vunpack.c.l.b16 %v2873
    %v2913 = vunpack.c.l.b16 %v2874
    %v2914 = vunpack.c.l.b16 %v2875
    %v2915 = vunpack.c.l.b16 %v2876
    %v2916 = vunpack.c.l.b16 %v2877
    %v2917 = vunpack.c.l.b16 %v2878
    %v2918 = vunpack.c.l.b16 %v2879
    %v2919 = vunpack.c.l.b16 %v2880
    %v2920 = vunpack.c.l.b16 %v2881
    %v2921 = vunpack.c.l.b16 %v2882
    %v2922 = vunpack.c.l.b16 %v2883
    %v2923 = vpack.c.b16 %v2908, %v2907
    %v2924 = vpack.c.b16 %v2910, %v2909
    %v2925 = vpack.c.b16 %v2912, %v2911
    %v2926 = vpack.c.b16 %v2914, %v2913
    %v2927 = vpack.c.b16 %v2916, %v2915
    %v2928 = vpack.c.b16 %v2918, %v2917
    %v2929 = vpack.c.b16 %v2920, %v2919
    %v2930 = vpack.c.b16 %v2922, %v2921
    %2939 = vmatprep.subr.bf16.mxu0 0
    %2940 = vmatpush1.bf16.msra.mxu0 %v2930
    %2941 = vmatprep.subr.bf16.mxu0 0
    %2942 = vmatpush1.bf16.msra.mxu0 %v2929
    %2943 = vmatprep.subr.bf16.mxu0 0
    %2944 = vmatpush1.bf16.msra.mxu0 %v2928
    %2945 = vmatprep.subr.bf16.mxu0 0
    %2946 = vmatpush1.bf16.msra.mxu0 %v2927
    %2947 = vmatprep.subr.bf16.mxu0 0
    %2948 = vmatpush1.bf16.msra.mxu0 %v2926
    %2949 = vmatprep.subr.bf16.mxu0 0
    %2950 = vmatpush1.bf16.msra.mxu0 %v2925
    %2951 = vmatprep.subr.bf16.mxu0 0
    %2952 = vmatpush1.bf16.msra.mxu0 %v2924
    %2953 = vmatprep.subr.bf16.mxu0 0
    %2954 = vmatpush1.bf16.msra.mxu0 %v2923
    %2955 = vmatprep.subr.bf16.mxu0 0
    %2956 = vmatpush2.bf16.msra.mxu0 0
    %2957 = vmatprep.subr.bf16.mxu0 0
    %2958 = vmatpush2.bf16.msra.mxu0 0
    %2959 = vmatprep.subr.bf16.mxu0 0
    %2960 = vmatpush2.bf16.msra.mxu0 0
    %2961 = vmatprep.subr.bf16.mxu0 0
    %2962 = vmatpush2.bf16.msra.mxu0 0
    %2963 = vmatprep.subr.bf16.mxu0 0
    %2964 = vmatpush2.bf16.msra.mxu0 0
    %2965 = vmatprep.subr.bf16.mxu0 0
    %2966 = vmatpush2.bf16.msra.mxu0 0
    %2967 = vmatprep.subr.bf16.mxu0 0
    %2968 = vmatpush2.bf16.msra.mxu0 0
    %2969 = vmatprep.subr.bf16.mxu0 0
    %2970 = vmatpush2.bf16.msra.mxu0 0
    %2971 = vmatprep.mubr.bf16.mxu0 0
    %2972 = vmatmul.mubr.bf16.gmra.mxu0 %v2889
    %v2973 = vpop.f32.mrf.mxu0
    %v2974 = vadd.f32 0.0, %v2973
    %v2975 = vpop.f32.mrf.mxu0
    %v2976 = vpop.f32.mrf.mxu0
    %v2977 = vpop.f32.mrf.mxu0
    %2978 = vdwg.mxu0
    %v2979 = vld [vmem:[#allocation31] sm:$0xf]
    %v2980 = vld [vmem:[#allocation31 + $0x4] sm:$0xf]
    %v2981 = vld [vmem:[#allocation31 + $0x8] sm:$0xf]
    %v2982 = vld [vmem:[#allocation31 + $0xc] sm:$0xf]
    %v2983 = vld [vmem:[#allocation31 + $0x10] sm:$0xf]
    %v2984 = vld [vmem:[#allocation31 + $0x14] sm:$0xf]
    %v2985 = vld [vmem:[#allocation31 + $0x18] sm:$0xf]
    %v2986 = vld [vmem:[#allocation31 + $0x1c] sm:$0xf]
    %v2987 = vld [vmem:[#allocation31 + $0x20] sm:$0xf]
    %v2988 = vld [vmem:[#allocation31 + $0x24] sm:$0xf]
    %v2989 = vld [vmem:[#allocation31 + $0x28] sm:$0xf]
    %v2990 = vld [vmem:[#allocation31 + $0x2c] sm:$0xf]
    %v2991 = vld [vmem:[#allocation31 + $0x30] sm:$0xf]
    %v2992 = vld [vmem:[#allocation31 + $0x34] sm:$0xf]
    %v2993 = vld [vmem:[#allocation31 + $0x38] sm:$0xf]
    %v2994 = vld [vmem:[#allocation31 + $0x3c] sm:$0xf]
    %v2995 = vld [vmem:[#allocation32] sm:$0x1]
    %v2997 = vlaneseq
    %v2998 = vshrl.u32 %v2997, 7
    %v2999 = vsub.s32 0, %v2998
    %v3000 = vrot.slane %v2995, %v2999
    %v3018 = vunpack.c.l.b16 %v2979
    %v3019 = vunpack.c.l.b16 %v2980
    %v3020 = vunpack.c.l.b16 %v2981
    %v3021 = vunpack.c.l.b16 %v2982
    %v3022 = vunpack.c.l.b16 %v2983
    %v3023 = vunpack.c.l.b16 %v2984
    %v3024 = vunpack.c.l.b16 %v2985
    %v3025 = vunpack.c.l.b16 %v2986
    %v3026 = vunpack.c.l.b16 %v2987
    %v3027 = vunpack.c.l.b16 %v2988
    %v3028 = vunpack.c.l.b16 %v2989
    %v3029 = vunpack.c.l.b16 %v2990
    %v3030 = vunpack.c.l.b16 %v2991
    %v3031 = vunpack.c.l.b16 %v2992
    %v3032 = vunpack.c.l.b16 %v2993
    %v3033 = vunpack.c.l.b16 %v2994
    %v3034 = vpack.c.b16 %v3019, %v3018
    %v3035 = vpack.c.b16 %v3021, %v3020
    %v3036 = vpack.c.b16 %v3023, %v3022
    %v3037 = vpack.c.b16 %v3025, %v3024
    %v3038 = vpack.c.b16 %v3027, %v3026
    %v3039 = vpack.c.b16 %v3029, %v3028
    %v3040 = vpack.c.b16 %v3031, %v3030
    %v3041 = vpack.c.b16 %v3033, %v3032
    %3050 = vmatprep.subr.bf16.mxu0 0
    %3051 = vmatpush1.bf16.msra.mxu0 %v3041
    %3052 = vmatprep.subr.bf16.mxu0 0
    %3053 = vmatpush1.bf16.msra.mxu0 %v3040
    %3054 = vmatprep.subr.bf16.mxu0 0
    %3055 = vmatpush1.bf16.msra.mxu0 %v3039
    %3056 = vmatprep.subr.bf16.mxu0 0
    %3057 = vmatpush1.bf16.msra.mxu0 %v3038
    %3058 = vmatprep.subr.bf16.mxu0 0
    %3059 = vmatpush1.bf16.msra.mxu0 %v3037
    %3060 = vmatprep.subr.bf16.mxu0 0
    %3061 = vmatpush1.bf16.msra.mxu0 %v3036
    %3062 = vmatprep.subr.bf16.mxu0 0
    %3063 = vmatpush1.bf16.msra.mxu0 %v3035
    %3064 = vmatprep.subr.bf16.mxu0 0
    %3065 = vmatpush1.bf16.msra.mxu0 %v3034
    %3066 = vmatprep.subr.bf16.mxu0 0
    %3067 = vmatpush2.bf16.msra.mxu0 0
    %3068 = vmatprep.subr.bf16.mxu0 0
    %3069 = vmatpush2.bf16.msra.mxu0 0
    %3070 = vmatprep.subr.bf16.mxu0 0
    %3071 = vmatpush2.bf16.msra.mxu0 0
    %3072 = vmatprep.subr.bf16.mxu0 0
    %3073 = vmatpush2.bf16.msra.mxu0 0
    %3074 = vmatprep.subr.bf16.mxu0 0
    %3075 = vmatpush2.bf16.msra.mxu0 0
    %3076 = vmatprep.subr.bf16.mxu0 0
    %3077 = vmatpush2.bf16.msra.mxu0 0
    %3078 = vmatprep.subr.bf16.mxu0 0
    %3079 = vmatpush2.bf16.msra.mxu0 0
    %3080 = vmatprep.subr.bf16.mxu0 0
    %3081 = vmatpush2.bf16.msra.mxu0 0
    %3082 = vmatprep.mubr.bf16.mxu0 0
    %3083 = vmatmul.mubr.bf16.gmra.mxu0 %v842
    %v3084 = vpop.f32.mrf.mxu0
    %v3085 = vadd.f32 %v3000, %v3084
    %v3086 = vpop.f32.mrf.mxu0
    %v3087 = vpop.f32.mrf.mxu0
    %v3088 = vadd.f32 %v3000, %v3087
    %v3089 = vpop.f32.mrf.mxu0
    %3090 = vmatprep.mubr.bf16.mxu0 0
    %3091 = vmatmul.mubr.bf16.gmra.mxu0 %v843
    %v3092 = vpop.f32.mrf.mxu0
    %v3093 = vadd.f32 %v3000, %v3092
    %v3094 = vpop.f32.mrf.mxu0
    %v3095 = vpop.f32.mrf.mxu0
    %v3096 = vadd.f32 %v3000, %v3095
    %v3097 = vpop.f32.mrf.mxu0
    %3098 = vmatprep.mubr.bf16.mxu0 0
    %3099 = vmatmul.mubr.bf16.gmra.mxu0 %v844
    %v3100 = vpop.f32.mrf.mxu0
    %v3101 = vadd.f32 %v3000, %v3100
    %v3102 = vpop.f32.mrf.mxu0
    %v3103 = vpop.f32.mrf.mxu0
    %v3104 = vadd.f32 %v3000, %v3103
    %v3105 = vpop.f32.mrf.mxu0
    %3106 = vmatprep.mubr.bf16.mxu0 0
    %3107 = vmatmul.mubr.bf16.gmra.mxu0 %v845
    %v3108 = vpop.f32.mrf.mxu0
    %v3109 = vadd.f32 %v3000, %v3108
    %v3110 = vpop.f32.mrf.mxu0
    %v3111 = vpop.f32.mrf.mxu0
    %v3112 = vadd.f32 %v3000, %v3111
    %v3113 = vpop.f32.mrf.mxu0
    %3114 = vmatprep.mubr.bf16.mxu0 0
    %3115 = vmatmul.mubr.bf16.gmra.mxu0 %v846
    %v3116 = vpop.f32.mrf.mxu0
    %v3117 = vadd.f32 %v3000, %v3116
    %v3118 = vpop.f32.mrf.mxu0
    %v3119 = vpop.f32.mrf.mxu0
    %v3120 = vadd.f32 %v3000, %v3119
    %v3121 = vpop.f32.mrf.mxu0
    %3122 = vmatprep.mubr.bf16.mxu0 0
    %3123 = vmatmul.mubr.bf16.gmra.mxu0 %v847
    %v3124 = vpop.f32.mrf.mxu0
    %v3125 = vadd.f32 %v3000, %v3124
    %v3126 = vpop.f32.mrf.mxu0
    %v3127 = vpop.f32.mrf.mxu0
    %v3128 = vadd.f32 %v3000, %v3127
    %v3129 = vpop.f32.mrf.mxu0
    %3130 = vmatprep.mubr.bf16.mxu0 0
    %3131 = vmatmul.mubr.bf16.gmra.mxu0 %v848
    %v3132 = vpop.f32.mrf.mxu0
    %v3133 = vadd.f32 %v3000, %v3132
    %v3134 = vpop.f32.mrf.mxu0
    %v3135 = vpop.f32.mrf.mxu0
    %v3136 = vadd.f32 %v3000, %v3135
    %v3137 = vpop.f32.mrf.mxu0
    %3138 = vmatprep.mubr.bf16.mxu0 0
    %3139 = vmatmul.mubr.bf16.gmra.mxu0 %v849
    %v3140 = vpop.f32.mrf.mxu0
    %v3141 = vadd.f32 %v3000, %v3140
    %v3142 = vpop.f32.mrf.mxu0
    %v3143 = vpop.f32.mrf.mxu0
    %v3144 = vadd.f32 %v3000, %v3143
    %v3145 = vpop.f32.mrf.mxu0
    %3146 = vdwg.mxu0
    %v3149 = vunpack.c.l.s4 1966171168
    %v3150 = vunpack.c.0.s8 %v3149
    %v3151 = vlaneseq
    %v3152 = vshrl.u32 %v3151, 7
    %v3153 = vsub.s32 %v3150, %v3152
    %v3154 = vrot.slane %v2974, %v3153
    %v3155 = vcombine.high %v3154, %v3154
    %v3157 = vunpack.c.l.s4 1966171168
    %v3158 = vunpack.c.0.s8 %v3157
    %v3159 = vlaneseq
    %v3160 = vshrl.u32 %v3159, 7
    %v3161 = vsub.s32 %v3158, %v3160
    %v3162 = vrot.slane %v3154, %v3161
    %v3164 = vunpack.c.l.s4 1966171168
    %v3165 = vunpack.c.0.s8 %v3164
    %v3166 = vlaneseq
    %v3167 = vshrl.u32 %v3166, 7
    %v3168 = vsub.s32 %v3165, %v3167
    %v3169 = vrot.slane %v3155, %v3168
    %v3170 = vlaneseq
    %v3171 = vshrl.u32 %v3170, 7
    %v3172 = vsub.s32 0, %v3171
    %v3173 = vrot.slane %v3162, %v3172
    %v3174 = vlaneseq
    %v3175 = vshrl.u32 %v3174, 7
    %v3176 = vsub.s32 0, %v3175
    %v3177 = vrot.slane %v3169, %v3176
    %v3180 = vadd.f32 %v3173, %v3085
    %v3181 = vadd.f32 %v3173, %v3088
    %v3182 = vadd.f32 %v3173, %v3093
    %v3183 = vadd.f32 %v3173, %v3096
    %v3184 = vadd.f32 %v3173, %v3101
    %v3185 = vadd.f32 %v3173, %v3104
    %v3186 = vadd.f32 %v3173, %v3109
    %v3187 = vadd.f32 %v3173, %v3112
    %v3188 = vadd.f32 %v3173, %v3117
    %v3189 = vadd.f32 %v3173, %v3120
    %v3190 = vadd.f32 %v3173, %v3125
    %v3191 = vadd.f32 %v3173, %v3128
    %v3192 = vadd.f32 %v3173, %v3133
    %v3193 = vadd.f32 %v3173, %v3136
    %v3194 = vadd.f32 %v3173, %v3141
    %v3195 = vadd.f32 %v3173, %v3144
    %v3196 = vadd.f32 %v3177, %v3085
    %v3197 = vadd.f32 %v3177, %v3088
    %v3198 = vadd.f32 %v3177, %v3093
    %v3199 = vadd.f32 %v3177, %v3096
    %v3200 = vadd.f32 %v3177, %v3101
    %v3201 = vadd.f32 %v3177, %v3104
    %v3202 = vadd.f32 %v3177, %v3109
    %v3203 = vadd.f32 %v3177, %v3112
    %v3204 = vadd.f32 %v3177, %v3117
    %v3205 = vadd.f32 %v3177, %v3120
    %v3206 = vadd.f32 %v3177, %v3125
    %v3207 = vadd.f32 %v3177, %v3128
    %v3208 = vadd.f32 %v3177, %v3133
    %v3209 = vadd.f32 %v3177, %v3136
    %v3210 = vadd.f32 %v3177, %v3141
    %v3211 = vadd.f32 %v3177, %v3144
    %v3212 = vmul.f32 %v3180, %v3180
    %v3213 = vmul.f32 %v3181, %v3181
    %v3214 = vmul.f32 %v3182, %v3182
    %v3215 = vmul.f32 %v3183, %v3183
    %v3216 = vmul.f32 %v3184, %v3184
    %v3217 = vmul.f32 %v3185, %v3185
    %v3218 = vmul.f32 %v3186, %v3186
    %v3219 = vmul.f32 %v3187, %v3187
    %v3220 = vmul.f32 %v3188, %v3188
    %v3221 = vmul.f32 %v3189, %v3189
    %v3222 = vmul.f32 %v3190, %v3190
    %v3223 = vmul.f32 %v3191, %v3191
    %v3224 = vmul.f32 %v3192, %v3192
    %v3225 = vmul.f32 %v3193, %v3193
    %v3226 = vmul.f32 %v3194, %v3194
    %v3227 = vmul.f32 %v3195, %v3195
    %v3228 = vmul.f32 %v3196, %v3196
    %v3229 = vmul.f32 %v3197, %v3197
    %v3230 = vmul.f32 %v3198, %v3198
    %v3231 = vmul.f32 %v3199, %v3199
    %v3232 = vmul.f32 %v3200, %v3200
    %v3233 = vmul.f32 %v3201, %v3201
    %v3234 = vmul.f32 %v3202, %v3202
    %v3235 = vmul.f32 %v3203, %v3203
    %v3236 = vmul.f32 %v3204, %v3204
    %v3237 = vmul.f32 %v3205, %v3205
    %v3238 = vmul.f32 %v3206, %v3206
    %v3239 = vmul.f32 %v3207, %v3207
    %v3240 = vmul.f32 %v3208, %v3208
    %v3241 = vmul.f32 %v3209, %v3209
    %v3242 = vmul.f32 %v3210, %v3210
    %v3243 = vmul.f32 %v3211, %v3211
    %3244 = vadd.xlane.f32.xlu0 %v3212
    %v3245 = vpop.xlane.xlu0 %3244
    %3246 = vadd.xlane.f32.xlu0 %v3213
    %v3247 = vpop.xlane.xlu0 %3246
    %3248 = vadd.xlane.f32.xlu0 %v3214
    %v3249 = vpop.xlane.xlu0 %3248
    %3250 = vadd.xlane.f32.xlu0 %v3215
    %v3251 = vpop.xlane.xlu0 %3250
    %3252 = vadd.xlane.f32.xlu0 %v3216
    %v3253 = vpop.xlane.xlu0 %3252
    %3254 = vadd.xlane.f32.xlu0 %v3217
    %v3255 = vpop.xlane.xlu0 %3254
    %3256 = vadd.xlane.f32.xlu0 %v3218
    %v3257 = vpop.xlane.xlu0 %3256
    %3258 = vadd.xlane.f32.xlu0 %v3219
    %v3259 = vpop.xlane.xlu0 %3258
    %3260 = vadd.xlane.f32.xlu0 %v3220
    %v3261 = vpop.xlane.xlu0 %3260
    %3262 = vadd.xlane.f32.xlu0 %v3221
    %v3263 = vpop.xlane.xlu0 %3262
    %3264 = vadd.xlane.f32.xlu0 %v3222
    %v3265 = vpop.xlane.xlu0 %3264
    %3266 = vadd.xlane.f32.xlu0 %v3223
    %v3267 = vpop.xlane.xlu0 %3266
    %3268 = vadd.xlane.f32.xlu0 %v3224
    %v3269 = vpop.xlane.xlu0 %3268
    %3270 = vadd.xlane.f32.xlu0 %v3225
    %v3271 = vpop.xlane.xlu0 %3270
    %3272 = vadd.xlane.f32.xlu0 %v3226
    %v3273 = vpop.xlane.xlu0 %3272
    %3274 = vadd.xlane.f32.xlu0 %v3227
    %v3275 = vpop.xlane.xlu0 %3274
    %3276 = vadd.xlane.f32.xlu0 %v3228
    %v3277 = vpop.xlane.xlu0 %3276
    %3278 = vadd.xlane.f32.xlu0 %v3229
    %v3279 = vpop.xlane.xlu0 %3278
    %3280 = vadd.xlane.f32.xlu0 %v3230
    %v3281 = vpop.xlane.xlu0 %3280
    %3282 = vadd.xlane.f32.xlu0 %v3231
    %v3283 = vpop.xlane.xlu0 %3282
    %3284 = vadd.xlane.f32.xlu0 %v3232
    %v3285 = vpop.xlane.xlu0 %3284
    %3286 = vadd.xlane.f32.xlu0 %v3233
    %v3287 = vpop.xlane.xlu0 %3286
    %3288 = vadd.xlane.f32.xlu0 %v3234
    %v3289 = vpop.xlane.xlu0 %3288
    %3290 = vadd.xlane.f32.xlu0 %v3235
    %v3291 = vpop.xlane.xlu0 %3290
    %3292 = vadd.xlane.f32.xlu0 %v3236
    %v3293 = vpop.xlane.xlu0 %3292
    %3294 = vadd.xlane.f32.xlu0 %v3237
    %v3295 = vpop.xlane.xlu0 %3294
    %3296 = vadd.xlane.f32.xlu0 %v3238
    %v3297 = vpop.xlane.xlu0 %3296
    %3298 = vadd.xlane.f32.xlu0 %v3239
    %v3299 = vpop.xlane.xlu0 %3298
    %3300 = vadd.xlane.f32.xlu0 %v3240
    %v3301 = vpop.xlane.xlu0 %3300
    %3302 = vadd.xlane.f32.xlu0 %v3241
    %v3303 = vpop.xlane.xlu0 %3302
    %3304 = vadd.xlane.f32.xlu0 %v3242
    %v3305 = vpop.xlane.xlu0 %3304
    %3306 = vadd.xlane.f32.xlu0 %v3243
    %v3307 = vpop.xlane.xlu0 %3306
    %v3308 = vmax.f32 %v3245, 1e-24
    %v3309 = vmax.f32 %v3247, 1e-24
    %v3310 = vmax.f32 %v3249, 1e-24
    %v3311 = vmax.f32 %v3251, 1e-24
    %v3312 = vmax.f32 %v3253, 1e-24
    %v3313 = vmax.f32 %v3255, 1e-24
    %v3314 = vmax.f32 %v3257, 1e-24
    %v3315 = vmax.f32 %v3259, 1e-24
    %v3316 = vmax.f32 %v3261, 1e-24
    %v3317 = vmax.f32 %v3263, 1e-24
    %v3318 = vmax.f32 %v3265, 1e-24
    %v3319 = vmax.f32 %v3267, 1e-24
    %v3320 = vmax.f32 %v3269, 1e-24
    %v3321 = vmax.f32 %v3271, 1e-24
    %v3322 = vmax.f32 %v3273, 1e-24
    %v3323 = vmax.f32 %v3275, 1e-24
    %v3324 = vmax.f32 %v3277, 1e-24
    %v3325 = vmax.f32 %v3279, 1e-24
    %v3326 = vmax.f32 %v3281, 1e-24
    %v3327 = vmax.f32 %v3283, 1e-24
    %v3328 = vmax.f32 %v3285, 1e-24
    %v3329 = vmax.f32 %v3287, 1e-24
    %v3330 = vmax.f32 %v3289, 1e-24
    %v3331 = vmax.f32 %v3291, 1e-24
    %v3332 = vmax.f32 %v3293, 1e-24
    %v3333 = vmax.f32 %v3295, 1e-24
    %v3334 = vmax.f32 %v3297, 1e-24
    %v3335 = vmax.f32 %v3299, 1e-24
    %v3336 = vmax.f32 %v3301, 1e-24
    %v3337 = vmax.f32 %v3303, 1e-24
    %v3338 = vmax.f32 %v3305, 1e-24
    %v3339 = vmax.f32 %v3307, 1e-24
    %v3340 = vrsqrt.pop %v3308
    %v3341 = vrsqrt.pop %v3309
    %v3342 = vrsqrt.pop %v3310
    %v3343 = vrsqrt.pop %v3311
    %v3344 = vrsqrt.pop %v3312
    %v3345 = vrsqrt.pop %v3313
    %v3346 = vrsqrt.pop %v3314
    %v3347 = vrsqrt.pop %v3315
    %v3348 = vrsqrt.pop %v3316
    %v3349 = vrsqrt.pop %v3317
    %v3350 = vrsqrt.pop %v3318
    %v3351 = vrsqrt.pop %v3319
    %v3352 = vrsqrt.pop %v3320
    %v3353 = vrsqrt.pop %v3321
    %v3354 = vrsqrt.pop %v3322
    %v3355 = vrsqrt.pop %v3323
    %v3356 = vrsqrt.pop %v3324
    %v3357 = vrsqrt.pop %v3325
    %v3358 = vrsqrt.pop %v3326
    %v3359 = vrsqrt.pop %v3327
    %v3360 = vrsqrt.pop %v3328
    %v3361 = vrsqrt.pop %v3329
    %v3362 = vrsqrt.pop %v3330
    %v3363 = vrsqrt.pop %v3331
    %v3364 = vrsqrt.pop %v3332
    %v3365 = vrsqrt.pop %v3333
    %v3366 = vrsqrt.pop %v3334
    %v3367 = vrsqrt.pop %v3335
    %v3368 = vrsqrt.pop %v3336
    %v3369 = vrsqrt.pop %v3337
    %v3370 = vrsqrt.pop %v3338
    %v3371 = vrsqrt.pop %v3339
    %v3372 = vmul.f32 %v3180, %v3340
    %v3373 = vmul.f32 %v3181, %v3341
    %v3374 = vmul.f32 %v3182, %v3342
    %v3375 = vmul.f32 %v3183, %v3343
    %v3376 = vmul.f32 %v3184, %v3344
    %v3377 = vmul.f32 %v3185, %v3345
    %v3378 = vmul.f32 %v3186, %v3346
    %v3379 = vmul.f32 %v3187, %v3347
    %v3380 = vmul.f32 %v3188, %v3348
    %v3381 = vmul.f32 %v3189, %v3349
    %v3382 = vmul.f32 %v3190, %v3350
    %v3383 = vmul.f32 %v3191, %v3351
    %v3384 = vmul.f32 %v3192, %v3352
    %v3385 = vmul.f32 %v3193, %v3353
    %v3386 = vmul.f32 %v3194, %v3354
    %v3387 = vmul.f32 %v3195, %v3355
    %v3388 = vmul.f32 %v3196, %v3356
    %v3389 = vmul.f32 %v3197, %v3357
    %v3390 = vmul.f32 %v3198, %v3358
    %v3391 = vmul.f32 %v3199, %v3359
    %v3392 = vmul.f32 %v3200, %v3360
    %v3393 = vmul.f32 %v3201, %v3361
    %v3394 = vmul.f32 %v3202, %v3362
    %v3395 = vmul.f32 %v3203, %v3363
    %v3396 = vmul.f32 %v3204, %v3364
    %v3397 = vmul.f32 %v3205, %v3365
    %v3398 = vmul.f32 %v3206, %v3366
    %v3399 = vmul.f32 %v3207, %v3367
    %v3400 = vmul.f32 %v3208, %v3368
    %v3401 = vmul.f32 %v3209, %v3369
    %v3402 = vmul.f32 %v3210, %v3370
    %v3403 = vmul.f32 %v3211, %v3371
    %v3404 = vpack.c.bf16 %v3373, %v3372
    %v3405 = vpack.c.bf16 %v3375, %v3374
    %v3406 = vpack.c.bf16 %v3377, %v3376
    %v3407 = vpack.c.bf16 %v3379, %v3378
    %v3408 = vpack.c.bf16 %v3381, %v3380
    %v3409 = vpack.c.bf16 %v3383, %v3382
    %v3410 = vpack.c.bf16 %v3385, %v3384
    %v3411 = vpack.c.bf16 %v3387, %v3386
    %v3412 = vpack.c.bf16 %v3389, %v3388
    %v3413 = vpack.c.bf16 %v3391, %v3390
    %v3414 = vpack.c.bf16 %v3393, %v3392
    %v3415 = vpack.c.bf16 %v3395, %v3394
    %v3416 = vpack.c.bf16 %v3397, %v3396
    %v3417 = vpack.c.bf16 %v3399, %v3398
    %v3418 = vpack.c.bf16 %v3401, %v3400
    %v3419 = vpack.c.bf16 %v3403, %v3402
    %3420 = vmatprep.subr.bf16.mxu0 0
    %3421 = vmatpush1.bf16.xpose.msra.mxu0 %v2809
    %3422 = vmatprep.subr.bf16.mxu0 0
    %3423 = vmatpush1.bf16.xpose.msra.mxu0 %v2808
    %3424 = vmatprep.subr.bf16.mxu0 0
    %3425 = vmatpush1.bf16.xpose.msra.mxu0 %v2807
    %3426 = vmatprep.subr.bf16.mxu0 0
    %3427 = vmatpush1.bf16.xpose.msra.mxu0 %v2806
    %3428 = vmatprep.subr.bf16.mxu0 0
    %3429 = vmatpush1.bf16.xpose.msra.mxu0 %v2805
    %3430 = vmatprep.subr.bf16.mxu0 0
    %3431 = vmatpush1.bf16.xpose.msra.mxu0 %v2804
    %3432 = vmatprep.subr.bf16.mxu0 0
    %3433 = vmatpush1.bf16.xpose.msra.mxu0 %v2803
    %3434 = vmatprep.subr.bf16.mxu0 0
    %3435 = vmatpush1.bf16.xpose.msra.mxu0 %v2802
    %3436 = vmatprep.subr.bf16.mxu0 0
    %3437 = vmatpush2.bf16.xpose.msra.mxu0 0
    %3438 = vmatprep.subr.bf16.mxu0 0
    %3439 = vmatpush2.bf16.xpose.msra.mxu0 0
    %3440 = vmatprep.subr.bf16.mxu0 0
    %3441 = vmatpush2.bf16.xpose.msra.mxu0 0
    %3442 = vmatprep.subr.bf16.mxu0 0
    %3443 = vmatpush2.bf16.xpose.msra.mxu0 0
    %3444 = vmatprep.subr.bf16.mxu0 0
    %3445 = vmatpush2.bf16.xpose.msra.mxu0 0
    %3446 = vmatprep.subr.bf16.mxu0 0
    %3447 = vmatpush2.bf16.xpose.msra.mxu0 0
    %3448 = vmatprep.subr.bf16.mxu0 0
    %3449 = vmatpush2.bf16.xpose.msra.mxu0 0
    %3450 = vmatprep.subr.bf16.mxu0 0
    %3451 = vmatpush2.bf16.xpose.msra.mxu0 0
    %3452 = vmatprep.mubr.bf16.mxu0 0
    %3453 = vmatmul.mubr.bf16.gmra.mxu0 %v3404
    %v3454 = vpop.f32.mrf.mxu0
    %v3455 = vadd.f32 0.0, %v3454
    %v3456 = vpop.f32.mrf.mxu0
    %v3457 = vpop.f32.mrf.mxu0
    %v3458 = vadd.f32 0.0, %v3457
    %v3459 = vpop.f32.mrf.mxu0
    %3460 = vmatprep.mubr.bf16.mxu0 0
    %3461 = vmatmul.mubr.bf16.gmra.mxu0 %v3405
    %v3462 = vpop.f32.mrf.mxu0
    %v3463 = vadd.f32 0.0, %v3462
    %v3464 = vpop.f32.mrf.mxu0
    %v3465 = vpop.f32.mrf.mxu0
    %v3466 = vadd.f32 0.0, %v3465
    %v3467 = vpop.f32.mrf.mxu0
    %3468 = vmatprep.mubr.bf16.mxu0 0
    %3469 = vmatmul.mubr.bf16.gmra.mxu0 %v3406
    %v3470 = vpop.f32.mrf.mxu0
    %v3471 = vadd.f32 0.0, %v3470
    %v3472 = vpop.f32.mrf.mxu0
    %v3473 = vpop.f32.mrf.mxu0
    %v3474 = vadd.f32 0.0, %v3473
    %v3475 = vpop.f32.mrf.mxu0
    %3476 = vmatprep.mubr.bf16.mxu0 0
    %3477 = vmatmul.mubr.bf16.gmra.mxu0 %v3407
    %v3478 = vpop.f32.mrf.mxu0
    %v3479 = vadd.f32 0.0, %v3478
    %v3480 = vpop.f32.mrf.mxu0
    %v3481 = vpop.f32.mrf.mxu0
    %v3482 = vadd.f32 0.0, %v3481
    %v3483 = vpop.f32.mrf.mxu0
    %3484 = vmatprep.mubr.bf16.mxu0 0
    %3485 = vmatmul.mubr.bf16.gmra.mxu0 %v3408
    %v3486 = vpop.f32.mrf.mxu0
    %v3487 = vadd.f32 0.0, %v3486
    %v3488 = vpop.f32.mrf.mxu0
    %v3489 = vpop.f32.mrf.mxu0
    %v3490 = vadd.f32 0.0, %v3489
    %v3491 = vpop.f32.mrf.mxu0
    %3492 = vmatprep.mubr.bf16.mxu0 0
    %3493 = vmatmul.mubr.bf16.gmra.mxu0 %v3409
    %v3494 = vpop.f32.mrf.mxu0
    %v3495 = vadd.f32 0.0, %v3494
    %v3496 = vpop.f32.mrf.mxu0
    %v3497 = vpop.f32.mrf.mxu0
    %v3498 = vadd.f32 0.0, %v3497
    %v3499 = vpop.f32.mrf.mxu0
    %3500 = vmatprep.mubr.bf16.mxu0 0
    %3501 = vmatmul.mubr.bf16.gmra.mxu0 %v3410
    %v3502 = vpop.f32.mrf.mxu0
    %v3503 = vadd.f32 0.0, %v3502
    %v3504 = vpop.f32.mrf.mxu0
    %v3505 = vpop.f32.mrf.mxu0
    %v3506 = vadd.f32 0.0, %v3505
    %v3507 = vpop.f32.mrf.mxu0
    %3508 = vmatprep.mubr.bf16.mxu0 0
    %3509 = vmatmul.mubr.bf16.gmra.mxu0 %v3411
    %v3510 = vpop.f32.mrf.mxu0
    %v3511 = vadd.f32 0.0, %v3510
    %v3512 = vpop.f32.mrf.mxu0
    %v3513 = vpop.f32.mrf.mxu0
    %v3514 = vadd.f32 0.0, %v3513
    %v3515 = vpop.f32.mrf.mxu0
    %3516 = vmatprep.mubr.bf16.mxu0 0
    %3517 = vmatmul.mubr.bf16.gmra.mxu0 %v3412
    %v3518 = vpop.f32.mrf.mxu0
    %v3519 = vadd.f32 0.0, %v3518
    %v3520 = vpop.f32.mrf.mxu0
    %v3521 = vpop.f32.mrf.mxu0
    %v3522 = vadd.f32 0.0, %v3521
    %v3523 = vpop.f32.mrf.mxu0
    %3524 = vmatprep.mubr.bf16.mxu0 0
    %3525 = vmatmul.mubr.bf16.gmra.mxu0 %v3413
    %v3526 = vpop.f32.mrf.mxu0
    %v3527 = vadd.f32 0.0, %v3526
    %v3528 = vpop.f32.mrf.mxu0
    %v3529 = vpop.f32.mrf.mxu0
    %v3530 = vadd.f32 0.0, %v3529
    %v3531 = vpop.f32.mrf.mxu0
    %3532 = vmatprep.mubr.bf16.mxu0 0
    %3533 = vmatmul.mubr.bf16.gmra.mxu0 %v3414
    %v3534 = vpop.f32.mrf.mxu0
    %v3535 = vadd.f32 0.0, %v3534
    %v3536 = vpop.f32.mrf.mxu0
    %v3537 = vpop.f32.mrf.mxu0
    %v3538 = vadd.f32 0.0, %v3537
    %v3539 = vpop.f32.mrf.mxu0
    %3540 = vmatprep.mubr.bf16.mxu0 0
    %3541 = vmatmul.mubr.bf16.gmra.mxu0 %v3415
    %v3542 = vpop.f32.mrf.mxu0
    %v3543 = vadd.f32 0.0, %v3542
    %v3544 = vpop.f32.mrf.mxu0
    %v3545 = vpop.f32.mrf.mxu0
    %v3546 = vadd.f32 0.0, %v3545
    %v3547 = vpop.f32.mrf.mxu0
    %3548 = vmatprep.mubr.bf16.mxu0 0
    %3549 = vmatmul.mubr.bf16.gmra.mxu0 %v3416
    %v3550 = vpop.f32.mrf.mxu0
    %v3551 = vadd.f32 0.0, %v3550
    %v3552 = vpop.f32.mrf.mxu0
    %v3553 = vpop.f32.mrf.mxu0
    %v3554 = vadd.f32 0.0, %v3553
    %v3555 = vpop.f32.mrf.mxu0
    %3556 = vmatprep.mubr.bf16.mxu0 0
    %3557 = vmatmul.mubr.bf16.gmra.mxu0 %v3417
    %v3558 = vpop.f32.mrf.mxu0
    %v3559 = vadd.f32 0.0, %v3558
    %v3560 = vpop.f32.mrf.mxu0
    %v3561 = vpop.f32.mrf.mxu0
    %v3562 = vadd.f32 0.0, %v3561
    %v3563 = vpop.f32.mrf.mxu0
    %3564 = vmatprep.mubr.bf16.mxu0 0
    %3565 = vmatmul.mubr.bf16.gmra.mxu0 %v3418
    %v3566 = vpop.f32.mrf.mxu0
    %v3567 = vadd.f32 0.0, %v3566
    %v3568 = vpop.f32.mrf.mxu0
    %v3569 = vpop.f32.mrf.mxu0
    %v3570 = vadd.f32 0.0, %v3569
    %v3571 = vpop.f32.mrf.mxu0
    %3572 = vmatprep.mubr.bf16.mxu0 0
    %3573 = vmatmul.mubr.bf16.gmra.mxu0 %v3419
    %v3574 = vpop.f32.mrf.mxu0
    %v3575 = vadd.f32 0.0, %v3574
    %v3576 = vpop.f32.mrf.mxu0
    %v3577 = vpop.f32.mrf.mxu0
    %v3578 = vadd.f32 0.0, %v3577
    %v3579 = vpop.f32.mrf.mxu0
    %3580 = vdwg.mxu0
    %v3581 = vmul.f32 %v3455, 0.5
    %v3582 = vmul.f32 %v3458, 0.5
    %v3583 = vmul.f32 %v3463, 0.5
    %v3584 = vmul.f32 %v3466, 0.5
    %v3585 = vmul.f32 %v3471, 0.5
    %v3586 = vmul.f32 %v3474, 0.5
    %v3587 = vmul.f32 %v3479, 0.5
    %v3588 = vmul.f32 %v3482, 0.5
    %v3589 = vmul.f32 %v3487, 0.5
    %v3590 = vmul.f32 %v3490, 0.5
    %v3591 = vmul.f32 %v3495, 0.5
    %v3592 = vmul.f32 %v3498, 0.5
    %v3593 = vmul.f32 %v3503, 0.5
    %v3594 = vmul.f32 %v3506, 0.5
    %v3595 = vmul.f32 %v3511, 0.5
    %v3596 = vmul.f32 %v3514, 0.5
    %v3597 = vmul.f32 %v3519, 0.5
    %v3598 = vmul.f32 %v3522, 0.5
    %v3599 = vmul.f32 %v3527, 0.5
    %v3600 = vmul.f32 %v3530, 0.5
    %v3601 = vmul.f32 %v3535, 0.5
    %v3602 = vmul.f32 %v3538, 0.5
    %v3603 = vmul.f32 %v3543, 0.5
    %v3604 = vmul.f32 %v3546, 0.5
    %v3605 = vmul.f32 %v3551, 0.5
    %v3606 = vmul.f32 %v3554, 0.5
    %v3607 = vmul.f32 %v3559, 0.5
    %v3608 = vmul.f32 %v3562, 0.5
    %v3609 = vmul.f32 %v3567, 0.5
    %v3610 = vmul.f32 %v3570, 0.5
    %v3611 = vmul.f32 %v3575, 0.5
    %v3612 = vmul.f32 %v3578, 0.5
    %v3613 = vadd.f32 %v3581, 0.5
    %v3614 = vadd.f32 %v3582, 0.5
    %v3615 = vadd.f32 %v3583, 0.5
    %v3616 = vadd.f32 %v3584, 0.5
    %v3617 = vadd.f32 %v3585, 0.5
    %v3618 = vadd.f32 %v3586, 0.5
    %v3619 = vadd.f32 %v3587, 0.5
    %v3620 = vadd.f32 %v3588, 0.5
    %v3621 = vadd.f32 %v3589, 0.5
    %v3622 = vadd.f32 %v3590, 0.5
    %v3623 = vadd.f32 %v3591, 0.5
    %v3624 = vadd.f32 %v3592, 0.5
    %v3625 = vadd.f32 %v3593, 0.5
    %v3626 = vadd.f32 %v3594, 0.5
    %v3627 = vadd.f32 %v3595, 0.5
    %v3628 = vadd.f32 %v3596, 0.5
    %v3629 = vadd.f32 %v3597, 0.5
    %v3630 = vadd.f32 %v3598, 0.5
    %v3631 = vadd.f32 %v3599, 0.5
    %v3632 = vadd.f32 %v3600, 0.5
    %v3633 = vadd.f32 %v3601, 0.5
    %v3634 = vadd.f32 %v3602, 0.5
    %v3635 = vadd.f32 %v3603, 0.5
    %v3636 = vadd.f32 %v3604, 0.5
    %v3637 = vadd.f32 %v3605, 0.5
    %v3638 = vadd.f32 %v3606, 0.5
    %v3639 = vadd.f32 %v3607, 0.5
    %v3640 = vadd.f32 %v3608, 0.5
    %v3641 = vadd.f32 %v3609, 0.5
    %v3642 = vadd.f32 %v3610, 0.5
    %v3643 = vadd.f32 %v3611, 0.5
    %v3644 = vadd.f32 %v3612, 0.5
    %v3645 = vpack.c.bf16 %v1312, %v1312
    %v3646 = vld [vmem:[#allocation34] sm:$0xf]
    %v3647 = vld [vmem:[#allocation34 + $0x4] sm:$0xf]
    %v3648 = vld [vmem:[#allocation34 + $0x8] sm:$0xf]
    %v3649 = vld [vmem:[#allocation34 + $0xc] sm:$0xf]
    %v3650 = vld [vmem:[#allocation34 + $0x10] sm:$0xf]
    %v3651 = vld [vmem:[#allocation34 + $0x14] sm:$0xf]
    %v3652 = vld [vmem:[#allocation34 + $0x18] sm:$0xf]
    %v3653 = vld [vmem:[#allocation34 + $0x1c] sm:$0xf]
    %v3654 = vld [vmem:[#allocation34 + $0x20] sm:$0xf]
    %v3655 = vld [vmem:[#allocation34 + $0x24] sm:$0xf]
    %v3656 = vld [vmem:[#allocation34 + $0x28] sm:$0xf]
    %v3657 = vld [vmem:[#allocation34 + $0x2c] sm:$0xf]
    %v3658 = vld [vmem:[#allocation34 + $0x30] sm:$0xf]
    %v3659 = vld [vmem:[#allocation34 + $0x34] sm:$0xf]
    %v3660 = vld [vmem:[#allocation34 + $0x38] sm:$0xf]
    %v3661 = vld [vmem:[#allocation34 + $0x3c] sm:$0xf]
    %v3678 = vunpack.c.l.b16 %v3646
    %v3679 = vunpack.c.l.b16 %v3647
    %v3680 = vunpack.c.l.b16 %v3648
    %v3681 = vunpack.c.l.b16 %v3649
    %v3682 = vunpack.c.l.b16 %v3650
    %v3683 = vunpack.c.l.b16 %v3651
    %v3684 = vunpack.c.l.b16 %v3652
    %v3685 = vunpack.c.l.b16 %v3653
    %v3686 = vunpack.c.l.b16 %v3654
    %v3687 = vunpack.c.l.b16 %v3655
    %v3688 = vunpack.c.l.b16 %v3656
    %v3689 = vunpack.c.l.b16 %v3657
    %v3690 = vunpack.c.l.b16 %v3658
    %v3691 = vunpack.c.l.b16 %v3659
    %v3692 = vunpack.c.l.b16 %v3660
    %v3693 = vunpack.c.l.b16 %v3661
    %v3694 = vpack.c.b16 %v3679, %v3678
    %v3695 = vpack.c.b16 %v3681, %v3680
    %v3696 = vpack.c.b16 %v3683, %v3682
    %v3697 = vpack.c.b16 %v3685, %v3684
    %v3698 = vpack.c.b16 %v3687, %v3686
    %v3699 = vpack.c.b16 %v3689, %v3688
    %v3700 = vpack.c.b16 %v3691, %v3690
    %v3701 = vpack.c.b16 %v3693, %v3692
    %3710 = vmatprep.subr.bf16.mxu0 0
    %3711 = vmatpush1.bf16.msra.mxu0 %v3701
    %3712 = vmatprep.subr.bf16.mxu0 0
    %3713 = vmatpush1.bf16.msra.mxu0 %v3700
    %3714 = vmatprep.subr.bf16.mxu0 0
    %3715 = vmatpush1.bf16.msra.mxu0 %v3699
    %3716 = vmatprep.subr.bf16.mxu0 0
    %3717 = vmatpush1.bf16.msra.mxu0 %v3698
    %3718 = vmatprep.subr.bf16.mxu0 0
    %3719 = vmatpush1.bf16.msra.mxu0 %v3697
    %3720 = vmatprep.subr.bf16.mxu0 0
    %3721 = vmatpush1.bf16.msra.mxu0 %v3696
    %3722 = vmatprep.subr.bf16.mxu0 0
    %3723 = vmatpush1.bf16.msra.mxu0 %v3695
    %3724 = vmatprep.subr.bf16.mxu0 0
    %3725 = vmatpush1.bf16.msra.mxu0 %v3694
    %3726 = vmatprep.subr.bf16.mxu0 0
    %3727 = vmatpush2.bf16.msra.mxu0 0
    %3728 = vmatprep.subr.bf16.mxu0 0
    %3729 = vmatpush2.bf16.msra.mxu0 0
    %3730 = vmatprep.subr.bf16.mxu0 0
    %3731 = vmatpush2.bf16.msra.mxu0 0
    %3732 = vmatprep.subr.bf16.mxu0 0
    %3733 = vmatpush2.bf16.msra.mxu0 0
    %3734 = vmatprep.subr.bf16.mxu0 0
    %3735 = vmatpush2.bf16.msra.mxu0 0
    %3736 = vmatprep.subr.bf16.mxu0 0
    %3737 = vmatpush2.bf16.msra.mxu0 0
    %3738 = vmatprep.subr.bf16.mxu0 0
    %3739 = vmatpush2.bf16.msra.mxu0 0
    %3740 = vmatprep.subr.bf16.mxu0 0
    %3741 = vmatpush2.bf16.msra.mxu0 0
    %3742 = vmatprep.mubr.bf16.mxu0 0
    %3743 = vmatmul.mubr.bf16.gmra.mxu0 %v3645
    %v3744 = vpop.f32.mrf.mxu0
    %v3745 = vadd.f32 0.0, %v3744
    %v3746 = vpop.f32.mrf.mxu0
    %v3747 = vpop.f32.mrf.mxu0
    %v3748 = vpop.f32.mrf.mxu0
    %3749 = vdwg.mxu0
    %v3750 = vld [vmem:[#allocation35] sm:$0xf]
    %v3751 = vld [vmem:[#allocation35 + $0x4] sm:$0xf]
    %v3752 = vld [vmem:[#allocation35 + $0x8] sm:$0xf]
    %v3753 = vld [vmem:[#allocation35 + $0xc] sm:$0xf]
    %v3754 = vld [vmem:[#allocation35 + $0x10] sm:$0xf]
    %v3755 = vld [vmem:[#allocation35 + $0x14] sm:$0xf]
    %v3756 = vld [vmem:[#allocation35 + $0x18] sm:$0xf]
    %v3757 = vld [vmem:[#allocation35 + $0x1c] sm:$0xf]
    %v3758 = vld [vmem:[#allocation35 + $0x20] sm:$0xf]
    %v3759 = vld [vmem:[#allocation35 + $0x24] sm:$0xf]
    %v3760 = vld [vmem:[#allocation35 + $0x28] sm:$0xf]
    %v3761 = vld [vmem:[#allocation35 + $0x2c] sm:$0xf]
    %v3762 = vld [vmem:[#allocation35 + $0x30] sm:$0xf]
    %v3763 = vld [vmem:[#allocation35 + $0x34] sm:$0xf]
    %v3764 = vld [vmem:[#allocation35 + $0x38] sm:$0xf]
    %v3765 = vld [vmem:[#allocation35 + $0x3c] sm:$0xf]
    %v3766 = vld [vmem:[#allocation37] sm:$0x1]
    %v3768 = vlaneseq
    %v3769 = vshrl.u32 %v3768, 7
    %v3770 = vsub.s32 0, %v3769
    %v3771 = vrot.slane %v3766, %v3770
    %v3789 = vunpack.c.l.b16 %v3750
    %v3790 = vunpack.c.l.b16 %v3751
    %v3791 = vunpack.c.l.b16 %v3752
    %v3792 = vunpack.c.l.b16 %v3753
    %v3793 = vunpack.c.l.b16 %v3754
    %v3794 = vunpack.c.l.b16 %v3755
    %v3795 = vunpack.c.l.b16 %v3756
    %v3796 = vunpack.c.l.b16 %v3757
    %v3797 = vunpack.c.l.b16 %v3758
    %v3798 = vunpack.c.l.b16 %v3759
    %v3799 = vunpack.c.l.b16 %v3760
    %v3800 = vunpack.c.l.b16 %v3761
    %v3801 = vunpack.c.l.b16 %v3762
    %v3802 = vunpack.c.l.b16 %v3763
    %v3803 = vunpack.c.l.b16 %v3764
    %v3804 = vunpack.c.l.b16 %v3765
    %v3805 = vpack.c.b16 %v3790, %v3789
    %v3806 = vpack.c.b16 %v3792, %v3791
    %v3807 = vpack.c.b16 %v3794, %v3793
    %v3808 = vpack.c.b16 %v3796, %v3795
    %v3809 = vpack.c.b16 %v3798, %v3797
    %v3810 = vpack.c.b16 %v3800, %v3799
    %v3811 = vpack.c.b16 %v3802, %v3801
    %v3812 = vpack.c.b16 %v3804, %v3803
    %3821 = vmatprep.subr.bf16.mxu0 0
    %3822 = vmatpush1.bf16.msra.mxu0 %v3812
    %3823 = vmatprep.subr.bf16.mxu0 0
    %3824 = vmatpush1.bf16.msra.mxu0 %v3811
    %3825 = vmatprep.subr.bf16.mxu0 0
    %3826 = vmatpush1.bf16.msra.mxu0 %v3810
    %3827 = vmatprep.subr.bf16.mxu0 0
    %3828 = vmatpush1.bf16.msra.mxu0 %v3809
    %3829 = vmatprep.subr.bf16.mxu0 0
    %3830 = vmatpush1.bf16.msra.mxu0 %v3808
    %3831 = vmatprep.subr.bf16.mxu0 0
    %3832 = vmatpush1.bf16.msra.mxu0 %v3807
    %3833 = vmatprep.subr.bf16.mxu0 0
    %3834 = vmatpush1.bf16.msra.mxu0 %v3806
    %3835 = vmatprep.subr.bf16.mxu0 0
    %3836 = vmatpush1.bf16.msra.mxu0 %v3805
    %3837 = vmatprep.subr.bf16.mxu0 0
    %3838 = vmatpush2.bf16.msra.mxu0 0
    %3839 = vmatprep.subr.bf16.mxu0 0
    %3840 = vmatpush2.bf16.msra.mxu0 0
    %3841 = vmatprep.subr.bf16.mxu0 0
    %3842 = vmatpush2.bf16.msra.mxu0 0
    %3843 = vmatprep.subr.bf16.mxu0 0
    %3844 = vmatpush2.bf16.msra.mxu0 0
    %3845 = vmatprep.subr.bf16.mxu0 0
    %3846 = vmatpush2.bf16.msra.mxu0 0
    %3847 = vmatprep.subr.bf16.mxu0 0
    %3848 = vmatpush2.bf16.msra.mxu0 0
    %3849 = vmatprep.subr.bf16.mxu0 0
    %3850 = vmatpush2.bf16.msra.mxu0 0
    %3851 = vmatprep.subr.bf16.mxu0 0
    %3852 = vmatpush2.bf16.msra.mxu0 0
    %3853 = vmatprep.mubr.bf16.mxu0 0
    %3854 = vmatmul.mubr.bf16.gmra.mxu0 %v834
    %v3855 = vpop.f32.mrf.mxu0
    %v3856 = vadd.f32 %v3771, %v3855
    %v3857 = vpop.f32.mrf.mxu0
    %v3858 = vpop.f32.mrf.mxu0
    %v3859 = vadd.f32 %v3771, %v3858
    %v3860 = vpop.f32.mrf.mxu0
    %3861 = vmatprep.mubr.bf16.mxu0 0
    %3862 = vmatmul.mubr.bf16.gmra.mxu0 %v835
    %v3863 = vpop.f32.mrf.mxu0
    %v3864 = vadd.f32 %v3771, %v3863
    %v3865 = vpop.f32.mrf.mxu0
    %v3866 = vpop.f32.mrf.mxu0
    %v3867 = vadd.f32 %v3771, %v3866
    %v3868 = vpop.f32.mrf.mxu0
    %3869 = vmatprep.mubr.bf16.mxu0 0
    %3870 = vmatmul.mubr.bf16.gmra.mxu0 %v836
    %v3871 = vpop.f32.mrf.mxu0
    %v3872 = vadd.f32 %v3771, %v3871
    %v3873 = vpop.f32.mrf.mxu0
    %v3874 = vpop.f32.mrf.mxu0
    %v3875 = vadd.f32 %v3771, %v3874
    %v3876 = vpop.f32.mrf.mxu0
    %3877 = vmatprep.mubr.bf16.mxu0 0
    %3878 = vmatmul.mubr.bf16.gmra.mxu0 %v837
    %v3879 = vpop.f32.mrf.mxu0
    %v3880 = vadd.f32 %v3771, %v3879
    %v3881 = vpop.f32.mrf.mxu0
    %v3882 = vpop.f32.mrf.mxu0
    %v3883 = vadd.f32 %v3771, %v3882
    %v3884 = vpop.f32.mrf.mxu0
    %3885 = vmatprep.mubr.bf16.mxu0 0
    %3886 = vmatmul.mubr.bf16.gmra.mxu0 %v838
    %v3887 = vpop.f32.mrf.mxu0
    %v3888 = vadd.f32 %v3771, %v3887
    %v3889 = vpop.f32.mrf.mxu0
    %v3890 = vpop.f32.mrf.mxu0
    %v3891 = vadd.f32 %v3771, %v3890
    %v3892 = vpop.f32.mrf.mxu0
    %3893 = vmatprep.mubr.bf16.mxu0 0
    %3894 = vmatmul.mubr.bf16.gmra.mxu0 %v839
    %v3895 = vpop.f32.mrf.mxu0
    %v3896 = vadd.f32 %v3771, %v3895
    %v3897 = vpop.f32.mrf.mxu0
    %v3898 = vpop.f32.mrf.mxu0
    %v3899 = vadd.f32 %v3771, %v3898
    %v3900 = vpop.f32.mrf.mxu0
    %3901 = vmatprep.mubr.bf16.mxu0 0
    %3902 = vmatmul.mubr.bf16.gmra.mxu0 %v840
    %v3903 = vpop.f32.mrf.mxu0
    %v3904 = vadd.f32 %v3771, %v3903
    %v3905 = vpop.f32.mrf.mxu0
    %v3906 = vpop.f32.mrf.mxu0
    %v3907 = vadd.f32 %v3771, %v3906
    %v3908 = vpop.f32.mrf.mxu0
    %3909 = vmatprep.mubr.bf16.mxu0 0
    %3910 = vmatmul.mubr.bf16.gmra.mxu0 %v841
    %v3911 = vpop.f32.mrf.mxu0
    %v3912 = vadd.f32 %v3771, %v3911
    %v3913 = vpop.f32.mrf.mxu0
    %v3914 = vpop.f32.mrf.mxu0
    %v3915 = vadd.f32 %v3771, %v3914
    %v3916 = vpop.f32.mrf.mxu0
    %3917 = vdwg.mxu0
    %v3920 = vunpack.c.l.s4 1966171168
    %v3921 = vunpack.c.0.s8 %v3920
    %v3922 = vlaneseq
    %v3923 = vshrl.u32 %v3922, 7
    %v3924 = vsub.s32 %v3921, %v3923
    %v3925 = vrot.slane %v3745, %v3924
    %v3926 = vcombine.high %v3925, %v3925
    %v3928 = vunpack.c.l.s4 1966171168
    %v3929 = vunpack.c.0.s8 %v3928
    %v3930 = vlaneseq
    %v3931 = vshrl.u32 %v3930, 7
    %v3932 = vsub.s32 %v3929, %v3931
    %v3933 = vrot.slane %v3925, %v3932
    %v3935 = vunpack.c.l.s4 1966171168
    %v3936 = vunpack.c.0.s8 %v3935
    %v3937 = vlaneseq
    %v3938 = vshrl.u32 %v3937, 7
    %v3939 = vsub.s32 %v3936, %v3938
    %v3940 = vrot.slane %v3926, %v3939
    %v3941 = vlaneseq
    %v3942 = vshrl.u32 %v3941, 7
    %v3943 = vsub.s32 0, %v3942
    %v3944 = vrot.slane %v3933, %v3943
    %v3945 = vlaneseq
    %v3946 = vshrl.u32 %v3945, 7
    %v3947 = vsub.s32 0, %v3946
    %v3948 = vrot.slane %v3940, %v3947
    %v3951 = vadd.f32 %v3944, %v3856
    %v3952 = vadd.f32 %v3944, %v3859
    %v3953 = vadd.f32 %v3944, %v3864
    %v3954 = vadd.f32 %v3944, %v3867
    %v3955 = vadd.f32 %v3944, %v3872
    %v3956 = vadd.f32 %v3944, %v3875
    %v3957 = vadd.f32 %v3944, %v3880
    %v3958 = vadd.f32 %v3944, %v3883
    %v3959 = vadd.f32 %v3944, %v3888
    %v3960 = vadd.f32 %v3944, %v3891
    %v3961 = vadd.f32 %v3944, %v3896
    %v3962 = vadd.f32 %v3944, %v3899
    %v3963 = vadd.f32 %v3944, %v3904
    %v3964 = vadd.f32 %v3944, %v3907
    %v3965 = vadd.f32 %v3944, %v3912
    %v3966 = vadd.f32 %v3944, %v3915
    %v3967 = vadd.f32 %v3948, %v3856
    %v3968 = vadd.f32 %v3948, %v3859
    %v3969 = vadd.f32 %v3948, %v3864
    %v3970 = vadd.f32 %v3948, %v3867
    %v3971 = vadd.f32 %v3948, %v3872
    %v3972 = vadd.f32 %v3948, %v3875
    %v3973 = vadd.f32 %v3948, %v3880
    %v3974 = vadd.f32 %v3948, %v3883
    %v3975 = vadd.f32 %v3948, %v3888
    %v3976 = vadd.f32 %v3948, %v3891
    %v3977 = vadd.f32 %v3948, %v3896
    %v3978 = vadd.f32 %v3948, %v3899
    %v3979 = vadd.f32 %v3948, %v3904
    %v3980 = vadd.f32 %v3948, %v3907
    %v3981 = vadd.f32 %v3948, %v3912
    %v3982 = vadd.f32 %v3948, %v3915
    %v3983 = vmul.f32 %v3951, %v3951
    %v3984 = vmul.f32 %v3952, %v3952
    %v3985 = vmul.f32 %v3953, %v3953
    %v3986 = vmul.f32 %v3954, %v3954
    %v3987 = vmul.f32 %v3955, %v3955
    %v3988 = vmul.f32 %v3956, %v3956
    %v3989 = vmul.f32 %v3957, %v3957
    %v3990 = vmul.f32 %v3958, %v3958
    %v3991 = vmul.f32 %v3959, %v3959
    %v3992 = vmul.f32 %v3960, %v3960
    %v3993 = vmul.f32 %v3961, %v3961
    %v3994 = vmul.f32 %v3962, %v3962
    %v3995 = vmul.f32 %v3963, %v3963
    %v3996 = vmul.f32 %v3964, %v3964
    %v3997 = vmul.f32 %v3965, %v3965
    %v3998 = vmul.f32 %v3966, %v3966
    %v3999 = vmul.f32 %v3967, %v3967
    %v4000 = vmul.f32 %v3968, %v3968
    %v4001 = vmul.f32 %v3969, %v3969
    %v4002 = vmul.f32 %v3970, %v3970
    %v4003 = vmul.f32 %v3971, %v3971
    %v4004 = vmul.f32 %v3972, %v3972
    %v4005 = vmul.f32 %v3973, %v3973
    %v4006 = vmul.f32 %v3974, %v3974
    %v4007 = vmul.f32 %v3975, %v3975
    %v4008 = vmul.f32 %v3976, %v3976
    %v4009 = vmul.f32 %v3977, %v3977
    %v4010 = vmul.f32 %v3978, %v3978
    %v4011 = vmul.f32 %v3979, %v3979
    %v4012 = vmul.f32 %v3980, %v3980
    %v4013 = vmul.f32 %v3981, %v3981
    %v4014 = vmul.f32 %v3982, %v3982
    %4015 = vadd.xlane.f32.xlu0 %v3983
    %v4016 = vpop.xlane.xlu0 %4015
    %4017 = vadd.xlane.f32.xlu0 %v3984
    %v4018 = vpop.xlane.xlu0 %4017
    %4019 = vadd.xlane.f32.xlu0 %v3985
    %v4020 = vpop.xlane.xlu0 %4019
    %4021 = vadd.xlane.f32.xlu0 %v3986
    %v4022 = vpop.xlane.xlu0 %4021
    %4023 = vadd.xlane.f32.xlu0 %v3987
    %v4024 = vpop.xlane.xlu0 %4023
    %4025 = vadd.xlane.f32.xlu0 %v3988
    %v4026 = vpop.xlane.xlu0 %4025
    %4027 = vadd.xlane.f32.xlu0 %v3989
    %v4028 = vpop.xlane.xlu0 %4027
    %4029 = vadd.xlane.f32.xlu0 %v3990
    %v4030 = vpop.xlane.xlu0 %4029
    %4031 = vadd.xlane.f32.xlu0 %v3991
    %v4032 = vpop.xlane.xlu0 %4031
    %4033 = vadd.xlane.f32.xlu0 %v3992
    %v4034 = vpop.xlane.xlu0 %4033
    %4035 = vadd.xlane.f32.xlu0 %v3993
    %v4036 = vpop.xlane.xlu0 %4035
    %4037 = vadd.xlane.f32.xlu0 %v3994
    %v4038 = vpop.xlane.xlu0 %4037
    %4039 = vadd.xlane.f32.xlu0 %v3995
    %v4040 = vpop.xlane.xlu0 %4039
    %4041 = vadd.xlane.f32.xlu0 %v3996
    %v4042 = vpop.xlane.xlu0 %4041
    %4043 = vadd.xlane.f32.xlu0 %v3997
    %v4044 = vpop.xlane.xlu0 %4043
    %4045 = vadd.xlane.f32.xlu0 %v3998
    %v4046 = vpop.xlane.xlu0 %4045
    %4047 = vadd.xlane.f32.xlu0 %v3999
    %v4048 = vpop.xlane.xlu0 %4047
    %4049 = vadd.xlane.f32.xlu0 %v4000
    %v4050 = vpop.xlane.xlu0 %4049
    %4051 = vadd.xlane.f32.xlu0 %v4001
    %v4052 = vpop.xlane.xlu0 %4051
    %4053 = vadd.xlane.f32.xlu0 %v4002
    %v4054 = vpop.xlane.xlu0 %4053
    %4055 = vadd.xlane.f32.xlu0 %v4003
    %v4056 = vpop.xlane.xlu0 %4055
    %4057 = vadd.xlane.f32.xlu0 %v4004
    %v4058 = vpop.xlane.xlu0 %4057
    %4059 = vadd.xlane.f32.xlu0 %v4005
    %v4060 = vpop.xlane.xlu0 %4059
    %4061 = vadd.xlane.f32.xlu0 %v4006
    %v4062 = vpop.xlane.xlu0 %4061
    %4063 = vadd.xlane.f32.xlu0 %v4007
    %v4064 = vpop.xlane.xlu0 %4063
    %4065 = vadd.xlane.f32.xlu0 %v4008
    %v4066 = vpop.xlane.xlu0 %4065
    %4067 = vadd.xlane.f32.xlu0 %v4009
    %v4068 = vpop.xlane.xlu0 %4067
    %4069 = vadd.xlane.f32.xlu0 %v4010
    %v4070 = vpop.xlane.xlu0 %4069
    %4071 = vadd.xlane.f32.xlu0 %v4011
    %v4072 = vpop.xlane.xlu0 %4071
    %4073 = vadd.xlane.f32.xlu0 %v4012
    %v4074 = vpop.xlane.xlu0 %4073
    %4075 = vadd.xlane.f32.xlu0 %v4013
    %v4076 = vpop.xlane.xlu0 %4075
    %4077 = vadd.xlane.f32.xlu0 %v4014
    %v4078 = vpop.xlane.xlu0 %4077
    %v4079 = vmax.f32 %v4016, 1e-24
    %v4080 = vmax.f32 %v4018, 1e-24
    %v4081 = vmax.f32 %v4020, 1e-24
    %v4082 = vmax.f32 %v4022, 1e-24
    %v4083 = vmax.f32 %v4024, 1e-24
    %v4084 = vmax.f32 %v4026, 1e-24
    %v4085 = vmax.f32 %v4028, 1e-24
    %v4086 = vmax.f32 %v4030, 1e-24
    %v4087 = vmax.f32 %v4032, 1e-24
    %v4088 = vmax.f32 %v4034, 1e-24
    %v4089 = vmax.f32 %v4036, 1e-24
    %v4090 = vmax.f32 %v4038, 1e-24
    %v4091 = vmax.f32 %v4040, 1e-24
    %v4092 = vmax.f32 %v4042, 1e-24
    %v4093 = vmax.f32 %v4044, 1e-24
    %v4094 = vmax.f32 %v4046, 1e-24
    %v4095 = vmax.f32 %v4048, 1e-24
    %v4096 = vmax.f32 %v4050, 1e-24
    %v4097 = vmax.f32 %v4052, 1e-24
    %v4098 = vmax.f32 %v4054, 1e-24
    %v4099 = vmax.f32 %v4056, 1e-24
    %v4100 = vmax.f32 %v4058, 1e-24
    %v4101 = vmax.f32 %v4060, 1e-24
    %v4102 = vmax.f32 %v4062, 1e-24
    %v4103 = vmax.f32 %v4064, 1e-24
    %v4104 = vmax.f32 %v4066, 1e-24
    %v4105 = vmax.f32 %v4068, 1e-24
    %v4106 = vmax.f32 %v4070, 1e-24
    %v4107 = vmax.f32 %v4072, 1e-24
    %v4108 = vmax.f32 %v4074, 1e-24
    %v4109 = vmax.f32 %v4076, 1e-24
    %v4110 = vmax.f32 %v4078, 1e-24
    %v4111 = vrsqrt.pop %v4079
    %v4112 = vrsqrt.pop %v4080
    %v4113 = vrsqrt.pop %v4081
    %v4114 = vrsqrt.pop %v4082
    %v4115 = vrsqrt.pop %v4083
    %v4116 = vrsqrt.pop %v4084
    %v4117 = vrsqrt.pop %v4085
    %v4118 = vrsqrt.pop %v4086
    %v4119 = vrsqrt.pop %v4087
    %v4120 = vrsqrt.pop %v4088
    %v4121 = vrsqrt.pop %v4089
    %v4122 = vrsqrt.pop %v4090
    %v4123 = vrsqrt.pop %v4091
    %v4124 = vrsqrt.pop %v4092
    %v4125 = vrsqrt.pop %v4093
    %v4126 = vrsqrt.pop %v4094
    %v4127 = vrsqrt.pop %v4095
    %v4128 = vrsqrt.pop %v4096
    %v4129 = vrsqrt.pop %v4097
    %v4130 = vrsqrt.pop %v4098
    %v4131 = vrsqrt.pop %v4099
    %v4132 = vrsqrt.pop %v4100
    %v4133 = vrsqrt.pop %v4101
    %v4134 = vrsqrt.pop %v4102
    %v4135 = vrsqrt.pop %v4103
    %v4136 = vrsqrt.pop %v4104
    %v4137 = vrsqrt.pop %v4105
    %v4138 = vrsqrt.pop %v4106
    %v4139 = vrsqrt.pop %v4107
    %v4140 = vrsqrt.pop %v4108
    %v4141 = vrsqrt.pop %v4109
    %v4142 = vrsqrt.pop %v4110
    %v4143 = vmul.f32 %v3951, %v4111
    %v4144 = vmul.f32 %v3952, %v4112
    %v4145 = vmul.f32 %v3953, %v4113
    %v4146 = vmul.f32 %v3954, %v4114
    %v4147 = vmul.f32 %v3955, %v4115
    %v4148 = vmul.f32 %v3956, %v4116
    %v4149 = vmul.f32 %v3957, %v4117
    %v4150 = vmul.f32 %v3958, %v4118
    %v4151 = vmul.f32 %v3959, %v4119
    %v4152 = vmul.f32 %v3960, %v4120
    %v4153 = vmul.f32 %v3961, %v4121
    %v4154 = vmul.f32 %v3962, %v4122
    %v4155 = vmul.f32 %v3963, %v4123
    %v4156 = vmul.f32 %v3964, %v4124
    %v4157 = vmul.f32 %v3965, %v4125
    %v4158 = vmul.f32 %v3966, %v4126
    %v4159 = vmul.f32 %v3967, %v4127
    %v4160 = vmul.f32 %v3968, %v4128
    %v4161 = vmul.f32 %v3969, %v4129
    %v4162 = vmul.f32 %v3970, %v4130
    %v4163 = vmul.f32 %v3971, %v4131
    %v4164 = vmul.f32 %v3972, %v4132
    %v4165 = vmul.f32 %v3973, %v4133
    %v4166 = vmul.f32 %v3974, %v4134
    %v4167 = vmul.f32 %v3975, %v4135
    %v4168 = vmul.f32 %v3976, %v4136
    %v4169 = vmul.f32 %v3977, %v4137
    %v4170 = vmul.f32 %v3978, %v4138
    %v4171 = vmul.f32 %v3979, %v4139
    %v4172 = vmul.f32 %v3980, %v4140
    %v4173 = vmul.f32 %v3981, %v4141
    %v4174 = vmul.f32 %v3982, %v4142
    %v4175 = vpack.c.bf16 %v4144, %v4143
    %v4176 = vpack.c.bf16 %v4146, %v4145
    %v4177 = vpack.c.bf16 %v4148, %v4147
    %v4178 = vpack.c.bf16 %v4150, %v4149
    %v4179 = vpack.c.bf16 %v4152, %v4151
    %v4180 = vpack.c.bf16 %v4154, %v4153
    %v4181 = vpack.c.bf16 %v4156, %v4155
    %v4182 = vpack.c.bf16 %v4158, %v4157
    %v4183 = vpack.c.bf16 %v4160, %v4159
    %v4184 = vpack.c.bf16 %v4162, %v4161
    %v4185 = vpack.c.bf16 %v4164, %v4163
    %v4186 = vpack.c.bf16 %v4166, %v4165
    %v4187 = vpack.c.bf16 %v4168, %v4167
    %v4188 = vpack.c.bf16 %v4170, %v4169
    %v4189 = vpack.c.bf16 %v4172, %v4171
    %v4190 = vpack.c.bf16 %v4174, %v4173
    %4191 = vmatprep.subr.bf16.mxu0 0
    %4192 = vmatpush1.bf16.xpose.msra.mxu0 %v2865
    %4193 = vmatprep.subr.bf16.mxu0 0
    %4194 = vmatpush1.bf16.xpose.msra.mxu0 %v2864
    %4195 = vmatprep.subr.bf16.mxu0 0
    %4196 = vmatpush1.bf16.xpose.msra.mxu0 %v2863
    %4197 = vmatprep.subr.bf16.mxu0 0
    %4198 = vmatpush1.bf16.xpose.msra.mxu0 %v2862
    %4199 = vmatprep.subr.bf16.mxu0 0
    %4200 = vmatpush1.bf16.xpose.msra.mxu0 %v2861
    %4201 = vmatprep.subr.bf16.mxu0 0
    %4202 = vmatpush1.bf16.xpose.msra.mxu0 %v2860
    %4203 = vmatprep.subr.bf16.mxu0 0
    %4204 = vmatpush1.bf16.xpose.msra.mxu0 %v2859
    %4205 = vmatprep.subr.bf16.mxu0 0
    %4206 = vmatpush1.bf16.xpose.msra.mxu0 %v2858
    %4207 = vmatprep.subr.bf16.mxu0 0
    %4208 = vmatpush2.bf16.xpose.msra.mxu0 0
    %4209 = vmatprep.subr.bf16.mxu0 0
    %4210 = vmatpush2.bf16.xpose.msra.mxu0 0
    %4211 = vmatprep.subr.bf16.mxu0 0
    %4212 = vmatpush2.bf16.xpose.msra.mxu0 0
    %4213 = vmatprep.subr.bf16.mxu0 0
    %4214 = vmatpush2.bf16.xpose.msra.mxu0 0
    %4215 = vmatprep.subr.bf16.mxu0 0
    %4216 = vmatpush2.bf16.xpose.msra.mxu0 0
    %4217 = vmatprep.subr.bf16.mxu0 0
    %4218 = vmatpush2.bf16.xpose.msra.mxu0 0
    %4219 = vmatprep.subr.bf16.mxu0 0
    %4220 = vmatpush2.bf16.xpose.msra.mxu0 0
    %4221 = vmatprep.subr.bf16.mxu0 0
    %4222 = vmatpush2.bf16.xpose.msra.mxu0 0
    %4223 = vmatprep.mubr.bf16.mxu0 0
    %4224 = vmatmul.mubr.bf16.gmra.mxu0 %v4175
    %v4225 = vpop.f32.mrf.mxu0
    %v4226 = vadd.f32 0.0, %v4225
    %v4227 = vpop.f32.mrf.mxu0
    %v4228 = vpop.f32.mrf.mxu0
    %v4229 = vadd.f32 0.0, %v4228
    %v4230 = vpop.f32.mrf.mxu0
    %4231 = vmatprep.mubr.bf16.mxu0 0
    %4232 = vmatmul.mubr.bf16.gmra.mxu0 %v4176
    %v4233 = vpop.f32.mrf.mxu0
    %v4234 = vadd.f32 0.0, %v4233
    %v4235 = vpop.f32.mrf.mxu0
    %v4236 = vpop.f32.mrf.mxu0
    %v4237 = vadd.f32 0.0, %v4236
    %v4238 = vpop.f32.mrf.mxu0
    %4239 = vmatprep.mubr.bf16.mxu0 0
    %4240 = vmatmul.mubr.bf16.gmra.mxu0 %v4177
    %v4241 = vpop.f32.mrf.mxu0
    %v4242 = vadd.f32 0.0, %v4241
    %v4243 = vpop.f32.mrf.mxu0
    %v4244 = vpop.f32.mrf.mxu0
    %v4245 = vadd.f32 0.0, %v4244
    %v4246 = vpop.f32.mrf.mxu0
    %4247 = vmatprep.mubr.bf16.mxu0 0
    %4248 = vmatmul.mubr.bf16.gmra.mxu0 %v4178
    %v4249 = vpop.f32.mrf.mxu0
    %v4250 = vadd.f32 0.0, %v4249
    %v4251 = vpop.f32.mrf.mxu0
    %v4252 = vpop.f32.mrf.mxu0
    %v4253 = vadd.f32 0.0, %v4252
    %v4254 = vpop.f32.mrf.mxu0
    %4255 = vmatprep.mubr.bf16.mxu0 0
    %4256 = vmatmul.mubr.bf16.gmra.mxu0 %v4179
    %v4257 = vpop.f32.mrf.mxu0
    %v4258 = vadd.f32 0.0, %v4257
    %v4259 = vpop.f32.mrf.mxu0
    %v4260 = vpop.f32.mrf.mxu0
    %v4261 = vadd.f32 0.0, %v4260
    %v4262 = vpop.f32.mrf.mxu0
    %4263 = vmatprep.mubr.bf16.mxu0 0
    %4264 = vmatmul.mubr.bf16.gmra.mxu0 %v4180
    %v4265 = vpop.f32.mrf.mxu0
    %v4266 = vadd.f32 0.0, %v4265
    %v4267 = vpop.f32.mrf.mxu0
    %v4268 = vpop.f32.mrf.mxu0
    %v4269 = vadd.f32 0.0, %v4268
    %v4270 = vpop.f32.mrf.mxu0
    %4271 = vmatprep.mubr.bf16.mxu0 0
    %4272 = vmatmul.mubr.bf16.gmra.mxu0 %v4181
    %v4273 = vpop.f32.mrf.mxu0
    %v4274 = vadd.f32 0.0, %v4273
    %v4275 = vpop.f32.mrf.mxu0
    %v4276 = vpop.f32.mrf.mxu0
    %v4277 = vadd.f32 0.0, %v4276
    %v4278 = vpop.f32.mrf.mxu0
    %4279 = vmatprep.mubr.bf16.mxu0 0
    %4280 = vmatmul.mubr.bf16.gmra.mxu0 %v4182
    %v4281 = vpop.f32.mrf.mxu0
    %v4282 = vadd.f32 0.0, %v4281
    %v4283 = vpop.f32.mrf.mxu0
    %v4284 = vpop.f32.mrf.mxu0
    %v4285 = vadd.f32 0.0, %v4284
    %v4286 = vpop.f32.mrf.mxu0
    %4287 = vmatprep.mubr.bf16.mxu0 0
    %4288 = vmatmul.mubr.bf16.gmra.mxu0 %v4183
    %v4289 = vpop.f32.mrf.mxu0
    %v4290 = vadd.f32 0.0, %v4289
    %v4291 = vpop.f32.mrf.mxu0
    %v4292 = vpop.f32.mrf.mxu0
    %v4293 = vadd.f32 0.0, %v4292
    %v4294 = vpop.f32.mrf.mxu0
    %4295 = vmatprep.mubr.bf16.mxu0 0
    %4296 = vmatmul.mubr.bf16.gmra.mxu0 %v4184
    %v4297 = vpop.f32.mrf.mxu0
    %v4298 = vadd.f32 0.0, %v4297
    %v4299 = vpop.f32.mrf.mxu0
    %v4300 = vpop.f32.mrf.mxu0
    %v4301 = vadd.f32 0.0, %v4300
    %v4302 = vpop.f32.mrf.mxu0
    %4303 = vmatprep.mubr.bf16.mxu0 0
    %4304 = vmatmul.mubr.bf16.gmra.mxu0 %v4185
    %v4305 = vpop.f32.mrf.mxu0
    %v4306 = vadd.f32 0.0, %v4305
    %v4307 = vpop.f32.mrf.mxu0
    %v4308 = vpop.f32.mrf.mxu0
    %v4309 = vadd.f32 0.0, %v4308
    %v4310 = vpop.f32.mrf.mxu0
    %4311 = vmatprep.mubr.bf16.mxu0 0
    %4312 = vmatmul.mubr.bf16.gmra.mxu0 %v4186
    %v4313 = vpop.f32.mrf.mxu0
    %v4314 = vadd.f32 0.0, %v4313
    %v4315 = vpop.f32.mrf.mxu0
    %v4316 = vpop.f32.mrf.mxu0
    %v4317 = vadd.f32 0.0, %v4316
    %v4318 = vpop.f32.mrf.mxu0
    %4319 = vmatprep.mubr.bf16.mxu0 0
    %4320 = vmatmul.mubr.bf16.gmra.mxu0 %v4187
    %v4321 = vpop.f32.mrf.mxu0
    %v4322 = vadd.f32 0.0, %v4321
    %v4323 = vpop.f32.mrf.mxu0
    %v4324 = vpop.f32.mrf.mxu0
    %v4325 = vadd.f32 0.0, %v4324
    %v4326 = vpop.f32.mrf.mxu0
    %4327 = vmatprep.mubr.bf16.mxu0 0
    %4328 = vmatmul.mubr.bf16.gmra.mxu0 %v4188
    %v4329 = vpop.f32.mrf.mxu0
    %v4330 = vadd.f32 0.0, %v4329
    %v4331 = vpop.f32.mrf.mxu0
    %v4332 = vpop.f32.mrf.mxu0
    %v4333 = vadd.f32 0.0, %v4332
    %v4334 = vpop.f32.mrf.mxu0
    %4335 = vmatprep.mubr.bf16.mxu0 0
    %4336 = vmatmul.mubr.bf16.gmra.mxu0 %v4189
    %v4337 = vpop.f32.mrf.mxu0
    %v4338 = vadd.f32 0.0, %v4337
    %v4339 = vpop.f32.mrf.mxu0
    %v4340 = vpop.f32.mrf.mxu0
    %v4341 = vadd.f32 0.0, %v4340
    %v4342 = vpop.f32.mrf.mxu0
    %4343 = vmatprep.mubr.bf16.mxu0 0
    %4344 = vmatmul.mubr.bf16.gmra.mxu0 %v4190
    %v4345 = vpop.f32.mrf.mxu0
    %v4346 = vadd.f32 0.0, %v4345
    %v4347 = vpop.f32.mrf.mxu0
    %v4348 = vpop.f32.mrf.mxu0
    %v4349 = vadd.f32 0.0, %v4348
    %v4350 = vpop.f32.mrf.mxu0
    %4351 = vdwg.mxu0
    %v4352 = vmul.f32 %v4226, 0.5
    %v4353 = vmul.f32 %v4229, 0.5
    %v4354 = vmul.f32 %v4234, 0.5
    %v4355 = vmul.f32 %v4237, 0.5
    %v4356 = vmul.f32 %v4242, 0.5
    %v4357 = vmul.f32 %v4245, 0.5
    %v4358 = vmul.f32 %v4250, 0.5
    %v4359 = vmul.f32 %v4253, 0.5
    %v4360 = vmul.f32 %v4258, 0.5
    %v4361 = vmul.f32 %v4261, 0.5
    %v4362 = vmul.f32 %v4266, 0.5
    %v4363 = vmul.f32 %v4269, 0.5
    %v4364 = vmul.f32 %v4274, 0.5
    %v4365 = vmul.f32 %v4277, 0.5
    %v4366 = vmul.f32 %v4282, 0.5
    %v4367 = vmul.f32 %v4285, 0.5
    %v4368 = vmul.f32 %v4290, 0.5
    %v4369 = vmul.f32 %v4293, 0.5
    %v4370 = vmul.f32 %v4298, 0.5
    %v4371 = vmul.f32 %v4301, 0.5
    %v4372 = vmul.f32 %v4306, 0.5
    %v4373 = vmul.f32 %v4309, 0.5
    %v4374 = vmul.f32 %v4314, 0.5
    %v4375 = vmul.f32 %v4317, 0.5
    %v4376 = vmul.f32 %v4322, 0.5
    %v4377 = vmul.f32 %v4325, 0.5
    %v4378 = vmul.f32 %v4330, 0.5
    %v4379 = vmul.f32 %v4333, 0.5
    %v4380 = vmul.f32 %v4338, 0.5
    %v4381 = vmul.f32 %v4341, 0.5
    %v4382 = vmul.f32 %v4346, 0.5
    %v4383 = vmul.f32 %v4349, 0.5
    %v4384 = vadd.f32 %v4352, 0.5
    %v4385 = vadd.f32 %v4353, 0.5
    %v4386 = vadd.f32 %v4354, 0.5
    %v4387 = vadd.f32 %v4355, 0.5
    %v4388 = vadd.f32 %v4356, 0.5
    %v4389 = vadd.f32 %v4357, 0.5
    %v4390 = vadd.f32 %v4358, 0.5
    %v4391 = vadd.f32 %v4359, 0.5
    %v4392 = vadd.f32 %v4360, 0.5
    %v4393 = vadd.f32 %v4361, 0.5
    %v4394 = vadd.f32 %v4362, 0.5
    %v4395 = vadd.f32 %v4363, 0.5
    %v4396 = vadd.f32 %v4364, 0.5
    %v4397 = vadd.f32 %v4365, 0.5
    %v4398 = vadd.f32 %v4366, 0.5
    %v4399 = vadd.f32 %v4367, 0.5
    %v4400 = vadd.f32 %v4368, 0.5
    %v4401 = vadd.f32 %v4369, 0.5
    %v4402 = vadd.f32 %v4370, 0.5
    %v4403 = vadd.f32 %v4371, 0.5
    %v4404 = vadd.f32 %v4372, 0.5
    %v4405 = vadd.f32 %v4373, 0.5
    %v4406 = vadd.f32 %v4374, 0.5
    %v4407 = vadd.f32 %v4375, 0.5
    %v4408 = vadd.f32 %v4376, 0.5
    %v4409 = vadd.f32 %v4377, 0.5
    %v4410 = vadd.f32 %v4378, 0.5
    %v4411 = vadd.f32 %v4379, 0.5
    %v4412 = vadd.f32 %v4380, 0.5
    %v4413 = vadd.f32 %v4381, 0.5
    %v4414 = vadd.f32 %v4382, 0.5
    %v4415 = vadd.f32 %v4383, 0.5
    %v4416 = vlaneseq
    %v4417 = vshrl.u32 %v4416, 7
    %v4418 = vsub.s32 0, %v4417
    %v4419 = vrot.slane %v2753, %v4418
    %4421 = vbcast.lane.b32.xlu0 %v4419, 256
    %v4422 = vpop.permute.xlu0 %4421
    %s4424 = sor.u32 256, 8
    %4425 = vbcast.lane.b32.xlu0 %v4419, %s4424
    %v4426 = vpop.permute.xlu0 %4425
    %s4428 = sor.u32 256, 16
    %4429 = vbcast.lane.b32.xlu0 %v4419, %s4428
    %v4430 = vpop.permute.xlu0 %4429
    %s4432 = sor.u32 256, 24
    %4433 = vbcast.lane.b32.xlu0 %v4419, %s4432
    %v4434 = vpop.permute.xlu0 %4433
    %s4436 = sor.u32 256, 32
    %4437 = vbcast.lane.b32.xlu0 %v4419, %s4436
    %v4438 = vpop.permute.xlu0 %4437
    %s4440 = sor.u32 256, 40
    %4441 = vbcast.lane.b32.xlu0 %v4419, %s4440
    %v4442 = vpop.permute.xlu0 %4441
    %s4444 = sor.u32 256, 48
    %4445 = vbcast.lane.b32.xlu0 %v4419, %s4444
    %v4446 = vpop.permute.xlu0 %4445
    %s4448 = sor.u32 256, 56
    %4449 = vbcast.lane.b32.xlu0 %v4419, %s4448
    %v4450 = vpop.permute.xlu0 %4449
    %s4452 = sor.u32 256, 64
    %4453 = vbcast.lane.b32.xlu0 %v4419, %s4452
    %v4454 = vpop.permute.xlu0 %4453
    %s4456 = sor.u32 256, 72
    %4457 = vbcast.lane.b32.xlu0 %v4419, %s4456
    %v4458 = vpop.permute.xlu0 %4457
    %s4460 = sor.u32 256, 80
    %4461 = vbcast.lane.b32.xlu0 %v4419, %s4460
    %v4462 = vpop.permute.xlu0 %4461
    %s4464 = sor.u32 256, 88
    %4465 = vbcast.lane.b32.xlu0 %v4419, %s4464
    %v4466 = vpop.permute.xlu0 %4465
    %s4468 = sor.u32 256, 96
    %4469 = vbcast.lane.b32.xlu0 %v4419, %s4468
    %v4470 = vpop.permute.xlu0 %4469
    %s4472 = sor.u32 256, 104
    %4473 = vbcast.lane.b32.xlu0 %v4419, %s4472
    %v4474 = vpop.permute.xlu0 %4473
    %s4476 = sor.u32 256, 112
    %4477 = vbcast.lane.b32.xlu0 %v4419, %s4476
    %v4478 = vpop.permute.xlu0 %4477
    %s4480 = sor.u32 256, 120
    %4481 = vbcast.lane.b32.xlu0 %v4419, %s4480
    %v4482 = vpop.permute.xlu0 %4481
    %v4483 = vlaneseq
    %v4484 = vshrl.u32 %v4483, 7
    %v4485 = vsub.s32 1, %v4484
    %v4486 = vrot.slane %v2753, %v4485
    %4488 = vbcast.lane.b32.xlu0 %v4486, 256
    %v4489 = vpop.permute.xlu0 %4488
    %s4491 = sor.u32 256, 8
    %4492 = vbcast.lane.b32.xlu0 %v4486, %s4491
    %v4493 = vpop.permute.xlu0 %4492
    %s4495 = sor.u32 256, 16
    %4496 = vbcast.lane.b32.xlu0 %v4486, %s4495
    %v4497 = vpop.permute.xlu0 %4496
    %s4499 = sor.u32 256, 24
    %4500 = vbcast.lane.b32.xlu0 %v4486, %s4499
    %v4501 = vpop.permute.xlu0 %4500
    %s4503 = sor.u32 256, 32
    %4504 = vbcast.lane.b32.xlu0 %v4486, %s4503
    %v4505 = vpop.permute.xlu0 %4504
    %s4507 = sor.u32 256, 40
    %4508 = vbcast.lane.b32.xlu0 %v4486, %s4507
    %v4509 = vpop.permute.xlu0 %4508
    %s4511 = sor.u32 256, 48
    %4512 = vbcast.lane.b32.xlu0 %v4486, %s4511
    %v4513 = vpop.permute.xlu0 %4512
    %s4515 = sor.u32 256, 56
    %4516 = vbcast.lane.b32.xlu0 %v4486, %s4515
    %v4517 = vpop.permute.xlu0 %4516
    %s4519 = sor.u32 256, 64
    %4520 = vbcast.lane.b32.xlu0 %v4486, %s4519
    %v4521 = vpop.permute.xlu0 %4520
    %s4523 = sor.u32 256, 72
    %4524 = vbcast.lane.b32.xlu0 %v4486, %s4523
    %v4525 = vpop.permute.xlu0 %4524
    %s4527 = sor.u32 256, 80
    %4528 = vbcast.lane.b32.xlu0 %v4486, %s4527
    %v4529 = vpop.permute.xlu0 %4528
    %s4531 = sor.u32 256, 88
    %4532 = vbcast.lane.b32.xlu0 %v4486, %s4531
    %v4533 = vpop.permute.xlu0 %4532
    %s4535 = sor.u32 256, 96
    %4536 = vbcast.lane.b32.xlu0 %v4486, %s4535
    %v4537 = vpop.permute.xlu0 %4536
    %s4539 = sor.u32 256, 104
    %4540 = vbcast.lane.b32.xlu0 %v4486, %s4539
    %v4541 = vpop.permute.xlu0 %4540
    %s4543 = sor.u32 256, 112
    %4544 = vbcast.lane.b32.xlu0 %v4486, %s4543
    %v4545 = vpop.permute.xlu0 %4544
    %s4547 = sor.u32 256, 120
    %4548 = vbcast.lane.b32.xlu0 %v4486, %s4547
    %v4549 = vpop.permute.xlu0 %4548
    %v4550 = vmul.f32 %v3613, %v4422
    %v4551 = vmul.f32 %v3614, %v4426
    %v4552 = vmul.f32 %v3615, %v4430
    %v4553 = vmul.f32 %v3616, %v4434
    %v4554 = vmul.f32 %v3617, %v4438
    %v4555 = vmul.f32 %v3618, %v4442
    %v4556 = vmul.f32 %v3619, %v4446
    %v4557 = vmul.f32 %v3620, %v4450
    %v4558 = vmul.f32 %v3621, %v4454
    %v4559 = vmul.f32 %v3622, %v4458
    %v4560 = vmul.f32 %v3623, %v4462
    %v4561 = vmul.f32 %v3624, %v4466
    %v4562 = vmul.f32 %v3625, %v4470
    %v4563 = vmul.f32 %v3626, %v4474
    %v4564 = vmul.f32 %v3627, %v4478
    %v4565 = vmul.f32 %v3628, %v4482
    %v4566 = vmul.f32 %v3629, %v4489
    %v4567 = vmul.f32 %v3630, %v4493
    %v4568 = vmul.f32 %v3631, %v4497
    %v4569 = vmul.f32 %v3632, %v4501
    %v4570 = vmul.f32 %v3633, %v4505
    %v4571 = vmul.f32 %v3634, %v4509
    %v4572 = vmul.f32 %v3635, %v4513
    %v4573 = vmul.f32 %v3636, %v4517
    %v4574 = vmul.f32 %v3637, %v4521
    %v4575 = vmul.f32 %v3638, %v4525
    %v4576 = vmul.f32 %v3639, %v4529
    %v4577 = vmul.f32 %v3640, %v4533
    %v4578 = vmul.f32 %v3641, %v4537
    %v4579 = vmul.f32 %v3642, %v4541
    %v4580 = vmul.f32 %v3643, %v4545
    %v4581 = vmul.f32 %v3644, %v4549
    %v4582 = vlaneseq
    %v4583 = vshrl.u32 %v4582, 7
    %v4584 = vsub.s32 0, %v4583
    %v4585 = vrot.slane %v2615, %v4584
    %4587 = vbcast.lane.b32.xlu0 %v4585, 256
    %v4588 = vpop.permute.xlu0 %4587
    %s4590 = sor.u32 256, 8
    %4591 = vbcast.lane.b32.xlu0 %v4585, %s4590
    %v4592 = vpop.permute.xlu0 %4591
    %s4594 = sor.u32 256, 16
    %4595 = vbcast.lane.b32.xlu0 %v4585, %s4594
    %v4596 = vpop.permute.xlu0 %4595
    %s4598 = sor.u32 256, 24
    %4599 = vbcast.lane.b32.xlu0 %v4585, %s4598
    %v4600 = vpop.permute.xlu0 %4599
    %s4602 = sor.u32 256, 32
    %4603 = vbcast.lane.b32.xlu0 %v4585, %s4602
    %v4604 = vpop.permute.xlu0 %4603
    %s4606 = sor.u32 256, 40
    %4607 = vbcast.lane.b32.xlu0 %v4585, %s4606
    %v4608 = vpop.permute.xlu0 %4607
    %s4610 = sor.u32 256, 48
    %4611 = vbcast.lane.b32.xlu0 %v4585, %s4610
    %v4612 = vpop.permute.xlu0 %4611
    %s4614 = sor.u32 256, 56
    %4615 = vbcast.lane.b32.xlu0 %v4585, %s4614
    %v4616 = vpop.permute.xlu0 %4615
    %s4618 = sor.u32 256, 64
    %4619 = vbcast.lane.b32.xlu0 %v4585, %s4618
    %v4620 = vpop.permute.xlu0 %4619
    %s4622 = sor.u32 256, 72
    %4623 = vbcast.lane.b32.xlu0 %v4585, %s4622
    %v4624 = vpop.permute.xlu0 %4623
    %s4626 = sor.u32 256, 80
    %4627 = vbcast.lane.b32.xlu0 %v4585, %s4626
    %v4628 = vpop.permute.xlu0 %4627
    %s4630 = sor.u32 256, 88
    %4631 = vbcast.lane.b32.xlu0 %v4585, %s4630
    %v4632 = vpop.permute.xlu0 %4631
    %s4634 = sor.u32 256, 96
    %4635 = vbcast.lane.b32.xlu0 %v4585, %s4634
    %v4636 = vpop.permute.xlu0 %4635
    %s4638 = sor.u32 256, 104
    %4639 = vbcast.lane.b32.xlu0 %v4585, %s4638
    %v4640 = vpop.permute.xlu0 %4639
    %s4642 = sor.u32 256, 112
    %4643 = vbcast.lane.b32.xlu0 %v4585, %s4642
    %v4644 = vpop.permute.xlu0 %4643
    %s4646 = sor.u32 256, 120
    %4647 = vbcast.lane.b32.xlu0 %v4585, %s4646
    %v4648 = vpop.permute.xlu0 %4647
    %v4649 = vlaneseq
    %v4650 = vshrl.u32 %v4649, 7
    %v4651 = vsub.s32 1, %v4650
    %v4652 = vrot.slane %v2615, %v4651
    %4654 = vbcast.lane.b32.xlu0 %v4652, 256
    %v4655 = vpop.permute.xlu0 %4654
    %s4657 = sor.u32 256, 8
    %4658 = vbcast.lane.b32.xlu0 %v4652, %s4657
    %v4659 = vpop.permute.xlu0 %4658
    %s4661 = sor.u32 256, 16
    %4662 = vbcast.lane.b32.xlu0 %v4652, %s4661
    %v4663 = vpop.permute.xlu0 %4662
    %s4665 = sor.u32 256, 24
    %4666 = vbcast.lane.b32.xlu0 %v4652, %s4665
    %v4667 = vpop.permute.xlu0 %4666
    %s4669 = sor.u32 256, 32
    %4670 = vbcast.lane.b32.xlu0 %v4652, %s4669
    %v4671 = vpop.permute.xlu0 %4670
    %s4673 = sor.u32 256, 40
    %4674 = vbcast.lane.b32.xlu0 %v4652, %s4673
    %v4675 = vpop.permute.xlu0 %4674
    %s4677 = sor.u32 256, 48
    %4678 = vbcast.lane.b32.xlu0 %v4652, %s4677
    %v4679 = vpop.permute.xlu0 %4678
    %s4681 = sor.u32 256, 56
    %4682 = vbcast.lane.b32.xlu0 %v4652, %s4681
    %v4683 = vpop.permute.xlu0 %4682
    %s4685 = sor.u32 256, 64
    %4686 = vbcast.lane.b32.xlu0 %v4652, %s4685
    %v4687 = vpop.permute.xlu0 %4686
    %s4689 = sor.u32 256, 72
    %4690 = vbcast.lane.b32.xlu0 %v4652, %s4689
    %v4691 = vpop.permute.xlu0 %4690
    %s4693 = sor.u32 256, 80
    %4694 = vbcast.lane.b32.xlu0 %v4652, %s4693
    %v4695 = vpop.permute.xlu0 %4694
    %s4697 = sor.u32 256, 88
    %4698 = vbcast.lane.b32.xlu0 %v4652, %s4697
    %v4699 = vpop.permute.xlu0 %4698
    %s4701 = sor.u32 256, 96
    %4702 = vbcast.lane.b32.xlu0 %v4652, %s4701
    %v4703 = vpop.permute.xlu0 %4702
    %s4705 = sor.u32 256, 104
    %4706 = vbcast.lane.b32.xlu0 %v4652, %s4705
    %v4707 = vpop.permute.xlu0 %4706
    %s4709 = sor.u32 256, 112
    %4710 = vbcast.lane.b32.xlu0 %v4652, %s4709
    %v4711 = vpop.permute.xlu0 %4710
    %s4713 = sor.u32 256, 120
    %4714 = vbcast.lane.b32.xlu0 %v4652, %s4713
    %v4715 = vpop.permute.xlu0 %4714
    %v4716 = vmul.f32 %v4384, %v4588
    %v4717 = vmul.f32 %v4385, %v4592
    %v4718 = vmul.f32 %v4386, %v4596
    %v4719 = vmul.f32 %v4387, %v4600
    %v4720 = vmul.f32 %v4388, %v4604
    %v4721 = vmul.f32 %v4389, %v4608
    %v4722 = vmul.f32 %v4390, %v4612
    %v4723 = vmul.f32 %v4391, %v4616
    %v4724 = vmul.f32 %v4392, %v4620
    %v4725 = vmul.f32 %v4393, %v4624
    %v4726 = vmul.f32 %v4394, %v4628
    %v4727 = vmul.f32 %v4395, %v4632
    %v4728 = vmul.f32 %v4396, %v4636
    %v4729 = vmul.f32 %v4397, %v4640
    %v4730 = vmul.f32 %v4398, %v4644
    %v4731 = vmul.f32 %v4399, %v4648
    %v4732 = vmul.f32 %v4400, %v4655
    %v4733 = vmul.f32 %v4401, %v4659
    %v4734 = vmul.f32 %v4402, %v4663
    %v4735 = vmul.f32 %v4403, %v4667
    %v4736 = vmul.f32 %v4404, %v4671
    %v4737 = vmul.f32 %v4405, %v4675
    %v4738 = vmul.f32 %v4406, %v4679
    %v4739 = vmul.f32 %v4407, %v4683
    %v4740 = vmul.f32 %v4408, %v4687
    %v4741 = vmul.f32 %v4409, %v4691
    %v4742 = vmul.f32 %v4410, %v4695
    %v4743 = vmul.f32 %v4411, %v4699
    %v4744 = vmul.f32 %v4412, %v4703
    %v4745 = vmul.f32 %v4413, %v4707
    %v4746 = vmul.f32 %v4414, %v4711
    %v4747 = vmul.f32 %v4415, %v4715
    %4748 = vst [vmem:[#allocation38] sm:$0x3] %v2615
    %4749 = vst [vmem:[#allocation39] sm:$0x3] %v2753
    %4750 = vst [vmem:[%s75] sm:$0xff] %v4716
    %4751 = vst [vmem:[%s75 + $0x8] sm:$0xff] %v4717
    %4752 = vst [vmem:[%s75 + $0x10] sm:$0xff] %v4718
    %4753 = vst [vmem:[%s75 + $0x18] sm:$0xff] %v4719
    %4754 = vst [vmem:[%s75 + $0x20] sm:$0xff] %v4720
    %4755 = vst [vmem:[%s75 + $0x28] sm:$0xff] %v4721
    %4756 = vst [vmem:[%s75 + $0x30] sm:$0xff] %v4722
    %4757 = vst [vmem:[%s75 + $0x38] sm:$0xff] %v4723
    %4758 = vst [vmem:[%s75 + $0x40] sm:$0xff] %v4724
    %4759 = vst [vmem:[%s75 + $0x48] sm:$0xff] %v4725
    %4760 = vst [vmem:[%s75 + $0x50] sm:$0xff] %v4726
    %4761 = vst [vmem:[%s75 + $0x58] sm:$0xff] %v4727
    %4762 = vst [vmem:[%s75 + $0x60] sm:$0xff] %v4728
    %4763 = vst [vmem:[%s75 + $0x68] sm:$0xff] %v4729
    %4764 = vst [vmem:[%s75 + $0x70] sm:$0xff] %v4730
    %4765 = vst [vmem:[%s75 + $0x78] sm:$0xff] %v4731
    %4766 = vst [vmem:[%s75 + $0x80] sm:$0xff] %v4732
    %4767 = vst [vmem:[%s75 + $0x88] sm:$0xff] %v4733
    %4768 = vst [vmem:[%s75 + $0x90] sm:$0xff] %v4734
    %4769 = vst [vmem:[%s75 + $0x98] sm:$0xff] %v4735
    %4770 = vst [vmem:[%s75 + $0xa0] sm:$0xff] %v4736
    %4771 = vst [vmem:[%s75 + $0xa8] sm:$0xff] %v4737
    %4772 = vst [vmem:[%s75 + $0xb0] sm:$0xff] %v4738
    %4773 = vst [vmem:[%s75 + $0xb8] sm:$0xff] %v4739
    %4774 = vst [vmem:[%s75 + $0xc0] sm:$0xff] %v4740
    %4775 = vst [vmem:[%s75 + $0xc8] sm:$0xff] %v4741
    %4776 = vst [vmem:[%s75 + $0xd0] sm:$0xff] %v4742
    %4777 = vst [vmem:[%s75 + $0xd8] sm:$0xff] %v4743
    %4778 = vst [vmem:[%s75 + $0xe0] sm:$0xff] %v4744
    %4779 = vst [vmem:[%s75 + $0xe8] sm:$0xff] %v4745
    %4780 = vst [vmem:[%s75 + $0xf0] sm:$0xff] %v4746
    %4781 = vst [vmem:[%s75 + $0xf8] sm:$0xff] %v4747
    %4782 = vst [vmem:[%s77] sm:$0xff] %v4550
    %4783 = vst [vmem:[%s77 + $0x8] sm:$0xff] %v4551
    %4784 = vst [vmem:[%s77 + $0x10] sm:$0xff] %v4552
    %4785 = vst [vmem:[%s77 + $0x18] sm:$0xff] %v4553
    %4786 = vst [vmem:[%s77 + $0x20] sm:$0xff] %v4554
    %4787 = vst [vmem:[%s77 + $0x28] sm:$0xff] %v4555
    %4788 = vst [vmem:[%s77 + $0x30] sm:$0xff] %v4556
    %4789 = vst [vmem:[%s77 + $0x38] sm:$0xff] %v4557
    %4790 = vst [vmem:[%s77 + $0x40] sm:$0xff] %v4558
    %4791 = vst [vmem:[%s77 + $0x48] sm:$0xff] %v4559
    %4792 = vst [vmem:[%s77 + $0x50] sm:$0xff] %v4560
    %4793 = vst [vmem:[%s77 + $0x58] sm:$0xff] %v4561
    %4794 = vst [vmem:[%s77 + $0x60] sm:$0xff] %v4562
    %4795 = vst [vmem:[%s77 + $0x68] sm:$0xff] %v4563
    %4796 = vst [vmem:[%s77 + $0x70] sm:$0xff] %v4564
    %4797 = vst [vmem:[%s77 + $0x78] sm:$0xff] %v4565
    %4798 = vst [vmem:[%s77 + $0x80] sm:$0xff] %v4566
    %4799 = vst [vmem:[%s77 + $0x88] sm:$0xff] %v4567
    %4800 = vst [vmem:[%s77 + $0x90] sm:$0xff] %v4568
    %4801 = vst [vmem:[%s77 + $0x98] sm:$0xff] %v4569
    %4802 = vst [vmem:[%s77 + $0xa0] sm:$0xff] %v4570
    %4803 = vst [vmem:[%s77 + $0xa8] sm:$0xff] %v4571
    %4804 = vst [vmem:[%s77 + $0xb0] sm:$0xff] %v4572
    %4805 = vst [vmem:[%s77 + $0xb8] sm:$0xff] %v4573
    %4806 = vst [vmem:[%s77 + $0xc0] sm:$0xff] %v4574
    %4807 = vst [vmem:[%s77 + $0xc8] sm:$0xff] %v4575
    %4808 = vst [vmem:[%s77 + $0xd0] sm:$0xff] %v4576
    %4809 = vst [vmem:[%s77 + $0xd8] sm:$0xff] %v4577
    %4810 = vst [vmem:[%s77 + $0xe0] sm:$0xff] %v4578
    %4811 = vst [vmem:[%s77 + $0xe8] sm:$0xff] %v4579
    %4812 = vst [vmem:[%s77 + $0xf0] sm:$0xff] %v4580
    %4813 = vst [vmem:[%s77 + $0xf8] sm:$0xff] %v4581
    %4814 = vst [vmem:[#allocation41] sm:$0x3] %v1199
    %v4817 = vsel %vm900, %v2444, %v2443
    %4819 = vst [vmem:[#allocation42] sm:$0x3] %v4817
    %4820 = vst [vmem:[%s83] sm:$0xff] %v3613
    %4821 = vst [vmem:[%s83 + $0x8] sm:$0xff] %v3614
    %4822 = vst [vmem:[%s83 + $0x10] sm:$0xff] %v3615
    %4823 = vst [vmem:[%s83 + $0x18] sm:$0xff] %v3616
    %4824 = vst [vmem:[%s83 + $0x20] sm:$0xff] %v3617
    %4825 = vst [vmem:[%s83 + $0x28] sm:$0xff] %v3618
    %4826 = vst [vmem:[%s83 + $0x30] sm:$0xff] %v3619
    %4827 = vst [vmem:[%s83 + $0x38] sm:$0xff] %v3620
    %4828 = vst [vmem:[%s83 + $0x40] sm:$0xff] %v3621
    %4829 = vst [vmem:[%s83 + $0x48] sm:$0xff] %v3622
    %4830 = vst [vmem:[%s83 + $0x50] sm:$0xff] %v3623
    %4831 = vst [vmem:[%s83 + $0x58] sm:$0xff] %v3624
    %4832 = vst [vmem:[%s83 + $0x60] sm:$0xff] %v3625
    %4833 = vst [vmem:[%s83 + $0x68] sm:$0xff] %v3626
    %4834 = vst [vmem:[%s83 + $0x70] sm:$0xff] %v3627
    %4835 = vst [vmem:[%s83 + $0x78] sm:$0xff] %v3628
    %4836 = vst [vmem:[%s83 + $0x80] sm:$0xff] %v3629
    %4837 = vst [vmem:[%s83 + $0x88] sm:$0xff] %v3630
    %4838 = vst [vmem:[%s83 + $0x90] sm:$0xff] %v3631
    %4839 = vst [vmem:[%s83 + $0x98] sm:$0xff] %v3632
    %4840 = vst [vmem:[%s83 + $0xa0] sm:$0xff] %v3633
    %4841 = vst [vmem:[%s83 + $0xa8] sm:$0xff] %v3634
    %4842 = vst [vmem:[%s83 + $0xb0] sm:$0xff] %v3635
    %4843 = vst [vmem:[%s83 + $0xb8] sm:$0xff] %v3636
    %4844 = vst [vmem:[%s83 + $0xc0] sm:$0xff] %v3637
    %4845 = vst [vmem:[%s83 + $0xc8] sm:$0xff] %v3638
    %4846 = vst [vmem:[%s83 + $0xd0] sm:$0xff] %v3639
    %4847 = vst [vmem:[%s83 + $0xd8] sm:$0xff] %v3640
    %4848 = vst [vmem:[%s83 + $0xe0] sm:$0xff] %v3641
    %4849 = vst [vmem:[%s83 + $0xe8] sm:$0xff] %v3642
    %4850 = vst [vmem:[%s83 + $0xf0] sm:$0xff] %v3643
    %4851 = vst [vmem:[%s83 + $0xf8] sm:$0xff] %v3644
    %4852 = vst [vmem:[%s85] sm:$0xff] %v4384
    %4853 = vst [vmem:[%s85 + $0x8] sm:$0xff] %v4385
    %4854 = vst [vmem:[%s85 + $0x10] sm:$0xff] %v4386
    %4855 = vst [vmem:[%s85 + $0x18] sm:$0xff] %v4387
    %4856 = vst [vmem:[%s85 + $0x20] sm:$0xff] %v4388
    %4857 = vst [vmem:[%s85 + $0x28] sm:$0xff] %v4389
    %4858 = vst [vmem:[%s85 + $0x30] sm:$0xff] %v4390
    %4859 = vst [vmem:[%s85 + $0x38] sm:$0xff] %v4391
    %4860 = vst [vmem:[%s85 + $0x40] sm:$0xff] %v4392
    %4861 = vst [vmem:[%s85 + $0x48] sm:$0xff] %v4393
    %4862 = vst [vmem:[%s85 + $0x50] sm:$0xff] %v4394
    %4863 = vst [vmem:[%s85 + $0x58] sm:$0xff] %v4395
    %4864 = vst [vmem:[%s85 + $0x60] sm:$0xff] %v4396
    %4865 = vst [vmem:[%s85 + $0x68] sm:$0xff] %v4397
    %4866 = vst [vmem:[%s85 + $0x70] sm:$0xff] %v4398
    %4867 = vst [vmem:[%s85 + $0x78] sm:$0xff] %v4399
    %4868 = vst [vmem:[%s85 + $0x80] sm:$0xff] %v4400
    %4869 = vst [vmem:[%s85 + $0x88] sm:$0xff] %v4401
    %4870 = vst [vmem:[%s85 + $0x90] sm:$0xff] %v4402
    %4871 = vst [vmem:[%s85 + $0x98] sm:$0xff] %v4403
    %4872 = vst [vmem:[%s85 + $0xa0] sm:$0xff] %v4404
    %4873 = vst [vmem:[%s85 + $0xa8] sm:$0xff] %v4405
    %4874 = vst [vmem:[%s85 + $0xb0] sm:$0xff] %v4406
    %4875 = vst [vmem:[%s85 + $0xb8] sm:$0xff] %v4407
    %4876 = vst [vmem:[%s85 + $0xc0] sm:$0xff] %v4408
    %4877 = vst [vmem:[%s85 + $0xc8] sm:$0xff] %v4409
    %4878 = vst [vmem:[%s85 + $0xd0] sm:$0xff] %v4410
    %4879 = vst [vmem:[%s85 + $0xd8] sm:$0xff] %v4411
    %4880 = vst [vmem:[%s85 + $0xe0] sm:$0xff] %v4412
    %4881 = vst [vmem:[%s85 + $0xe8] sm:$0xff] %v4413
    %4882 = vst [vmem:[%s85 + $0xf0] sm:$0xff] %v4414
    %4883 = vst [vmem:[%s85 + $0xf8] sm:$0xff] %v4415
    // Predicated region
    $region234: #{custom_clip_forward.1} parent=1 // pred_check
      _
    $region235: #{custom_clip_forward.1} parent=1 // pred_check_branch
      %4885 = sbr.rel (0) target = $region237
    $region236: #{custom_clip_forward.1} parent=1 // pred_region
      %s4887 = ssub.s32 32, 32
      %4888 = vsyncadd [#allocation4], %s4887
      %s4890 = sshll.u32 [#allocation38], 4
      %s4891 = int_to_ptr.vmem [resolvable:$true] %s4890
      %4893 = dma.vmem_to_hbm [thread:$0]  %s4891, 32, %s71, [#allocation4]
    $region237: #{custom_clip_forward.1} parent=1 // pred_fallthru
      _
    // Predicated region
    $region238: #{custom_clip_forward.1} parent=1 // pred_check
      _
    $region239: #{custom_clip_forward.1} parent=1 // pred_check_branch
      %4895 = sbr.rel (0) target = $region241
    $region240: #{custom_clip_forward.1} parent=1 // pred_region
      %s4897 = ssub.s32 32, 32
      %4898 = vsyncadd [#allocation40], %s4897
      %s4900 = sshll.u32 [#allocation39], 4
      %s4901 = int_to_ptr.vmem [resolvable:$true] %s4900
      %4903 = dma.vmem_to_hbm [thread:$0]  %s4901, 32, %s73, [#allocation40]
    $region241: #{custom_clip_forward.1} parent=1 // pred_fallthru
      _
    // Predicated region
    $region242: #{custom_clip_forward.1} parent=1 // pred_check
      _
    $region243: #{custom_clip_forward.1} parent=1 // pred_check_branch
      %4905 = sbr.rel (0) target = $region245
    $region244: #{custom_clip_forward.1} parent=1 // pred_region
      _
    $region245: #{custom_clip_forward.1} parent=1 // pred_fallthru
      _
    // Predicated region
    $region246: #{custom_clip_forward.1} parent=1 // pred_check
      _
    $region247: #{custom_clip_forward.1} parent=1 // pred_check_branch
      %4907 = sbr.rel (0) target = $region249
    $region248: #{custom_clip_forward.1} parent=1 // pred_region
      _
    $region249: #{custom_clip_forward.1} parent=1 // pred_fallthru
      _
    // Predicated region
    $region250: #{custom_clip_forward.1} parent=1 // pred_check
      _
    $region251: #{custom_clip_forward.1} parent=1 // pred_check_branch
      %4909 = sbr.rel (0) target = $region253
    $region252: #{custom_clip_forward.1} parent=1 // pred_region
      %s4911 = ssub.s32 32, 32
      %4912 = vsyncadd [#allocation40], %s4911
      %s4914 = sshll.u32 [#allocation41], 4
      %s4915 = int_to_ptr.vmem [resolvable:$true] %s4914
      %4917 = dma.vmem_to_hbm [thread:$0]  %s4915, 32, %s79, [#allocation40]
    $region253: #{custom_clip_forward.1} parent=1 // pred_fallthru
      _
    // Predicated region
    $region254: #{custom_clip_forward.1} parent=1 // pred_check
      _
    $region255: #{custom_clip_forward.1} parent=1 // pred_check_branch
      %4919 = sbr.rel (0) target = $region257
    $region256: #{custom_clip_forward.1} parent=1 // pred_region
      %s4921 = ssub.s32 32, 32
      %4922 = vsyncadd [#allocation43], %s4921
      %s4924 = sshll.u32 [#allocation42], 4
      %s4925 = int_to_ptr.vmem [resolvable:$true] %s4924
      %4927 = dma.vmem_to_hbm [thread:$0]  %s4925, 32, %s81, [#allocation43]
    $region257: #{custom_clip_forward.1} parent=1 // pred_fallthru
      _
    // Predicated region
    $region258: #{custom_clip_forward.1} parent=1 // pred_check
      _
    $region259: #{custom_clip_forward.1} parent=1 // pred_check_branch
      %4929 = sbr.rel (0) target = $region261
    $region260: #{custom_clip_forward.1} parent=1 // pred_region
      _
    $region261: #{custom_clip_forward.1} parent=1 // pred_fallthru
      _
    // Predicated region
    $region262: #{custom_clip_forward.1} parent=1 // pred_check
      _
    $region263: #{custom_clip_forward.1} parent=1 // pred_check_branch
      %4931 = sbr.rel (0) target = $region265
    $region264: #{custom_clip_forward.1} parent=1 // pred_region
      _
    $region265: #{custom_clip_forward.1} parent=1 // pred_fallthru
      _
    // Predicated region
    $region266: #{custom_clip_forward.1} parent=1 // pred_check
      _
    $region267: #{custom_clip_forward.1} parent=1 // pred_check_branch
      %4933 = sbr.rel (0) target = $region269
    $region268: #{custom_clip_forward.1} parent=1 // pred_region
      %4934 = dma.done [#allocation4], 32
    $region269: #{custom_clip_forward.1} parent=1 // pred_fallthru
      _
    // Predicated region
    $region270: #{custom_clip_forward.1} parent=1 // pred_check
      _
    $region271: #{custom_clip_forward.1} parent=1 // pred_check_branch
      %4936 = sbr.rel (0) target = $region273
    $region272: #{custom_clip_forward.1} parent=1 // pred_region
      %4937 = dma.done [#allocation40], 32
    $region273: #{custom_clip_forward.1} parent=1 // pred_fallthru
      _
    // Predicated region
    $region274: #{custom_clip_forward.1} parent=1 // pred_check
      _
    $region275: #{custom_clip_forward.1} parent=1 // pred_check_branch
      %4939 = sbr.rel (0) target = $region277
    $region276: #{custom_clip_forward.1} parent=1 // pred_region
      _
    $region277: #{custom_clip_forward.1} parent=1 // pred_fallthru
      _
    // Predicated region
    $region278: #{custom_clip_forward.1} parent=1 // pred_check
      _
    $region279: #{custom_clip_forward.1} parent=1 // pred_check_branch
      %4941 = sbr.rel (0) target = $region281
    $region280: #{custom_clip_forward.1} parent=1 // pred_region
      _
    $region281: #{custom_clip_forward.1} parent=1 // pred_fallthru
      _
    // Predicated region
    $region282: #{custom_clip_forward.1} parent=1 // pred_check
      _
    $region283: #{custom_clip_forward.1} parent=1 // pred_check_branch
      %4943 = sbr.rel (0) target = $region285
    $region284: #{custom_clip_forward.1} parent=1 // pred_region
      %4944 = dma.done [#allocation40], 32
    $region285: #{custom_clip_forward.1} parent=1 // pred_fallthru
      _
    // Predicated region
    $region286: #{custom_clip_forward.1} parent=1 // pred_check
      _
    $region287: #{custom_clip_forward.1} parent=1 // pred_check_branch
      %4946 = sbr.rel (0) target = $region289
    $region288: #{custom_clip_forward.1} parent=1 // pred_region
      %4947 = dma.done [#allocation43], 32
    $region289: #{custom_clip_forward.1} parent=1 // pred_fallthru
      _
    // Predicated region
    $region290: #{custom_clip_forward.1} parent=1 // pred_check
      _
    $region291: #{custom_clip_forward.1} parent=1 // pred_check_branch
      %4949 = sbr.rel (0) target = $region293
    $region292: #{custom_clip_forward.1} parent=1 // pred_region
      _
    $region293: #{custom_clip_forward.1} parent=1 // pred_fallthru
      _
    // Predicated region
    $region294: #{custom_clip_forward.1} parent=1 // pred_check
      _
    $region295: #{custom_clip_forward.1} parent=1 // pred_check_branch
      %4951 = sbr.rel (0) target = $region297
    $region296: #{custom_clip_forward.1} parent=1 // pred_region
      _
    $region297: #{custom_clip_forward.1} parent=1 // pred_fallthru
      _
    %4952 = vsyncpa [#allocation3], 1
    %4953 = vsyncpa [#allocation6], 1
    %4954 = vsyncpa [#allocation9], 1
    %4955 = vsyncpa [#allocation12], 1
    %4956 = vsyncpa [#allocation15], 1
    %4957 = vsyncpa [#allocation18], 1
    %4958 = vsyncpa [#allocation21], 1
    %4959 = vsyncpa [#allocation24], 1
    %4960 = vsyncpa [#allocation27], 1
    %4961 = vsyncpa [#allocation30], 1
    %4962 = vsyncpa [#allocation33], 1
    %4963 = vsyncpa [#allocation36], 1
    %4964 = vsyncpa [#allocation4], 1
    %4965 = vsyncpa [#allocation40], 1
    %4966 = vsyncpa [#allocation43], 1

</llo_original>
